<compile_context>
chip_gen: v5e
topology: v5e:2x2
jax: 0.10.0
libtpu: 0.0.40
codegen_flags: <defaults>
</compile_context>

<pallas_src>
import numpy as np
import jax
import jax.numpy as jnp
from jax.experimental import pallas as pl
from jax.experimental.pallas import tpu as pltpu


def make_seriesnet_kernel(T, L, H, n_fc, n_chunks):
    H3 = 3 * H

    def kernel(*refs):
        it = iter(refs)
        series_ref = next(it)                                        # (T, Bt, D) f32 VMEM
        lstm_refs = [(next(it), next(it), next(it)) for _ in range(L)]
        hconv_ref = next(it)                                         # (L+1,) SMEM
        cconv_ref = next(it)                                         # (L+1,) SMEM
        wyz_ref, byz_ref = next(it), next(it)                        # (2H,HFC+CFC) bf16,(1,HFC+CFC)
        wfc0_ref, bfc0_ref = next(it), next(it)                      # (H+HFC+CFC,F0) bf16,(1,F0)
        fc_rest = [(next(it), next(it)) for _ in range(n_fc - 1)]
        out_ref = next(it)
        xa_ref = next(it)                                            # (T*Bt, 4H) f32 scratch
        xb_ref = next(it)                                            # (T*Bt, 4H) f32 scratch

        Bt = series_ref.shape[1]
        D = series_ref.shape[2]
        Bc = Bt // n_chunks

        # ---- layer-0 input projection: single (T*Bt,D)@(D,4H) bf16 matmul, bias folded
        wih0_ref, _, b0_ref = lstm_refs[0]
        x_seq = series_ref[...].reshape(T * Bt, D).astype(jnp.bfloat16)
        xa_ref[...] = (jnp.dot(x_seq, wih0_ref[...],
                               preferred_element_type=jnp.float32) + b0_ref[...])

        # ---- LSTM: layer-major recurrence; next layer's input projection fused into
        #      this layer's time loop (writes a double-buffered VMEM xproj scratch).
        xcur, xnxt = xa_ref, xb_ref
        h_last, c_last = [], []
        for l in range(L):
            whh = lstm_refs[l][1][...]                               # (H, 4H) bf16
            if l + 1 < L:
                wih_n = lstm_refs[l + 1][0][...]                     # (H, 4H) bf16
                b_n = lstm_refs[l + 1][2][...]                       # (1, 4H) f32
            hs = [jnp.zeros((Bc, H), jnp.float32) for _ in range(n_chunks)]
            cs = [jnp.zeros((Bc, H), jnp.float32) for _ in range(n_chunks)]
            for t in range(T):                                       # static unroll (T tiny)
                for ch in range(n_chunks):                           # independent sub-chains
                    row = t * Bt + ch * Bc
                    pre = xcur[pl.ds(row, Bc), :] + jnp.dot(
                        hs[ch].astype(jnp.bfloat16), whh,
                        preferred_element_type=jnp.float32)          # (Bc, 4H)
                    sig = jax.nn.sigmoid(pre[:, :H3])                # gates i, f, o
                    g = jnp.tanh(pre[:, H3:])                        # gate g
                    c_new = sig[:, H:2 * H] * cs[ch] + sig[:, :H] * g
                    h_new = sig[:, 2 * H:] * jnp.tanh(c_new)
                    cs[ch] = c_new
                    hs[ch] = h_new
                    if l + 1 < L:
                        # Fused next-layer input projection: free filler under MXU slack.
                        xnxt[pl.ds(row, Bc), :] = (jnp.dot(
                            h_new.astype(jnp.bfloat16), wih_n,
                            preferred_element_type=jnp.float32) + b_n)
            h_last.append(hs[0] if n_chunks == 1 else jnp.concatenate(hs, axis=0))
            c_last.append(cs[0] if n_chunks == 1 else jnp.concatenate(cs, axis=0))
            xcur, xnxt = xnxt, xcur

        # ---- Conv2d(1,1,(L,1)) over stacked states == weighted sum + bias, ReLU ----
        y = h_last[0] * hconv_ref[0]
        z = c_last[0] * cconv_ref[0]
        for l in range(1, L):
            y = y + h_last[l] * hconv_ref[l]
            z = z + c_last[l] * cconv_ref[l]
        y = jnp.maximum(y + hconv_ref[L], 0.0)
        z = jnp.maximum(z + cconv_ref[L], 0.0)

        # ---- h_fc / c_fc fused into one block-diagonal matmul ----
        yz = jnp.concatenate([y, z], axis=1).astype(jnp.bfloat16)    # (Bt, 2H)
        yz = jnp.maximum(
            jnp.dot(yz, wyz_ref[...], preferred_element_type=jnp.float32)
            + byz_ref[...], 0.0)                                     # (Bt, HFC+CFC)

        # ---- FC head: single matmul on concat([h_last, y_fc, z_fc]), then chain ----
        x = jnp.concatenate([h_last[L - 1], yz], axis=1).astype(jnp.bfloat16)
        x = jnp.maximum(
            jnp.dot(x, wfc0_ref[...], preferred_element_type=jnp.float32)
            + bfc0_ref[...], 0.0)
        for w_ref, b_ref in fc_rest:
            x = jnp.maximum(
                jnp.dot(x.astype(jnp.bfloat16), w_ref[...],
                        preferred_element_type=jnp.float32)
                + b_ref[...], 0.0)
        # TODO(synk): fc_arch[-1] < 128 -> lane-sparse (masked) final store; pad to 128
        # lanes and slice in the wrapper once B grows enough for the store to matter.
        out_ref[...] = x

    return kernel


def _tensorcores_per_chip():
    try:
        kind = jax.devices()[0].device_kind.lower()
    except Exception:
        return 1
    return 2 if ("v7" in kind or "7x" in kind) else 1


def _choose_batch_tile(B, T, D, H, num_cores, vmem_budget_bytes=24 << 20):
    """Derive the batch tile from the VMEM budget (weights are tiny)."""
    lanes_d = -(-D // 128) * 128
    lanes_4h = -(-(4 * H) // 128) * 128
    lanes_h = -(-H // 128) * 128
    # Per batch row (f32): double-buffered series tile + two xproj scratch buffers
    # + activation slack (h/c/gates per chunk, head activations).
    per_row = 4 * (2 * T * lanes_d + 2 * T * lanes_4h + 64 * lanes_h)
    cap = int(max(8, min(1024, vmem_budget_bytes // per_row)))

    def ok(bt):
        return 0 < bt <= B and B % bt == 0 and (bt == B or bt % 8 == 0)

    # v7x (2 TCs/chip): shard the parallel grid axis evenly across cores once each
    # tile can still hold >= 256 rows (MXU fill point).
    if num_cores >= 2 and B >= num_cores * 256:
        for bt in range(min(cap, B // num_cores), 255, -1):
            if ok(bt) and (B // bt) % num_cores == 0:
                return bt
    # Single-TC chips (v5e/v6e) or small B: one big tile (grid is a serial loop;
    # each extra step costs ~0.35 us plus a redundant series-tile DMA).
    if B <= cap:
        return B
    for bt in range(cap, 7, -1):
        if ok(bt):
            return bt
    return B


def init_params(key, D, H, L, HFC, CFC, fc_arch):
    def uniform(k, shape, bound):
        return jax.random.uniform(k, shape, jnp.float32, -bound, bound)

    keys = iter(jax.random.split(key, 8 * L + 32))
    kb = 1.0 / np.sqrt(H)

    def reorder_ifog(w4h):
        # PyTorch row-block order (i, f, g, o) -> kernel order (i, f, o, g).
        i, f, g, o = (w4h[0:H], w4h[H:2 * H], w4h[2 * H:3 * H], w4h[3 * H:4 * H])
        return jnp.concatenate([i, f, o, g], axis=0)

    lstm = []
    for l in range(L):
        din = D if l == 0 else H
        w_ih = uniform(next(keys), (4 * H, din), kb)     # PyTorch layout (4H, Din)
        w_hh = uniform(next(keys), (4 * H, H), kb)
        b_ih = uniform(next(keys), (4 * H,), kb)
        b_hh = uniform(next(keys), (4 * H,), kb)
        wih = reorder_ifog(w_ih).T                       # (Din, 4H), gates i,f,o,g
        whh = reorder_ifog(w_hh).T                       # (H, 4H)
        bias = reorder_ifog((b_ih + b_hh)[:, None]).reshape(1, 4 * H)
        lstm.append((wih, whh, bias))

    kc = 1.0 / np.sqrt(L)                                # conv fan_in = 1 * L * 1
    hconv = jnp.concatenate([uniform(next(keys), (L,), kc), uniform(next(keys), (1,), kc)])
    cconv = jnp.concatenate([uniform(next(keys), (L,), kc), uniform(next(keys), (1,), kc)])

    def linear(kw, kbias, din, dout):
        bound = 1.0 / np.sqrt(din)
        w = uniform(kw, (dout, din), bound)              # PyTorch (out, in)
        b = uniform(kbias, (dout,), bound)
        return w.T, b.reshape(1, dout)

    whfc, bhfc = linear(next(keys), next(keys), H, HFC)
    wcfc, bcfc = linear(next(keys), next(keys), H, CFC)
    # Fused block-diagonal weight for the h_fc / c_fc pair (zero padding is cheap).
    wyz = jnp.zeros((2 * H, HFC + CFC), jnp.float32)
    wyz = wyz.at[:H, :HFC].set(whfc).at[H:, HFC:].set(wcfc)
    byz = jnp.concatenate([bhfc, bcfc], axis=1)

    wfc0, bfc0 = linear(next(keys), next(keys), H + HFC + CFC, fc_arch[0])
    fc_rest = [linear(next(keys), next(keys), fc_arch[i - 1], fc_arch[i])
               for i in range(1, len(fc_arch))]

    return dict(lstm=lstm, hconv=hconv, cconv=cconv,
                whfc=whfc, bhfc=bhfc, wcfc=wcfc, bcfc=bcfc,   # un-fused (reference)
                wyz=wyz, byz=byz,                              # fused (kernel)
                wfc0=wfc0, bfc0=bfc0, fc_rest=fc_rest)


def series_net_forward(series_btd, params, fc_arch, *, batch_tile=None):
    B, T, D = series_btd.shape
    L = len(params["lstm"])
    H = params["lstm"][0][1].shape[0]                    # whh is (H, 4H)
    n_fc = len(fc_arch)
    F_out = fc_arch[-1]
    bf16 = jnp.bfloat16

    num_cores = _tensorcores_per_chip()
    if batch_tile is None:
        batch_tile = _choose_batch_tile(B, T, D, H, num_cores)
    assert B % batch_tile == 0, "batch must divide evenly into batch tiles"
    assert batch_tile == B or batch_tile % 8 == 0, "batch tile must honor (8,128) tiling"
    nb = B // batch_tile

    # Independent interleaved recurrence sub-chains (fill MXU/EUP/VPU latency slack).
    if batch_tile >= 128 and batch_tile % 32 == 0:
        n_chunks = 4
    elif batch_tile >= 16 and batch_tile % 16 == 0:
        n_chunks = 2
    else:
        n_chunks = 1

    # (B,T,D) -> (T,B,D); allow_input_fusion on arg 0 lets XLA fuse this transpose
    # into the pallas_call input instead of a separate HBM round trip.
    series_tbd = jnp.transpose(series_btd, (1, 0, 2)).astype(jnp.float32)

    vmem_full = pl.BlockSpec(memory_space=pltpu.MemorySpace.VMEM)
    smem_full = pl.BlockSpec(memory_space=pltpu.MemorySpace.SMEM)

    args = [series_tbd]
    in_specs = [pl.BlockSpec((T, batch_tile, D), lambda b: (0, b, 0))]
    for wih, whh, bias in params["lstm"]:
        # bf16 matmul operands, f32 biases (accumulation / elementwise stay f32).
        args += [wih.astype(bf16), whh.astype(bf16), bias]
        in_specs += [vmem_full, vmem_full, vmem_full]
    args += [params["hconv"], params["cconv"]]
    in_specs += [smem_full, smem_full]
    args += [params["wyz"].astype(bf16), params["byz"],
             params["wfc0"].astype(bf16), params["bfc0"]]
    in_specs += [vmem_full] * 4
    for w, b in params["fc_rest"]:
        args += [w.astype(bf16), b]
        in_specs += [vmem_full, vmem_full]

    # Rough cost estimate so XLA schedules around the custom call sensibly.
    flops = 0
    din = D
    for _ in range(L):
        flops += 2 * T * B * din * 4 * H + 2 * T * B * H * 4 * H + 10 * T * B * H
        din = H
    flops += 2 * B * (2 * H) * params["wyz"].shape[1]
    flops += 2 * B * params["wfc0"].shape[0] * params["wfc0"].shape[1]
    for w, _ in params["fc_rest"]:
        flops += 2 * B * w.shape[0] * w.shape[1]
    transcendentals = 5 * T * B * L * H
    bytes_accessed = int(sum(int(np.prod(a.shape)) * a.dtype.itemsize for a in args)
                         + B * F_out * 4)

    kernel = make_seriesnet_kernel(T, L, H, n_fc, n_chunks)
    return pl.pallas_call(
        kernel,
        out_shape=jax.ShapeDtypeStruct((B, F_out), jnp.float32),
        grid=(nb,),
        in_specs=in_specs,
        out_specs=pl.BlockSpec((batch_tile, F_out), lambda b: (b, 0)),
        scratch_shapes=[pltpu.VMEM((T * batch_tile, 4 * H), jnp.float32)] * 2,
        compiler_params=pltpu.CompilerParams(
            dimension_semantics=("parallel",),
            vmem_limit_bytes=32 * 1024 * 1024,
            allow_input_fusion=[True] + [False] * (len(args) - 1)),
        cost_estimate=pl.CostEstimate(flops=int(flops),
                                      transcendentals=int(transcendentals),
                                      bytes_accessed=bytes_accessed),
    )(*args)


def series_net_reference(series_btd, params, fc_arch, *, matmul_dtype=jnp.float32):
    """Pure-JAX reference (un-fused FC weights). matmul_dtype=bfloat16 mirrors the
    kernel's numerics (bf16 operands, f32 accumulation)."""
    def mm(a, w):
        return jnp.dot(a.astype(matmul_dtype), w.astype(matmul_dtype),
                       preferred_element_type=jnp.float32)

    B, T, D = series_btd.shape
    L = len(params["lstm"])
    H = params["lstm"][0][1].shape[0]
    hs = [jnp.zeros((B, H), jnp.float32) for _ in range(L)]
    cs = [jnp.zeros((B, H), jnp.float32) for _ in range(L)]
    for t in range(T):
        inp = series_btd[:, t, :].astype(jnp.float32)
        for l in range(L):
            wih, whh, b = params["lstm"][l]
            pre = mm(inp, wih) + mm(hs[l], whh) + b      # gate order (i, f, o, g)
            i = jax.nn.sigmoid(pre[:, :H])
            f = jax.nn.sigmoid(pre[:, H:2 * H])
            o = jax.nn.sigmoid(pre[:, 2 * H:3 * H])
            g = jnp.tanh(pre[:, 3 * H:])
            cs[l] = f * cs[l] + i * g
            hs[l] = o * jnp.tanh(cs[l])
            inp = hs[l]
    hconv, cconv = params["hconv"], params["cconv"]
    y = jax.nn.relu(sum(hs[l] * hconv[l] for l in range(L)) + hconv[L])
    y = jax.nn.relu(mm(y, params["whfc"]) + params["bhfc"])
    z = jax.nn.relu(sum(cs[l] * cconv[l] for l in range(L)) + cconv[L])
    z = jax.nn.relu(mm(z, params["wcfc"]) + params["bcfc"])
    x = jnp.concatenate([hs[L - 1], y, z], axis=1)
    x = jax.nn.relu(mm(x, params["wfc0"]) + params["bfc0"])
    for w, b in params["fc_rest"]:
        x = jax.nn.relu(mm(x, w) + b)
    return x


if __name__ == "__main__":
    # Small shapes implied by the module: series (B, T, D), lstm_hidden_dim=H,
    # lstm_num_layers=L, h_fc_dim / c_fc_dim, fc_arch.  B=32 exercises the
    # interleaved sub-chain path (n_chunks=2).
    B, T, D = 32, 8, 4
    H, L = 32, 2
    HFC, CFC = 16, 16
    fc_arch = [64, 32]

    key = jax.random.PRNGKey(0)
    kp, kx = jax.random.split(key)
    params = init_params(kp, D, H, L, HFC, CFC, fc_arch)
    series = jax.random.normal(kx, (B, T, D), dtype=jnp.float32)

    out = jax.block_until_ready(series_net_forward(series, params, fc_arch))
    assert out.shape == (B, fc_arch[-1])

    # Tight check vs. a numerics-matched reference (bf16 matmul operands, f32 accum).
    ref_bf16 = series_net_reference(series, params, fc_arch, matmul_dtype=jnp.bfloat16)
    np.testing.assert_allclose(np.asarray(out), np.asarray(ref_bf16),
                               rtol=2e-3, atol=2e-3)
    # Loose check vs. the full-f32 reference (bf16 operand rounding ~1e-3 level here).
    ref_f32 = series_net_reference(series, params, fc_arch, matmul_dtype=jnp.float32)
    np.testing.assert_allclose(np.asarray(out), np.asarray(ref_f32),
                               rtol=5e-2, atol=5e-2)
    print("KERNEL_OK")
</pallas_src>

<mosaic_0001>
module attributes {stable_mosaic.version = 11 : i64} {
  func.func @kernel(%arg0: i32, %arg1: memref<8x32x4xf32, #tpu.memory_space<vmem>>, %arg2: memref<4x128xbf16, #tpu.memory_space<vmem>>, %arg3: memref<32x128xbf16, #tpu.memory_space<vmem>>, %arg4: memref<1x128xf32, #tpu.memory_space<vmem>>, %arg5: memref<32x128xbf16, #tpu.memory_space<vmem>>, %arg6: memref<32x128xbf16, #tpu.memory_space<vmem>>, %arg7: memref<1x128xf32, #tpu.memory_space<vmem>>, %arg8: memref<3xf32, #tpu.memory_space<smem>>, %arg9: memref<3xf32, #tpu.memory_space<smem>>, %arg10: memref<64x32xbf16, #tpu.memory_space<vmem>>, %arg11: memref<1x32xf32, #tpu.memory_space<vmem>>, %arg12: memref<64x64xbf16, #tpu.memory_space<vmem>>, %arg13: memref<1x64xf32, #tpu.memory_space<vmem>>, %arg14: memref<64x32xbf16, #tpu.memory_space<vmem>>, %arg15: memref<1x32xf32, #tpu.memory_space<vmem>>, %arg16: memref<32x32xf32, #tpu.memory_space<vmem>>, %arg17: memref<256x128xf32, #tpu.memory_space<vmem>>, %arg18: memref<256x128xf32, #tpu.memory_space<vmem>>) attributes {dimension_semantics = [#tpu.dimension_semantics<parallel>], iteration_bounds = array<i64: 1>, scalar_prefetch = 0 : i64, scratch_operands = 2 : i64, tpu.core_type = #tpu.core_type<tc>, window_params = [{transform_indices = @transform_0, window_bounds = array<i64: 8, 32, 4>}, {pipeline_mode = #tpu.pipeline_mode<synchronous>, transform_indices = @transform_1, window_bounds = array<i64: 4, 128>}, {pipeline_mode = #tpu.pipeline_mode<synchronous>, transform_indices = @transform_2, window_bounds = array<i64: 32, 128>}, {pipeline_mode = #tpu.pipeline_mode<synchronous>, transform_indices = @transform_3, window_bounds = array<i64: 1, 128>}, {pipeline_mode = #tpu.pipeline_mode<synchronous>, transform_indices = @transform_4, window_bounds = array<i64: 32, 128>}, {pipeline_mode = #tpu.pipeline_mode<synchronous>, transform_indices = @transform_5, window_bounds = array<i64: 32, 128>}, {pipeline_mode = #tpu.pipeline_mode<synchronous>, transform_indices = @transform_6, window_bounds = array<i64: 1, 128>}, {transform_indices = @transform_7, window_bounds = array<i64: 3>}, {transform_indices = @transform_8, window_bounds = array<i64: 3>}, {pipeline_mode = #tpu.pipeline_mode<synchronous>, transform_indices = @transform_9, window_bounds = array<i64: 64, 32>}, {pipeline_mode = #tpu.pipeline_mode<synchronous>, transform_indices = @transform_10, window_bounds = array<i64: 1, 32>}, {pipeline_mode = #tpu.pipeline_mode<synchronous>, transform_indices = @transform_11, window_bounds = array<i64: 64, 64>}, {pipeline_mode = #tpu.pipeline_mode<synchronous>, transform_indices = @transform_12, window_bounds = array<i64: 1, 64>}, {pipeline_mode = #tpu.pipeline_mode<synchronous>, transform_indices = @transform_13, window_bounds = array<i64: 64, 32>}, {pipeline_mode = #tpu.pipeline_mode<synchronous>, transform_indices = @transform_14, window_bounds = array<i64: 1, 32>}, {transform_indices = @transform_15, window_bounds = array<i64: 32, 32>}]} {
    %c0 = arith.constant 0 : index
    %c0_0 = arith.constant 0 : index
    %c0_1 = arith.constant 0 : index
    %0 = vector.load %arg1[%c0, %c0_0, %c0_1] : memref<8x32x4xf32, #tpu.memory_space<vmem>>, vector<8x32x4xf32>
    %1 = vector.shape_cast %0 : vector<8x32x4xf32> to vector<256x4xf32>
    %2 = arith.truncf %1 : vector<256x4xf32> to vector<256x4xbf16>
    %c0_2 = arith.constant 0 : index
    %c0_3 = arith.constant 0 : index
    %3 = vector.load %arg2[%c0_2, %c0_3] : memref<4x128xbf16, #tpu.memory_space<vmem>>, vector<4x128xbf16>
    %cst = arith.constant dense<0.000000e+00> : vector<256x128xf32>
    %4 = tpu.matmul %2, %3, %cst {dimension_numbers = #tpu.dot_dimension_numbers<[1], [0], [0], [1], [0, 0, 1, 1], [], []>} : vector<256x4xbf16>, vector<4x128xbf16>, vector<256x128xf32> -> vector<256x128xf32>
    %c0_4 = arith.constant 0 : index
    %c0_5 = arith.constant 0 : index
    %5 = vector.load %arg4[%c0_4, %c0_5] : memref<1x128xf32, #tpu.memory_space<vmem>>, vector<1x128xf32>
    %6 = vector.broadcast %5 : vector<1x128xf32> to vector<256x128xf32>
    %7 = arith.addf %4, %6 : vector<256x128xf32>
    %c0_6 = arith.constant 0 : index
    %c0_7 = arith.constant 0 : index
    %8 = vector.load %arg17[%c0_6, %c0_7] : memref<256x128xf32, #tpu.memory_space<vmem>>, vector<256x128xf32>
    tpu.vector_store %arg17[%c0_6, %c0_7], %7 {strides = array<i32>} : memref<256x128xf32, #tpu.memory_space<vmem>>, vector<256x128xf32>,
    %c0_8 = arith.constant 0 : index
    %c0_9 = arith.constant 0 : index
    %9 = vector.load %arg3[%c0_8, %c0_9] : memref<32x128xbf16, #tpu.memory_space<vmem>>, vector<32x128xbf16>
    %c0_10 = arith.constant 0 : index
    %c0_11 = arith.constant 0 : index
    %10 = vector.load %arg5[%c0_10, %c0_11] : memref<32x128xbf16, #tpu.memory_space<vmem>>, vector<32x128xbf16>
    %c0_12 = arith.constant 0 : index
    %c0_13 = arith.constant 0 : index
    %11 = vector.load %arg7[%c0_12, %c0_13] : memref<1x128xf32, #tpu.memory_space<vmem>>, vector<1x128xf32>
    %cst_14 = arith.constant 0.000000e+00 : f32
    %12 = vector.broadcast %cst_14 : f32 to vector<16x32xf32>
    %cst_15 = arith.constant 0.000000e+00 : f32
    %13 = vector.broadcast %cst_15 : f32 to vector<16x32xf32>
    %cst_16 = arith.constant 0.000000e+00 : f32
    %14 = vector.broadcast %cst_16 : f32 to vector<16x32xf32>
    %cst_17 = arith.constant 0.000000e+00 : f32
    %15 = vector.broadcast %cst_17 : f32 to vector<16x32xf32>
    %c0_18 = arith.constant 0 : index
    %c0_19 = arith.constant 0 : index
    %16 = vector.load %arg17[%c0_18, %c0_19] : memref<256x128xf32, #tpu.memory_space<vmem>>, vector<16x128xf32>
    %17 = arith.truncf %12 : vector<16x32xf32> to vector<16x32xbf16>
    %cst_20 = arith.constant dense<0.000000e+00> : vector<16x128xf32>
    %18 = tpu.matmul %17, %9, %cst_20 {dimension_numbers = #tpu.dot_dimension_numbers<[1], [0], [0], [1], [0, 0, 1, 1], [], []>} : vector<16x32xbf16>, vector<32x128xbf16>, vector<16x128xf32> -> vector<16x128xf32>
    %19 = arith.addf %16, %18 : vector<16x128xf32>
    %20 = vector.extract_strided_slice %19 {offsets = [0, 0], sizes = [16, 96], strides = [1, 1]} : vector<16x128xf32> to vector<16x96xf32>
    %21 = arith.negf %20 : vector<16x96xf32>
    %22 = math.exp %21 : vector<16x96xf32>
    %cst_21 = arith.constant 1.000000e+00 : f32
    %23 = vector.broadcast %cst_21 : f32 to vector<16x96xf32>
    %24 = arith.addf %23, %22 : vector<16x96xf32>
    %25 = arith.divf %23, %24 : vector<16x96xf32>
    %26 = vector.extract_strided_slice %19 {offsets = [0, 96], sizes = [16, 32], strides = [1, 1]} : vector<16x128xf32> to vector<16x32xf32>
    %27 = math.tanh %26 : vector<16x32xf32>
    %28 = vector.extract_strided_slice %25 {offsets = [0, 32], sizes = [16, 32], strides = [1, 1]} : vector<16x96xf32> to vector<16x32xf32>
    %29 = arith.mulf %28, %14 : vector<16x32xf32>
    %30 = vector.extract_strided_slice %25 {offsets = [0, 0], sizes = [16, 32], strides = [1, 1]} : vector<16x96xf32> to vector<16x32xf32>
    %31 = arith.mulf %30, %27 : vector<16x32xf32>
    %32 = arith.addf %29, %31 : vector<16x32xf32>
    %33 = vector.extract_strided_slice %25 {offsets = [0, 64], sizes = [16, 32], strides = [1, 1]} : vector<16x96xf32> to vector<16x32xf32>
    %34 = math.tanh %32 : vector<16x32xf32>
    %35 = arith.mulf %33, %34 : vector<16x32xf32>
    %36 = arith.truncf %35 : vector<16x32xf32> to vector<16x32xbf16>
    %cst_22 = arith.constant dense<0.000000e+00> : vector<16x128xf32>
    %37 = tpu.matmul %36, %10, %cst_22 {dimension_numbers = #tpu.dot_dimension_numbers<[1], [0], [0], [1], [0, 0, 1, 1], [], []>} : vector<16x32xbf16>, vector<32x128xbf16>, vector<16x128xf32> -> vector<16x128xf32>
    %38 = vector.broadcast %11 : vector<1x128xf32> to vector<16x128xf32>
    %39 = arith.addf %37, %38 : vector<16x128xf32>
    %c0_23 = arith.constant 0 : index
    %c0_24 = arith.constant 0 : index
    %40 = vector.load %arg18[%c0_23, %c0_24] : memref<256x128xf32, #tpu.memory_space<vmem>>, vector<16x128xf32>
    tpu.vector_store %arg18[%c0_23, %c0_24], %39 {strides = array<i32>} : memref<256x128xf32, #tpu.memory_space<vmem>>, vector<16x128xf32>,
    %c16 = arith.constant 16 : index
    %c0_25 = arith.constant 0 : index
    %41 = vector.load %arg17[%c16, %c0_25] : memref<256x128xf32, #tpu.memory_space<vmem>>, vector<16x128xf32>
    %42 = arith.truncf %13 : vector<16x32xf32> to vector<16x32xbf16>
    %cst_26 = arith.constant dense<0.000000e+00> : vector<16x128xf32>
    %43 = tpu.matmul %42, %9, %cst_26 {dimension_numbers = #tpu.dot_dimension_numbers<[1], [0], [0], [1], [0, 0, 1, 1], [], []>} : vector<16x32xbf16>, vector<32x128xbf16>, vector<16x128xf32> -> vector<16x128xf32>
    %44 = arith.addf %41, %43 : vector<16x128xf32>
    %45 = vector.extract_strided_slice %44 {offsets = [0, 0], sizes = [16, 96], strides = [1, 1]} : vector<16x128xf32> to vector<16x96xf32>
    %46 = arith.negf %45 : vector<16x96xf32>
    %47 = math.exp %46 : vector<16x96xf32>
    %cst_27 = arith.constant 1.000000e+00 : f32
    %48 = vector.broadcast %cst_27 : f32 to vector<16x96xf32>
    %49 = arith.addf %48, %47 : vector<16x96xf32>
    %50 = arith.divf %48, %49 : vector<16x96xf32>
    %51 = vector.extract_strided_slice %44 {offsets = [0, 96], sizes = [16, 32], strides = [1, 1]} : vector<16x128xf32> to vector<16x32xf32>
    %52 = math.tanh %51 : vector<16x32xf32>
    %53 = vector.extract_strided_slice %50 {offsets = [0, 32], sizes = [16, 32], strides = [1, 1]} : vector<16x96xf32> to vector<16x32xf32>
    %54 = arith.mulf %53, %15 : vector<16x32xf32>
    %55 = vector.extract_strided_slice %50 {offsets = [0, 0], sizes = [16, 32], strides = [1, 1]} : vector<16x96xf32> to vector<16x32xf32>
    %56 = arith.mulf %55, %52 : vector<16x32xf32>
    %57 = arith.addf %54, %56 : vector<16x32xf32>
    %58 = vector.extract_strided_slice %50 {offsets = [0, 64], sizes = [16, 32], strides = [1, 1]} : vector<16x96xf32> to vector<16x32xf32>
    %59 = math.tanh %57 : vector<16x32xf32>
    %60 = arith.mulf %58, %59 : vector<16x32xf32>
    %61 = arith.truncf %60 : vector<16x32xf32> to vector<16x32xbf16>
    %cst_28 = arith.constant dense<0.000000e+00> : vector<16x128xf32>
    %62 = tpu.matmul %61, %10, %cst_28 {dimension_numbers = #tpu.dot_dimension_numbers<[1], [0], [0], [1], [0, 0, 1, 1], [], []>} : vector<16x32xbf16>, vector<32x128xbf16>, vector<16x128xf32> -> vector<16x128xf32>
    %63 = vector.broadcast %11 : vector<1x128xf32> to vector<16x128xf32>
    %64 = arith.addf %62, %63 : vector<16x128xf32>
    %c16_29 = arith.constant 16 : index
    %c0_30 = arith.constant 0 : index
    %65 = vector.load %arg18[%c16_29, %c0_30] : memref<256x128xf32, #tpu.memory_space<vmem>>, vector<16x128xf32>
    tpu.vector_store %arg18[%c16_29, %c0_30], %64 {strides = array<i32>} : memref<256x128xf32, #tpu.memory_space<vmem>>, vector<16x128xf32>,
    %c32 = arith.constant 32 : index
    %c0_31 = arith.constant 0 : index
    %66 = vector.load %arg17[%c32, %c0_31] : memref<256x128xf32, #tpu.memory_space<vmem>>, vector<16x128xf32>
    %67 = arith.truncf %35 : vector<16x32xf32> to vector<16x32xbf16>
    %cst_32 = arith.constant dense<0.000000e+00> : vector<16x128xf32>
    %68 = tpu.matmul %67, %9, %cst_32 {dimension_numbers = #tpu.dot_dimension_numbers<[1], [0], [0], [1], [0, 0, 1, 1], [], []>} : vector<16x32xbf16>, vector<32x128xbf16>, vector<16x128xf32> -> vector<16x128xf32>
    %69 = arith.addf %66, %68 : vector<16x128xf32>
    %70 = vector.extract_strided_slice %69 {offsets = [0, 0], sizes = [16, 96], strides = [1, 1]} : vector<16x128xf32> to vector<16x96xf32>
    %71 = arith.negf %70 : vector<16x96xf32>
    %72 = math.exp %71 : vector<16x96xf32>
    %cst_33 = arith.constant 1.000000e+00 : f32
    %73 = vector.broadcast %cst_33 : f32 to vector<16x96xf32>
    %74 = arith.addf %73, %72 : vector<16x96xf32>
    %75 = arith.divf %73, %74 : vector<16x96xf32>
    %76 = vector.extract_strided_slice %69 {offsets = [0, 96], sizes = [16, 32], strides = [1, 1]} : vector<16x128xf32> to vector<16x32xf32>
    %77 = math.tanh %76 : vector<16x32xf32>
    %78 = vector.extract_strided_slice %75 {offsets = [0, 32], sizes = [16, 32], strides = [1, 1]} : vector<16x96xf32> to vector<16x32xf32>
    %79 = arith.mulf %78, %32 : vector<16x32xf32>
    %80 = vector.extract_strided_slice %75 {offsets = [0, 0], sizes = [16, 32], strides = [1, 1]} : vector<16x96xf32> to vector<16x32xf32>
    %81 = arith.mulf %80, %77 : vector<16x32xf32>
    %82 = arith.addf %79, %81 : vector<16x32xf32>
    %83 = vector.extract_strided_slice %75 {offsets = [0, 64], sizes = [16, 32], strides = [1, 1]} : vector<16x96xf32> to vector<16x32xf32>
    %84 = math.tanh %82 : vector<16x32xf32>
    %85 = arith.mulf %83, %84 : vector<16x32xf32>
    %86 = arith.truncf %85 : vector<16x32xf32> to vector<16x32xbf16>
    %cst_34 = arith.constant dense<0.000000e+00> : vector<16x128xf32>
    %87 = tpu.matmul %86, %10, %cst_34 {dimension_numbers = #tpu.dot_dimension_numbers<[1], [0], [0], [1], [0, 0, 1, 1], [], []>} : vector<16x32xbf16>, vector<32x128xbf16>, vector<16x128xf32> -> vector<16x128xf32>
    %88 = vector.broadcast %11 : vector<1x128xf32> to vector<16x128xf32>
    %89 = arith.addf %87, %88 : vector<16x128xf32>
    %c32_35 = arith.constant 32 : index
    %c0_36 = arith.constant 0 : index
    %90 = vector.load %arg18[%c32_35, %c0_36] : memref<256x128xf32, #tpu.memory_space<vmem>>, vector<16x128xf32>
    tpu.vector_store %arg18[%c32_35, %c0_36], %89 {strides = array<i32>} : memref<256x128xf32, #tpu.memory_space<vmem>>, vector<16x128xf32>,
    %c48 = arith.constant 48 : index
    %c0_37 = arith.constant 0 : index
    %91 = vector.load %arg17[%c48, %c0_37] : memref<256x128xf32, #tpu.memory_space<vmem>>, vector<16x128xf32>
    %92 = arith.truncf %60 : vector<16x32xf32> to vector<16x32xbf16>
    %cst_38 = arith.constant dense<0.000000e+00> : vector<16x128xf32>
    %93 = tpu.matmul %92, %9, %cst_38 {dimension_numbers = #tpu.dot_dimension_numbers<[1], [0], [0], [1], [0, 0, 1, 1], [], []>} : vector<16x32xbf16>, vector<32x128xbf16>, vector<16x128xf32> -> vector<16x128xf32>
    %94 = arith.addf %91, %93 : vector<16x128xf32>
    %95 = vector.extract_strided_slice %94 {offsets = [0, 0], sizes = [16, 96], strides = [1, 1]} : vector<16x128xf32> to vector<16x96xf32>
    %96 = arith.negf %95 : vector<16x96xf32>
    %97 = math.exp %96 : vector<16x96xf32>
    %cst_39 = arith.constant 1.000000e+00 : f32
    %98 = vector.broadcast %cst_39 : f32 to vector<16x96xf32>
    %99 = arith.addf %98, %97 : vector<16x96xf32>
    %100 = arith.divf %98, %99 : vector<16x96xf32>
    %101 = vector.extract_strided_slice %94 {offsets = [0, 96], sizes = [16, 32], strides = [1, 1]} : vector<16x128xf32> to vector<16x32xf32>
    %102 = math.tanh %101 : vector<16x32xf32>
    %103 = vector.extract_strided_slice %100 {offsets = [0, 32], sizes = [16, 32], strides = [1, 1]} : vector<16x96xf32> to vector<16x32xf32>
    %104 = arith.mulf %103, %57 : vector<16x32xf32>
    %105 = vector.extract_strided_slice %100 {offsets = [0, 0], sizes = [16, 32], strides = [1, 1]} : vector<16x96xf32> to vector<16x32xf32>
    %106 = arith.mulf %105, %102 : vector<16x32xf32>
    %107 = arith.addf %104, %106 : vector<16x32xf32>
    %108 = vector.extract_strided_slice %100 {offsets = [0, 64], sizes = [16, 32], strides = [1, 1]} : vector<16x96xf32> to vector<16x32xf32>
    %109 = math.tanh %107 : vector<16x32xf32>
    %110 = arith.mulf %108, %109 : vector<16x32xf32>
    %111 = arith.truncf %110 : vector<16x32xf32> to vector<16x32xbf16>
    %cst_40 = arith.constant dense<0.000000e+00> : vector<16x128xf32>
    %112 = tpu.matmul %111, %10, %cst_40 {dimension_numbers = #tpu.dot_dimension_numbers<[1], [0], [0], [1], [0, 0, 1, 1], [], []>} : vector<16x32xbf16>, vector<32x128xbf16>, vector<16x128xf32> -> vector<16x128xf32>
    %113 = vector.broadcast %11 : vector<1x128xf32> to vector<16x128xf32>
    %114 = arith.addf %112, %113 : vector<16x128xf32>
    %c48_41 = arith.constant 48 : index
    %c0_42 = arith.constant 0 : index
    %115 = vector.load %arg18[%c48_41, %c0_42] : memref<256x128xf32, #tpu.memory_space<vmem>>, vector<16x128xf32>
    tpu.vector_store %arg18[%c48_41, %c0_42], %114 {strides = array<i32>} : memref<256x128xf32, #tpu.memory_space<vmem>>, vector<16x128xf32>,
    %c64 = arith.constant 64 : index
    %c0_43 = arith.constant 0 : index
    %116 = vector.load %arg17[%c64, %c0_43] : memref<256x128xf32, #tpu.memory_space<vmem>>, vector<16x128xf32>
    %117 = arith.truncf %85 : vector<16x32xf32> to vector<16x32xbf16>
    %cst_44 = arith.constant dense<0.000000e+00> : vector<16x128xf32>
    %118 = tpu.matmul %117, %9, %cst_44 {dimension_numbers = #tpu.dot_dimension_numbers<[1], [0], [0], [1], [0, 0, 1, 1], [], []>} : vector<16x32xbf16>, vector<32x128xbf16>, vector<16x128xf32> -> vector<16x128xf32>
    %119 = arith.addf %116, %118 : vector<16x128xf32>
    %120 = vector.extract_strided_slice %119 {offsets = [0, 0], sizes = [16, 96], strides = [1, 1]} : vector<16x128xf32> to vector<16x96xf32>
    %121 = arith.negf %120 : vector<16x96xf32>
    %122 = math.exp %121 : vector<16x96xf32>
    %cst_45 = arith.constant 1.000000e+00 : f32
    %123 = vector.broadcast %cst_45 : f32 to vector<16x96xf32>
    %124 = arith.addf %123, %122 : vector<16x96xf32>
    %125 = arith.divf %123, %124 : vector<16x96xf32>
    %126 = vector.extract_strided_slice %119 {offsets = [0, 96], sizes = [16, 32], strides = [1, 1]} : vector<16x128xf32> to vector<16x32xf32>
    %127 = math.tanh %126 : vector<16x32xf32>
    %128 = vector.extract_strided_slice %125 {offsets = [0, 32], sizes = [16, 32], strides = [1, 1]} : vector<16x96xf32> to vector<16x32xf32>
    %129 = arith.mulf %128, %82 : vector<16x32xf32>
    %130 = vector.extract_strided_slice %125 {offsets = [0, 0], sizes = [16, 32], strides = [1, 1]} : vector<16x96xf32> to vector<16x32xf32>
    %131 = arith.mulf %130, %127 : vector<16x32xf32>
    %132 = arith.addf %129, %131 : vector<16x32xf32>
    %133 = vector.extract_strided_slice %125 {offsets = [0, 64], sizes = [16, 32], strides = [1, 1]} : vector<16x96xf32> to vector<16x32xf32>
    %134 = math.tanh %132 : vector<16x32xf32>
    %135 = arith.mulf %133, %134 : vector<16x32xf32>
    %136 = arith.truncf %135 : vector<16x32xf32> to vector<16x32xbf16>
    %cst_46 = arith.constant dense<0.000000e+00> : vector<16x128xf32>
    %137 = tpu.matmul %136, %10, %cst_46 {dimension_numbers = #tpu.dot_dimension_numbers<[1], [0], [0], [1], [0, 0, 1, 1], [], []>} : vector<16x32xbf16>, vector<32x128xbf16>, vector<16x128xf32> -> vector<16x128xf32>
    %138 = vector.broadcast %11 : vector<1x128xf32> to vector<16x128xf32>
    %139 = arith.addf %137, %138 : vector<16x128xf32>
    %c64_47 = arith.constant 64 : index
    %c0_48 = arith.constant 0 : index
    %140 = vector.load %arg18[%c64_47, %c0_48] : memref<256x128xf32, #tpu.memory_space<vmem>>, vector<16x128xf32>
    tpu.vector_store %arg18[%c64_47, %c0_48], %139 {strides = array<i32>} : memref<256x128xf32, #tpu.memory_space<vmem>>, vector<16x128xf32>,
    %c80 = arith.constant 80 : index
    %c0_49 = arith.constant 0 : index
    %141 = vector.load %arg17[%c80, %c0_49] : memref<256x128xf32, #tpu.memory_space<vmem>>, vector<16x128xf32>
    %142 = arith.truncf %110 : vector<16x32xf32> to vector<16x32xbf16>
    %cst_50 = arith.constant dense<0.000000e+00> : vector<16x128xf32>
    %143 = tpu.matmul %142, %9, %cst_50 {dimension_numbers = #tpu.dot_dimension_numbers<[1], [0], [0], [1], [0, 0, 1, 1], [], []>} : vector<16x32xbf16>, vector<32x128xbf16>, vector<16x128xf32> -> vector<16x128xf32>
    %144 = arith.addf %141, %143 : vector<16x128xf32>
    %145 = vector.extract_strided_slice %144 {offsets = [0, 0], sizes = [16, 96], strides = [1, 1]} : vector<16x128xf32> to vector<16x96xf32>
    %146 = arith.negf %145 : vector<16x96xf32>
    %147 = math.exp %146 : vector<16x96xf32>
    %cst_51 = arith.constant 1.000000e+00 : f32
    %148 = vector.broadcast %cst_51 : f32 to vector<16x96xf32>
    %149 = arith.addf %148, %147 : vector<16x96xf32>
    %150 = arith.divf %148, %149 : vector<16x96xf32>
    %151 = vector.extract_strided_slice %144 {offsets = [0, 96], sizes = [16, 32], strides = [1, 1]} : vector<16x128xf32> to vector<16x32xf32>
    %152 = math.tanh %151 : vector<16x32xf32>
    %153 = vector.extract_strided_slice %150 {offsets = [0, 32], sizes = [16, 32], strides = [1, 1]} : vector<16x96xf32> to vector<16x32xf32>
    %154 = arith.mulf %153, %107 : vector<16x32xf32>
    %155 = vector.extract_strided_slice %150 {offsets = [0, 0], sizes = [16, 32], strides = [1, 1]} : vector<16x96xf32> to vector<16x32xf32>
    %156 = arith.mulf %155, %152 : vector<16x32xf32>
    %157 = arith.addf %154, %156 : vector<16x32xf32>
    %158 = vector.extract_strided_slice %150 {offsets = [0, 64], sizes = [16, 32], strides = [1, 1]} : vector<16x96xf32> to vector<16x32xf32>
    %159 = math.tanh %157 : vector<16x32xf32>
    %160 = arith.mulf %158, %159 : vector<16x32xf32>
    %161 = arith.truncf %160 : vector<16x32xf32> to vector<16x32xbf16>
    %cst_52 = arith.constant dense<0.000000e+00> : vector<16x128xf32>
    %162 = tpu.matmul %161, %10, %cst_52 {dimension_numbers = #tpu.dot_dimension_numbers<[1], [0], [0], [1], [0, 0, 1, 1], [], []>} : vector<16x32xbf16>, vector<32x128xbf16>, vector<16x128xf32> -> vector<16x128xf32>
    %163 = vector.broadcast %11 : vector<1x128xf32> to vector<16x128xf32>
    %164 = arith.addf %162, %163 : vector<16x128xf32>
    %c80_53 = arith.constant 80 : index
    %c0_54 = arith.constant 0 : index
    %165 = vector.load %arg18[%c80_53, %c0_54] : memref<256x128xf32, #tpu.memory_space<vmem>>, vector<16x128xf32>
    tpu.vector_store %arg18[%c80_53, %c0_54], %164 {strides = array<i32>} : memref<256x128xf32, #tpu.memory_space<vmem>>, vector<16x128xf32>,
    %c96 = arith.constant 96 : index
    %c0_55 = arith.constant 0 : index
    %166 = vector.load %arg17[%c96, %c0_55] : memref<256x128xf32, #tpu.memory_space<vmem>>, vector<16x128xf32>
    %167 = arith.truncf %135 : vector<16x32xf32> to vector<16x32xbf16>
    %cst_56 = arith.constant dense<0.000000e+00> : vector<16x128xf32>
    %168 = tpu.matmul %167, %9, %cst_56 {dimension_numbers = #tpu.dot_dimension_numbers<[1], [0], [0], [1], [0, 0, 1, 1], [], []>} : vector<16x32xbf16>, vector<32x128xbf16>, vector<16x128xf32> -> vector<16x128xf32>
    %169 = arith.addf %166, %168 : vector<16x128xf32>
    %170 = vector.extract_strided_slice %169 {offsets = [0, 0], sizes = [16, 96], strides = [1, 1]} : vector<16x128xf32> to vector<16x96xf32>
    %171 = arith.negf %170 : vector<16x96xf32>
    %172 = math.exp %171 : vector<16x96xf32>
    %cst_57 = arith.constant 1.000000e+00 : f32
    %173 = vector.broadcast %cst_57 : f32 to vector<16x96xf32>
    %174 = arith.addf %173, %172 : vector<16x96xf32>
    %175 = arith.divf %173, %174 : vector<16x96xf32>
    %176 = vector.extract_strided_slice %169 {offsets = [0, 96], sizes = [16, 32], strides = [1, 1]} : vector<16x128xf32> to vector<16x32xf32>
    %177 = math.tanh %176 : vector<16x32xf32>
    %178 = vector.extract_strided_slice %175 {offsets = [0, 32], sizes = [16, 32], strides = [1, 1]} : vector<16x96xf32> to vector<16x32xf32>
    %179 = arith.mulf %178, %132 : vector<16x32xf32>
    %180 = vector.extract_strided_slice %175 {offsets = [0, 0], sizes = [16, 32], strides = [1, 1]} : vector<16x96xf32> to vector<16x32xf32>
    %181 = arith.mulf %180, %177 : vector<16x32xf32>
    %182 = arith.addf %179, %181 : vector<16x32xf32>
    %183 = vector.extract_strided_slice %175 {offsets = [0, 64], sizes = [16, 32], strides = [1, 1]} : vector<16x96xf32> to vector<16x32xf32>
    %184 = math.tanh %182 : vector<16x32xf32>
    %185 = arith.mulf %183, %184 : vector<16x32xf32>
    %186 = arith.truncf %185 : vector<16x32xf32> to vector<16x32xbf16>
    %cst_58 = arith.constant dense<0.000000e+00> : vector<16x128xf32>
    %187 = tpu.matmul %186, %10, %cst_58 {dimension_numbers = #tpu.dot_dimension_numbers<[1], [0], [0], [1], [0, 0, 1, 1], [], []>} : vector<16x32xbf16>, vector<32x128xbf16>, vector<16x128xf32> -> vector<16x128xf32>
    %188 = vector.broadcast %11 : vector<1x128xf32> to vector<16x128xf32>
    %189 = arith.addf %187, %188 : vector<16x128xf32>
    %c96_59 = arith.constant 96 : index
    %c0_60 = arith.constant 0 : index
    %190 = vector.load %arg18[%c96_59, %c0_60] : memref<256x128xf32, #tpu.memory_space<vmem>>, vector<16x128xf32>
    tpu.vector_store %arg18[%c96_59, %c0_60], %189 {strides = array<i32>} : memref<256x128xf32, #tpu.memory_space<vmem>>, vector<16x128xf32>,
    %c112 = arith.constant 112 : index
    %c0_61 = arith.constant 0 : index
    %191 = vector.load %arg17[%c112, %c0_61] : memref<256x128xf32, #tpu.memory_space<vmem>>, vector<16x128xf32>
    %192 = arith.truncf %160 : vector<16x32xf32> to vector<16x32xbf16>
    %cst_62 = arith.constant dense<0.000000e+00> : vector<16x128xf32>
    %193 = tpu.matmul %192, %9, %cst_62 {dimension_numbers = #tpu.dot_dimension_numbers<[1], [0], [0], [1], [0, 0, 1, 1], [], []>} : vector<16x32xbf16>, vector<32x128xbf16>, vector<16x128xf32> -> vector<16x128xf32>
    %194 = arith.addf %191, %193 : vector<16x128xf32>
    %195 = vector.extract_strided_slice %194 {offsets = [0, 0], sizes = [16, 96], strides = [1, 1]} : vector<16x128xf32> to vector<16x96xf32>
    %196 = arith.negf %195 : vector<16x96xf32>
    %197 = math.exp %196 : vector<16x96xf32>
    %cst_63 = arith.constant 1.000000e+00 : f32
    %198 = vector.broadcast %cst_63 : f32 to vector<16x96xf32>
    %199 = arith.addf %198, %197 : vector<16x96xf32>
    %200 = arith.divf %198, %199 : vector<16x96xf32>
    %201 = vector.extract_strided_slice %194 {offsets = [0, 96], sizes = [16, 32], strides = [1, 1]} : vector<16x128xf32> to vector<16x32xf32>
    %202 = math.tanh %201 : vector<16x32xf32>
    %203 = vector.extract_strided_slice %200 {offsets = [0, 32], sizes = [16, 32], strides = [1, 1]} : vector<16x96xf32> to vector<16x32xf32>
    %204 = arith.mulf %203, %157 : vector<16x32xf32>
    %205 = vector.extract_strided_slice %200 {offsets = [0, 0], sizes = [16, 32], strides = [1, 1]} : vector<16x96xf32> to vector<16x32xf32>
    %206 = arith.mulf %205, %202 : vector<16x32xf32>
    %207 = arith.addf %204, %206 : vector<16x32xf32>
    %208 = vector.extract_strided_slice %200 {offsets = [0, 64], sizes = [16, 32], strides = [1, 1]} : vector<16x96xf32> to vector<16x32xf32>
    %209 = math.tanh %207 : vector<16x32xf32>
    %210 = arith.mulf %208, %209 : vector<16x32xf32>
    %211 = arith.truncf %210 : vector<16x32xf32> to vector<16x32xbf16>
    %cst_64 = arith.constant dense<0.000000e+00> : vector<16x128xf32>
    %212 = tpu.matmul %211, %10, %cst_64 {dimension_numbers = #tpu.dot_dimension_numbers<[1], [0], [0], [1], [0, 0, 1, 1], [], []>} : vector<16x32xbf16>, vector<32x128xbf16>, vector<16x128xf32> -> vector<16x128xf32>
    %213 = vector.broadcast %11 : vector<1x128xf32> to vector<16x128xf32>
    %214 = arith.addf %212, %213 : vector<16x128xf32>
    %c112_65 = arith.constant 112 : index
    %c0_66 = arith.constant 0 : index
    %215 = vector.load %arg18[%c112_65, %c0_66] : memref<256x128xf32, #tpu.memory_space<vmem>>, vector<16x128xf32>
    tpu.vector_store %arg18[%c112_65, %c0_66], %214 {strides = array<i32>} : memref<256x128xf32, #tpu.memory_space<vmem>>, vector<16x128xf32>,
    %c128 = arith.constant 128 : index
    %c0_67 = arith.constant 0 : index
    %216 = vector.load %arg17[%c128, %c0_67] : memref<256x128xf32, #tpu.memory_space<vmem>>, vector<16x128xf32>
    %217 = arith.truncf %185 : vector<16x32xf32> to vector<16x32xbf16>
    %cst_68 = arith.constant dense<0.000000e+00> : vector<16x128xf32>
    %218 = tpu.matmul %217, %9, %cst_68 {dimension_numbers = #tpu.dot_dimension_numbers<[1], [0], [0], [1], [0, 0, 1, 1], [], []>} : vector<16x32xbf16>, vector<32x128xbf16>, vector<16x128xf32> -> vector<16x128xf32>
    %219 = arith.addf %216, %218 : vector<16x128xf32>
    %220 = vector.extract_strided_slice %219 {offsets = [0, 0], sizes = [16, 96], strides = [1, 1]} : vector<16x128xf32> to vector<16x96xf32>
    %221 = arith.negf %220 : vector<16x96xf32>
    %222 = math.exp %221 : vector<16x96xf32>
    %cst_69 = arith.constant 1.000000e+00 : f32
    %223 = vector.broadcast %cst_69 : f32 to vector<16x96xf32>
    %224 = arith.addf %223, %222 : vector<16x96xf32>
    %225 = arith.divf %223, %224 : vector<16x96xf32>
    %226 = vector.extract_strided_slice %219 {offsets = [0, 96], sizes = [16, 32], strides = [1, 1]} : vector<16x128xf32> to vector<16x32xf32>
    %227 = math.tanh %226 : vector<16x32xf32>
    %228 = vector.extract_strided_slice %225 {offsets = [0, 32], sizes = [16, 32], strides = [1, 1]} : vector<16x96xf32> to vector<16x32xf32>
    %229 = arith.mulf %228, %182 : vector<16x32xf32>
    %230 = vector.extract_strided_slice %225 {offsets = [0, 0], sizes = [16, 32], strides = [1, 1]} : vector<16x96xf32> to vector<16x32xf32>
    %231 = arith.mulf %230, %227 : vector<16x32xf32>
    %232 = arith.addf %229, %231 : vector<16x32xf32>
    %233 = vector.extract_strided_slice %225 {offsets = [0, 64], sizes = [16, 32], strides = [1, 1]} : vector<16x96xf32> to vector<16x32xf32>
    %234 = math.tanh %232 : vector<16x32xf32>
    %235 = arith.mulf %233, %234 : vector<16x32xf32>
    %236 = arith.truncf %235 : vector<16x32xf32> to vector<16x32xbf16>
    %cst_70 = arith.constant dense<0.000000e+00> : vector<16x128xf32>
    %237 = tpu.matmul %236, %10, %cst_70 {dimension_numbers = #tpu.dot_dimension_numbers<[1], [0], [0], [1], [0, 0, 1, 1], [], []>} : vector<16x32xbf16>, vector<32x128xbf16>, vector<16x128xf32> -> vector<16x128xf32>
    %238 = vector.broadcast %11 : vector<1x128xf32> to vector<16x128xf32>
    %239 = arith.addf %237, %238 : vector<16x128xf32>
    %c128_71 = arith.constant 128 : index
    %c0_72 = arith.constant 0 : index
    %240 = vector.load %arg18[%c128_71, %c0_72] : memref<256x128xf32, #tpu.memory_space<vmem>>, vector<16x128xf32>
    tpu.vector_store %arg18[%c128_71, %c0_72], %239 {strides = array<i32>} : memref<256x128xf32, #tpu.memory_space<vmem>>, vector<16x128xf32>,
    %c144 = arith.constant 144 : index
    %c0_73 = arith.constant 0 : index
    %241 = vector.load %arg17[%c144, %c0_73] : memref<256x128xf32, #tpu.memory_space<vmem>>, vector<16x128xf32>
    %242 = arith.truncf %210 : vector<16x32xf32> to vector<16x32xbf16>
    %cst_74 = arith.constant dense<0.000000e+00> : vector<16x128xf32>
    %243 = tpu.matmul %242, %9, %cst_74 {dimension_numbers = #tpu.dot_dimension_numbers<[1], [0], [0], [1], [0, 0, 1, 1], [], []>} : vector<16x32xbf16>, vector<32x128xbf16>, vector<16x128xf32> -> vector<16x128xf32>
    %244 = arith.addf %241, %243 : vector<16x128xf32>
    %245 = vector.extract_strided_slice %244 {offsets = [0, 0], sizes = [16, 96], strides = [1, 1]} : vector<16x128xf32> to vector<16x96xf32>
    %246 = arith.negf %245 : vector<16x96xf32>
    %247 = math.exp %246 : vector<16x96xf32>
    %cst_75 = arith.constant 1.000000e+00 : f32
    %248 = vector.broadcast %cst_75 : f32 to vector<16x96xf32>
    %249 = arith.addf %248, %247 : vector<16x96xf32>
    %250 = arith.divf %248, %249 : vector<16x96xf32>
    %251 = vector.extract_strided_slice %244 {offsets = [0, 96], sizes = [16, 32], strides = [1, 1]} : vector<16x128xf32> to vector<16x32xf32>
    %252 = math.tanh %251 : vector<16x32xf32>
    %253 = vector.extract_strided_slice %250 {offsets = [0, 32], sizes = [16, 32], strides = [1, 1]} : vector<16x96xf32> to vector<16x32xf32>
    %254 = arith.mulf %253, %207 : vector<16x32xf32>
    %255 = vector.extract_strided_slice %250 {offsets = [0, 0], sizes = [16, 32], strides = [1, 1]} : vector<16x96xf32> to vector<16x32xf32>
    %256 = arith.mulf %255, %252 : vector<16x32xf32>
    %257 = arith.addf %254, %256 : vector<16x32xf32>
    %258 = vector.extract_strided_slice %250 {offsets = [0, 64], sizes = [16, 32], strides = [1, 1]} : vector<16x96xf32> to vector<16x32xf32>
    %259 = math.tanh %257 : vector<16x32xf32>
    %260 = arith.mulf %258, %259 : vector<16x32xf32>
    %261 = arith.truncf %260 : vector<16x32xf32> to vector<16x32xbf16>
    %cst_76 = arith.constant dense<0.000000e+00> : vector<16x128xf32>
    %262 = tpu.matmul %261, %10, %cst_76 {dimension_numbers = #tpu.dot_dimension_numbers<[1], [0], [0], [1], [0, 0, 1, 1], [], []>} : vector<16x32xbf16>, vector<32x128xbf16>, vector<16x128xf32> -> vector<16x128xf32>
    %263 = vector.broadcast %11 : vector<1x128xf32> to vector<16x128xf32>
    %264 = arith.addf %262, %263 : vector<16x128xf32>
    %c144_77 = arith.constant 144 : index
    %c0_78 = arith.constant 0 : index
    %265 = vector.load %arg18[%c144_77, %c0_78] : memref<256x128xf32, #tpu.memory_space<vmem>>, vector<16x128xf32>
    tpu.vector_store %arg18[%c144_77, %c0_78], %264 {strides = array<i32>} : memref<256x128xf32, #tpu.memory_space<vmem>>, vector<16x128xf32>,
    %c160 = arith.constant 160 : index
    %c0_79 = arith.constant 0 : index
    %266 = vector.load %arg17[%c160, %c0_79] : memref<256x128xf32, #tpu.memory_space<vmem>>, vector<16x128xf32>
    %267 = arith.truncf %235 : vector<16x32xf32> to vector<16x32xbf16>
    %cst_80 = arith.constant dense<0.000000e+00> : vector<16x128xf32>
    %268 = tpu.matmul %267, %9, %cst_80 {dimension_numbers = #tpu.dot_dimension_numbers<[1], [0], [0], [1], [0, 0, 1, 1], [], []>} : vector<16x32xbf16>, vector<32x128xbf16>, vector<16x128xf32> -> vector<16x128xf32>
    %269 = arith.addf %266, %268 : vector<16x128xf32>
    %270 = vector.extract_strided_slice %269 {offsets = [0, 0], sizes = [16, 96], strides = [1, 1]} : vector<16x128xf32> to vector<16x96xf32>
    %271 = arith.negf %270 : vector<16x96xf32>
    %272 = math.exp %271 : vector<16x96xf32>
    %cst_81 = arith.constant 1.000000e+00 : f32
    %273 = vector.broadcast %cst_81 : f32 to vector<16x96xf32>
    %274 = arith.addf %273, %272 : vector<16x96xf32>
    %275 = arith.divf %273, %274 : vector<16x96xf32>
    %276 = vector.extract_strided_slice %269 {offsets = [0, 96], sizes = [16, 32], strides = [1, 1]} : vector<16x128xf32> to vector<16x32xf32>
    %277 = math.tanh %276 : vector<16x32xf32>
    %278 = vector.extract_strided_slice %275 {offsets = [0, 32], sizes = [16, 32], strides = [1, 1]} : vector<16x96xf32> to vector<16x32xf32>
    %279 = arith.mulf %278, %232 : vector<16x32xf32>
    %280 = vector.extract_strided_slice %275 {offsets = [0, 0], sizes = [16, 32], strides = [1, 1]} : vector<16x96xf32> to vector<16x32xf32>
    %281 = arith.mulf %280, %277 : vector<16x32xf32>
    %282 = arith.addf %279, %281 : vector<16x32xf32>
    %283 = vector.extract_strided_slice %275 {offsets = [0, 64], sizes = [16, 32], strides = [1, 1]} : vector<16x96xf32> to vector<16x32xf32>
    %284 = math.tanh %282 : vector<16x32xf32>
    %285 = arith.mulf %283, %284 : vector<16x32xf32>
    %286 = arith.truncf %285 : vector<16x32xf32> to vector<16x32xbf16>
    %cst_82 = arith.constant dense<0.000000e+00> : vector<16x128xf32>
    %287 = tpu.matmul %286, %10, %cst_82 {dimension_numbers = #tpu.dot_dimension_numbers<[1], [0], [0], [1], [0, 0, 1, 1], [], []>} : vector<16x32xbf16>, vector<32x128xbf16>, vector<16x128xf32> -> vector<16x128xf32>
    %288 = vector.broadcast %11 : vector<1x128xf32> to vector<16x128xf32>
    %289 = arith.addf %287, %288 : vector<16x128xf32>
    %c160_83 = arith.constant 160 : index
    %c0_84 = arith.constant 0 : index
    %290 = vector.load %arg18[%c160_83, %c0_84] : memref<256x128xf32, #tpu.memory_space<vmem>>, vector<16x128xf32>
    tpu.vector_store %arg18[%c160_83, %c0_84], %289 {strides = array<i32>} : memref<256x128xf32, #tpu.memory_space<vmem>>, vector<16x128xf32>,
    %c176 = arith.constant 176 : index
    %c0_85 = arith.constant 0 : index
    %291 = vector.load %arg17[%c176, %c0_85] : memref<256x128xf32, #tpu.memory_space<vmem>>, vector<16x128xf32>
    %292 = arith.truncf %260 : vector<16x32xf32> to vector<16x32xbf16>
    %cst_86 = arith.constant dense<0.000000e+00> : vector<16x128xf32>
    %293 = tpu.matmul %292, %9, %cst_86 {dimension_numbers = #tpu.dot_dimension_numbers<[1], [0], [0], [1], [0, 0, 1, 1], [], []>} : vector<16x32xbf16>, vector<32x128xbf16>, vector<16x128xf32> -> vector<16x128xf32>
    %294 = arith.addf %291, %293 : vector<16x128xf32>
    %295 = vector.extract_strided_slice %294 {offsets = [0, 0], sizes = [16, 96], strides = [1, 1]} : vector<16x128xf32> to vector<16x96xf32>
    %296 = arith.negf %295 : vector<16x96xf32>
    %297 = math.exp %296 : vector<16x96xf32>
    %cst_87 = arith.constant 1.000000e+00 : f32
    %298 = vector.broadcast %cst_87 : f32 to vector<16x96xf32>
    %299 = arith.addf %298, %297 : vector<16x96xf32>
    %300 = arith.divf %298, %299 : vector<16x96xf32>
    %301 = vector.extract_strided_slice %294 {offsets = [0, 96], sizes = [16, 32], strides = [1, 1]} : vector<16x128xf32> to vector<16x32xf32>
    %302 = math.tanh %301 : vector<16x32xf32>
    %303 = vector.extract_strided_slice %300 {offsets = [0, 32], sizes = [16, 32], strides = [1, 1]} : vector<16x96xf32> to vector<16x32xf32>
    %304 = arith.mulf %303, %257 : vector<16x32xf32>
    %305 = vector.extract_strided_slice %300 {offsets = [0, 0], sizes = [16, 32], strides = [1, 1]} : vector<16x96xf32> to vector<16x32xf32>
    %306 = arith.mulf %305, %302 : vector<16x32xf32>
    %307 = arith.addf %304, %306 : vector<16x32xf32>
    %308 = vector.extract_strided_slice %300 {offsets = [0, 64], sizes = [16, 32], strides = [1, 1]} : vector<16x96xf32> to vector<16x32xf32>
    %309 = math.tanh %307 : vector<16x32xf32>
    %310 = arith.mulf %308, %309 : vector<16x32xf32>
    %311 = arith.truncf %310 : vector<16x32xf32> to vector<16x32xbf16>
    %cst_88 = arith.constant dense<0.000000e+00> : vector<16x128xf32>
    %312 = tpu.matmul %311, %10, %cst_88 {dimension_numbers = #tpu.dot_dimension_numbers<[1], [0], [0], [1], [0, 0, 1, 1], [], []>} : vector<16x32xbf16>, vector<32x128xbf16>, vector<16x128xf32> -> vector<16x128xf32>
    %313 = vector.broadcast %11 : vector<1x128xf32> to vector<16x128xf32>
    %314 = arith.addf %312, %313 : vector<16x128xf32>
    %c176_89 = arith.constant 176 : index
    %c0_90 = arith.constant 0 : index
    %315 = vector.load %arg18[%c176_89, %c0_90] : memref<256x128xf32, #tpu.memory_space<vmem>>, vector<16x128xf32>
    tpu.vector_store %arg18[%c176_89, %c0_90], %314 {strides = array<i32>} : memref<256x128xf32, #tpu.memory_space<vmem>>, vector<16x128xf32>,
    %c192 = arith.constant 192 : index
    %c0_91 = arith.constant 0 : index
    %316 = vector.load %arg17[%c192, %c0_91] : memref<256x128xf32, #tpu.memory_space<vmem>>, vector<16x128xf32>
    %317 = arith.truncf %285 : vector<16x32xf32> to vector<16x32xbf16>
    %cst_92 = arith.constant dense<0.000000e+00> : vector<16x128xf32>
    %318 = tpu.matmul %317, %9, %cst_92 {dimension_numbers = #tpu.dot_dimension_numbers<[1], [0], [0], [1], [0, 0, 1, 1], [], []>} : vector<16x32xbf16>, vector<32x128xbf16>, vector<16x128xf32> -> vector<16x128xf32>
    %319 = arith.addf %316, %318 : vector<16x128xf32>
    %320 = vector.extract_strided_slice %319 {offsets = [0, 0], sizes = [16, 96], strides = [1, 1]} : vector<16x128xf32> to vector<16x96xf32>
    %321 = arith.negf %320 : vector<16x96xf32>
    %322 = math.exp %321 : vector<16x96xf32>
    %cst_93 = arith.constant 1.000000e+00 : f32
    %323 = vector.broadcast %cst_93 : f32 to vector<16x96xf32>
    %324 = arith.addf %323, %322 : vector<16x96xf32>
    %325 = arith.divf %323, %324 : vector<16x96xf32>
    %326 = vector.extract_strided_slice %319 {offsets = [0, 96], sizes = [16, 32], strides = [1, 1]} : vector<16x128xf32> to vector<16x32xf32>
    %327 = math.tanh %326 : vector<16x32xf32>
    %328 = vector.extract_strided_slice %325 {offsets = [0, 32], sizes = [16, 32], strides = [1, 1]} : vector<16x96xf32> to vector<16x32xf32>
    %329 = arith.mulf %328, %282 : vector<16x32xf32>
    %330 = vector.extract_strided_slice %325 {offsets = [0, 0], sizes = [16, 32], strides = [1, 1]} : vector<16x96xf32> to vector<16x32xf32>
    %331 = arith.mulf %330, %327 : vector<16x32xf32>
    %332 = arith.addf %329, %331 : vector<16x32xf32>
    %333 = vector.extract_strided_slice %325 {offsets = [0, 64], sizes = [16, 32], strides = [1, 1]} : vector<16x96xf32> to vector<16x32xf32>
    %334 = math.tanh %332 : vector<16x32xf32>
    %335 = arith.mulf %333, %334 : vector<16x32xf32>
    %336 = arith.truncf %335 : vector<16x32xf32> to vector<16x32xbf16>
    %cst_94 = arith.constant dense<0.000000e+00> : vector<16x128xf32>
    %337 = tpu.matmul %336, %10, %cst_94 {dimension_numbers = #tpu.dot_dimension_numbers<[1], [0], [0], [1], [0, 0, 1, 1], [], []>} : vector<16x32xbf16>, vector<32x128xbf16>, vector<16x128xf32> -> vector<16x128xf32>
    %338 = vector.broadcast %11 : vector<1x128xf32> to vector<16x128xf32>
    %339 = arith.addf %337, %338 : vector<16x128xf32>
    %c192_95 = arith.constant 192 : index
    %c0_96 = arith.constant 0 : index
    %340 = vector.load %arg18[%c192_95, %c0_96] : memref<256x128xf32, #tpu.memory_space<vmem>>, vector<16x128xf32>
    tpu.vector_store %arg18[%c192_95, %c0_96], %339 {strides = array<i32>} : memref<256x128xf32, #tpu.memory_space<vmem>>, vector<16x128xf32>,
    %c208 = arith.constant 208 : index
    %c0_97 = arith.constant 0 : index
    %341 = vector.load %arg17[%c208, %c0_97] : memref<256x128xf32, #tpu.memory_space<vmem>>, vector<16x128xf32>
    %342 = arith.truncf %310 : vector<16x32xf32> to vector<16x32xbf16>
    %cst_98 = arith.constant dense<0.000000e+00> : vector<16x128xf32>
    %343 = tpu.matmul %342, %9, %cst_98 {dimension_numbers = #tpu.dot_dimension_numbers<[1], [0], [0], [1], [0, 0, 1, 1], [], []>} : vector<16x32xbf16>, vector<32x128xbf16>, vector<16x128xf32> -> vector<16x128xf32>
    %344 = arith.addf %341, %343 : vector<16x128xf32>
    %345 = vector.extract_strided_slice %344 {offsets = [0, 0], sizes = [16, 96], strides = [1, 1]} : vector<16x128xf32> to vector<16x96xf32>
    %346 = arith.negf %345 : vector<16x96xf32>
    %347 = math.exp %346 : vector<16x96xf32>
    %cst_99 = arith.constant 1.000000e+00 : f32
    %348 = vector.broadcast %cst_99 : f32 to vector<16x96xf32>
    %349 = arith.addf %348, %347 : vector<16x96xf32>
    %350 = arith.divf %348, %349 : vector<16x96xf32>
    %351 = vector.extract_strided_slice %344 {offsets = [0, 96], sizes = [16, 32], strides = [1, 1]} : vector<16x128xf32> to vector<16x32xf32>
    %352 = math.tanh %351 : vector<16x32xf32>
    %353 = vector.extract_strided_slice %350 {offsets = [0, 32], sizes = [16, 32], strides = [1, 1]} : vector<16x96xf32> to vector<16x32xf32>
    %354 = arith.mulf %353, %307 : vector<16x32xf32>
    %355 = vector.extract_strided_slice %350 {offsets = [0, 0], sizes = [16, 32], strides = [1, 1]} : vector<16x96xf32> to vector<16x32xf32>
    %356 = arith.mulf %355, %352 : vector<16x32xf32>
    %357 = arith.addf %354, %356 : vector<16x32xf32>
    %358 = vector.extract_strided_slice %350 {offsets = [0, 64], sizes = [16, 32], strides = [1, 1]} : vector<16x96xf32> to vector<16x32xf32>
    %359 = math.tanh %357 : vector<16x32xf32>
    %360 = arith.mulf %358, %359 : vector<16x32xf32>
    %361 = arith.truncf %360 : vector<16x32xf32> to vector<16x32xbf16>
    %cst_100 = arith.constant dense<0.000000e+00> : vector<16x128xf32>
    %362 = tpu.matmul %361, %10, %cst_100 {dimension_numbers = #tpu.dot_dimension_numbers<[1], [0], [0], [1], [0, 0, 1, 1], [], []>} : vector<16x32xbf16>, vector<32x128xbf16>, vector<16x128xf32> -> vector<16x128xf32>
    %363 = vector.broadcast %11 : vector<1x128xf32> to vector<16x128xf32>
    %364 = arith.addf %362, %363 : vector<16x128xf32>
    %c208_101 = arith.constant 208 : index
    %c0_102 = arith.constant 0 : index
    %365 = vector.load %arg18[%c208_101, %c0_102] : memref<256x128xf32, #tpu.memory_space<vmem>>, vector<16x128xf32>
    tpu.vector_store %arg18[%c208_101, %c0_102], %364 {strides = array<i32>} : memref<256x128xf32, #tpu.memory_space<vmem>>, vector<16x128xf32>,
    %c224 = arith.constant 224 : index
    %c0_103 = arith.constant 0 : index
    %366 = vector.load %arg17[%c224, %c0_103] : memref<256x128xf32, #tpu.memory_space<vmem>>, vector<16x128xf32>
    %367 = arith.truncf %335 : vector<16x32xf32> to vector<16x32xbf16>
    %cst_104 = arith.constant dense<0.000000e+00> : vector<16x128xf32>
    %368 = tpu.matmul %367, %9, %cst_104 {dimension_numbers = #tpu.dot_dimension_numbers<[1], [0], [0], [1], [0, 0, 1, 1], [], []>} : vector<16x32xbf16>, vector<32x128xbf16>, vector<16x128xf32> -> vector<16x128xf32>
    %369 = arith.addf %366, %368 : vector<16x128xf32>
    %370 = vector.extract_strided_slice %369 {offsets = [0, 0], sizes = [16, 96], strides = [1, 1]} : vector<16x128xf32> to vector<16x96xf32>
    %371 = arith.negf %370 : vector<16x96xf32>
    %372 = math.exp %371 : vector<16x96xf32>
    %cst_105 = arith.constant 1.000000e+00 : f32
    %373 = vector.broadcast %cst_105 : f32 to vector<16x96xf32>
    %374 = arith.addf %373, %372 : vector<16x96xf32>
    %375 = arith.divf %373, %374 : vector<16x96xf32>
    %376 = vector.extract_strided_slice %369 {offsets = [0, 96], sizes = [16, 32], strides = [1, 1]} : vector<16x128xf32> to vector<16x32xf32>
    %377 = math.tanh %376 : vector<16x32xf32>
    %378 = vector.extract_strided_slice %375 {offsets = [0, 32], sizes = [16, 32], strides = [1, 1]} : vector<16x96xf32> to vector<16x32xf32>
    %379 = arith.mulf %378, %332 : vector<16x32xf32>
    %380 = vector.extract_strided_slice %375 {offsets = [0, 0], sizes = [16, 32], strides = [1, 1]} : vector<16x96xf32> to vector<16x32xf32>
    %381 = arith.mulf %380, %377 : vector<16x32xf32>
    %382 = arith.addf %379, %381 : vector<16x32xf32>
    %383 = vector.extract_strided_slice %375 {offsets = [0, 64], sizes = [16, 32], strides = [1, 1]} : vector<16x96xf32> to vector<16x32xf32>
    %384 = math.tanh %382 : vector<16x32xf32>
    %385 = arith.mulf %383, %384 : vector<16x32xf32>
    %386 = arith.truncf %385 : vector<16x32xf32> to vector<16x32xbf16>
    %cst_106 = arith.constant dense<0.000000e+00> : vector<16x128xf32>
    %387 = tpu.matmul %386, %10, %cst_106 {dimension_numbers = #tpu.dot_dimension_numbers<[1], [0], [0], [1], [0, 0, 1, 1], [], []>} : vector<16x32xbf16>, vector<32x128xbf16>, vector<16x128xf32> -> vector<16x128xf32>
    %388 = vector.broadcast %11 : vector<1x128xf32> to vector<16x128xf32>
    %389 = arith.addf %387, %388 : vector<16x128xf32>
    %c224_107 = arith.constant 224 : index
    %c0_108 = arith.constant 0 : index
    %390 = vector.load %arg18[%c224_107, %c0_108] : memref<256x128xf32, #tpu.memory_space<vmem>>, vector<16x128xf32>
    tpu.vector_store %arg18[%c224_107, %c0_108], %389 {strides = array<i32>} : memref<256x128xf32, #tpu.memory_space<vmem>>, vector<16x128xf32>,
    %c240 = arith.constant 240 : index
    %c0_109 = arith.constant 0 : index
    %391 = vector.load %arg17[%c240, %c0_109] : memref<256x128xf32, #tpu.memory_space<vmem>>, vector<16x128xf32>
    %392 = arith.truncf %360 : vector<16x32xf32> to vector<16x32xbf16>
    %cst_110 = arith.constant dense<0.000000e+00> : vector<16x128xf32>
    %393 = tpu.matmul %392, %9, %cst_110 {dimension_numbers = #tpu.dot_dimension_numbers<[1], [0], [0], [1], [0, 0, 1, 1], [], []>} : vector<16x32xbf16>, vector<32x128xbf16>, vector<16x128xf32> -> vector<16x128xf32>
    %394 = arith.addf %391, %393 : vector<16x128xf32>
    %395 = vector.extract_strided_slice %394 {offsets = [0, 0], sizes = [16, 96], strides = [1, 1]} : vector<16x128xf32> to vector<16x96xf32>
    %396 = arith.negf %395 : vector<16x96xf32>
    %397 = math.exp %396 : vector<16x96xf32>
    %cst_111 = arith.constant 1.000000e+00 : f32
    %398 = vector.broadcast %cst_111 : f32 to vector<16x96xf32>
    %399 = arith.addf %398, %397 : vector<16x96xf32>
    %400 = arith.divf %398, %399 : vector<16x96xf32>
    %401 = vector.extract_strided_slice %394 {offsets = [0, 96], sizes = [16, 32], strides = [1, 1]} : vector<16x128xf32> to vector<16x32xf32>
    %402 = math.tanh %401 : vector<16x32xf32>
    %403 = vector.extract_strided_slice %400 {offsets = [0, 32], sizes = [16, 32], strides = [1, 1]} : vector<16x96xf32> to vector<16x32xf32>
    %404 = arith.mulf %403, %357 : vector<16x32xf32>
    %405 = vector.extract_strided_slice %400 {offsets = [0, 0], sizes = [16, 32], strides = [1, 1]} : vector<16x96xf32> to vector<16x32xf32>
    %406 = arith.mulf %405, %402 : vector<16x32xf32>
    %407 = arith.addf %404, %406 : vector<16x32xf32>
    %408 = vector.extract_strided_slice %400 {offsets = [0, 64], sizes = [16, 32], strides = [1, 1]} : vector<16x96xf32> to vector<16x32xf32>
    %409 = math.tanh %407 : vector<16x32xf32>
    %410 = arith.mulf %408, %409 : vector<16x32xf32>
    %411 = arith.truncf %410 : vector<16x32xf32> to vector<16x32xbf16>
    %cst_112 = arith.constant dense<0.000000e+00> : vector<16x128xf32>
    %412 = tpu.matmul %411, %10, %cst_112 {dimension_numbers = #tpu.dot_dimension_numbers<[1], [0], [0], [1], [0, 0, 1, 1], [], []>} : vector<16x32xbf16>, vector<32x128xbf16>, vector<16x128xf32> -> vector<16x128xf32>
    %413 = vector.broadcast %11 : vector<1x128xf32> to vector<16x128xf32>
    %414 = arith.addf %412, %413 : vector<16x128xf32>
    %c240_113 = arith.constant 240 : index
    %c0_114 = arith.constant 0 : index
    %415 = vector.load %arg18[%c240_113, %c0_114] : memref<256x128xf32, #tpu.memory_space<vmem>>, vector<16x128xf32>
    tpu.vector_store %arg18[%c240_113, %c0_114], %414 {strides = array<i32>} : memref<256x128xf32, #tpu.memory_space<vmem>>, vector<16x128xf32>,
    %416 = tpu.concatenate %385, %410 in 0 : vector<16x32xf32>, vector<16x32xf32> -> vector<32x32xf32>
    %417 = tpu.concatenate %382, %407 in 0 : vector<16x32xf32>, vector<16x32xf32> -> vector<32x32xf32>
    %c0_115 = arith.constant 0 : index
    %c0_116 = arith.constant 0 : index
    %418 = vector.load %arg6[%c0_115, %c0_116] : memref<32x128xbf16, #tpu.memory_space<vmem>>, vector<32x128xbf16>
    %cst_117 = arith.constant 0.000000e+00 : f32
    %419 = vector.broadcast %cst_117 : f32 to vector<16x32xf32>
    %cst_118 = arith.constant 0.000000e+00 : f32
    %420 = vector.broadcast %cst_118 : f32 to vector<16x32xf32>
    %cst_119 = arith.constant 0.000000e+00 : f32
    %421 = vector.broadcast %cst_119 : f32 to vector<16x32xf32>
    %cst_120 = arith.constant 0.000000e+00 : f32
    %422 = vector.broadcast %cst_120 : f32 to vector<16x32xf32>
    %c0_121 = arith.constant 0 : index
    %c0_122 = arith.constant 0 : index
    %423 = vector.load %arg18[%c0_121, %c0_122] : memref<256x128xf32, #tpu.memory_space<vmem>>, vector<16x128xf32>
    %424 = arith.truncf %419 : vector<16x32xf32> to vector<16x32xbf16>
    %cst_123 = arith.constant dense<0.000000e+00> : vector<16x128xf32>
    %425 = tpu.matmul %424, %418, %cst_123 {dimension_numbers = #tpu.dot_dimension_numbers<[1], [0], [0], [1], [0, 0, 1, 1], [], []>} : vector<16x32xbf16>, vector<32x128xbf16>, vector<16x128xf32> -> vector<16x128xf32>
    %426 = arith.addf %423, %425 : vector<16x128xf32>
    %427 = vector.extract_strided_slice %426 {offsets = [0, 0], sizes = [16, 96], strides = [1, 1]} : vector<16x128xf32> to vector<16x96xf32>
    %428 = arith.negf %427 : vector<16x96xf32>
    %429 = math.exp %428 : vector<16x96xf32>
    %cst_124 = arith.constant 1.000000e+00 : f32
    %430 = vector.broadcast %cst_124 : f32 to vector<16x96xf32>
    %431 = arith.addf %430, %429 : vector<16x96xf32>
    %432 = arith.divf %430, %431 : vector<16x96xf32>
    %433 = vector.extract_strided_slice %426 {offsets = [0, 96], sizes = [16, 32], strides = [1, 1]} : vector<16x128xf32> to vector<16x32xf32>
    %434 = math.tanh %433 : vector<16x32xf32>
    %435 = vector.extract_strided_slice %432 {offsets = [0, 32], sizes = [16, 32], strides = [1, 1]} : vector<16x96xf32> to vector<16x32xf32>
    %436 = arith.mulf %435, %421 : vector<16x32xf32>
    %437 = vector.extract_strided_slice %432 {offsets = [0, 0], sizes = [16, 32], strides = [1, 1]} : vector<16x96xf32> to vector<16x32xf32>
    %438 = arith.mulf %437, %434 : vector<16x32xf32>
    %439 = arith.addf %436, %438 : vector<16x32xf32>
    %440 = vector.extract_strided_slice %432 {offsets = [0, 64], sizes = [16, 32], strides = [1, 1]} : vector<16x96xf32> to vector<16x32xf32>
    %441 = math.tanh %439 : vector<16x32xf32>
    %442 = arith.mulf %440, %441 : vector<16x32xf32>
    %c16_125 = arith.constant 16 : index
    %c0_126 = arith.constant 0 : index
    %443 = vector.load %arg18[%c16_125, %c0_126] : memref<256x128xf32, #tpu.memory_space<vmem>>, vector<16x128xf32>
    %444 = arith.truncf %420 : vector<16x32xf32> to vector<16x32xbf16>
    %cst_127 = arith.constant dense<0.000000e+00> : vector<16x128xf32>
    %445 = tpu.matmul %444, %418, %cst_127 {dimension_numbers = #tpu.dot_dimension_numbers<[1], [0], [0], [1], [0, 0, 1, 1], [], []>} : vector<16x32xbf16>, vector<32x128xbf16>, vector<16x128xf32> -> vector<16x128xf32>
    %446 = arith.addf %443, %445 : vector<16x128xf32>
    %447 = vector.extract_strided_slice %446 {offsets = [0, 0], sizes = [16, 96], strides = [1, 1]} : vector<16x128xf32> to vector<16x96xf32>
    %448 = arith.negf %447 : vector<16x96xf32>
    %449 = math.exp %448 : vector<16x96xf32>
    %cst_128 = arith.constant 1.000000e+00 : f32
    %450 = vector.broadcast %cst_128 : f32 to vector<16x96xf32>
    %451 = arith.addf %450, %449 : vector<16x96xf32>
    %452 = arith.divf %450, %451 : vector<16x96xf32>
    %453 = vector.extract_strided_slice %446 {offsets = [0, 96], sizes = [16, 32], strides = [1, 1]} : vector<16x128xf32> to vector<16x32xf32>
    %454 = math.tanh %453 : vector<16x32xf32>
    %455 = vector.extract_strided_slice %452 {offsets = [0, 32], sizes = [16, 32], strides = [1, 1]} : vector<16x96xf32> to vector<16x32xf32>
    %456 = arith.mulf %455, %422 : vector<16x32xf32>
    %457 = vector.extract_strided_slice %452 {offsets = [0, 0], sizes = [16, 32], strides = [1, 1]} : vector<16x96xf32> to vector<16x32xf32>
    %458 = arith.mulf %457, %454 : vector<16x32xf32>
    %459 = arith.addf %456, %458 : vector<16x32xf32>
    %460 = vector.extract_strided_slice %452 {offsets = [0, 64], sizes = [16, 32], strides = [1, 1]} : vector<16x96xf32> to vector<16x32xf32>
    %461 = math.tanh %459 : vector<16x32xf32>
    %462 = arith.mulf %460, %461 : vector<16x32xf32>
    %c32_129 = arith.constant 32 : index
    %c0_130 = arith.constant 0 : index
    %463 = vector.load %arg18[%c32_129, %c0_130] : memref<256x128xf32, #tpu.memory_space<vmem>>, vector<16x128xf32>
    %464 = arith.truncf %442 : vector<16x32xf32> to vector<16x32xbf16>
    %cst_131 = arith.constant dense<0.000000e+00> : vector<16x128xf32>
    %465 = tpu.matmul %464, %418, %cst_131 {dimension_numbers = #tpu.dot_dimension_numbers<[1], [0], [0], [1], [0, 0, 1, 1], [], []>} : vector<16x32xbf16>, vector<32x128xbf16>, vector<16x128xf32> -> vector<16x128xf32>
    %466 = arith.addf %463, %465 : vector<16x128xf32>
    %467 = vector.extract_strided_slice %466 {offsets = [0, 0], sizes = [16, 96], strides = [1, 1]} : vector<16x128xf32> to vector<16x96xf32>
    %468 = arith.negf %467 : vector<16x96xf32>
    %469 = math.exp %468 : vector<16x96xf32>
    %cst_132 = arith.constant 1.000000e+00 : f32
    %470 = vector.broadcast %cst_132 : f32 to vector<16x96xf32>
    %471 = arith.addf %470, %469 : vector<16x96xf32>
    %472 = arith.divf %470, %471 : vector<16x96xf32>
    %473 = vector.extract_strided_slice %466 {offsets = [0, 96], sizes = [16, 32], strides = [1, 1]} : vector<16x128xf32> to vector<16x32xf32>
    %474 = math.tanh %473 : vector<16x32xf32>
    %475 = vector.extract_strided_slice %472 {offsets = [0, 32], sizes = [16, 32], strides = [1, 1]} : vector<16x96xf32> to vector<16x32xf32>
    %476 = arith.mulf %475, %439 : vector<16x32xf32>
    %477 = vector.extract_strided_slice %472 {offsets = [0, 0], sizes = [16, 32], strides = [1, 1]} : vector<16x96xf32> to vector<16x32xf32>
    %478 = arith.mulf %477, %474 : vector<16x32xf32>
    %479 = arith.addf %476, %478 : vector<16x32xf32>
    %480 = vector.extract_strided_slice %472 {offsets = [0, 64], sizes = [16, 32], strides = [1, 1]} : vector<16x96xf32> to vector<16x32xf32>
    %481 = math.tanh %479 : vector<16x32xf32>
    %482 = arith.mulf %480, %481 : vector<16x32xf32>
    %c48_133 = arith.constant 48 : index
    %c0_134 = arith.constant 0 : index
    %483 = vector.load %arg18[%c48_133, %c0_134] : memref<256x128xf32, #tpu.memory_space<vmem>>, vector<16x128xf32>
    %484 = arith.truncf %462 : vector<16x32xf32> to vector<16x32xbf16>
    %cst_135 = arith.constant dense<0.000000e+00> : vector<16x128xf32>
    %485 = tpu.matmul %484, %418, %cst_135 {dimension_numbers = #tpu.dot_dimension_numbers<[1], [0], [0], [1], [0, 0, 1, 1], [], []>} : vector<16x32xbf16>, vector<32x128xbf16>, vector<16x128xf32> -> vector<16x128xf32>
    %486 = arith.addf %483, %485 : vector<16x128xf32>
    %487 = vector.extract_strided_slice %486 {offsets = [0, 0], sizes = [16, 96], strides = [1, 1]} : vector<16x128xf32> to vector<16x96xf32>
    %488 = arith.negf %487 : vector<16x96xf32>
    %489 = math.exp %488 : vector<16x96xf32>
    %cst_136 = arith.constant 1.000000e+00 : f32
    %490 = vector.broadcast %cst_136 : f32 to vector<16x96xf32>
    %491 = arith.addf %490, %489 : vector<16x96xf32>
    %492 = arith.divf %490, %491 : vector<16x96xf32>
    %493 = vector.extract_strided_slice %486 {offsets = [0, 96], sizes = [16, 32], strides = [1, 1]} : vector<16x128xf32> to vector<16x32xf32>
    %494 = math.tanh %493 : vector<16x32xf32>
    %495 = vector.extract_strided_slice %492 {offsets = [0, 32], sizes = [16, 32], strides = [1, 1]} : vector<16x96xf32> to vector<16x32xf32>
    %496 = arith.mulf %495, %459 : vector<16x32xf32>
    %497 = vector.extract_strided_slice %492 {offsets = [0, 0], sizes = [16, 32], strides = [1, 1]} : vector<16x96xf32> to vector<16x32xf32>
    %498 = arith.mulf %497, %494 : vector<16x32xf32>
    %499 = arith.addf %496, %498 : vector<16x32xf32>
    %500 = vector.extract_strided_slice %492 {offsets = [0, 64], sizes = [16, 32], strides = [1, 1]} : vector<16x96xf32> to vector<16x32xf32>
    %501 = math.tanh %499 : vector<16x32xf32>
    %502 = arith.mulf %500, %501 : vector<16x32xf32>
    %c64_137 = arith.constant 64 : index
    %c0_138 = arith.constant 0 : index
    %503 = vector.load %arg18[%c64_137, %c0_138] : memref<256x128xf32, #tpu.memory_space<vmem>>, vector<16x128xf32>
    %504 = arith.truncf %482 : vector<16x32xf32> to vector<16x32xbf16>
    %cst_139 = arith.constant dense<0.000000e+00> : vector<16x128xf32>
    %505 = tpu.matmul %504, %418, %cst_139 {dimension_numbers = #tpu.dot_dimension_numbers<[1], [0], [0], [1], [0, 0, 1, 1], [], []>} : vector<16x32xbf16>, vector<32x128xbf16>, vector<16x128xf32> -> vector<16x128xf32>
    %506 = arith.addf %503, %505 : vector<16x128xf32>
    %507 = vector.extract_strided_slice %506 {offsets = [0, 0], sizes = [16, 96], strides = [1, 1]} : vector<16x128xf32> to vector<16x96xf32>
    %508 = arith.negf %507 : vector<16x96xf32>
    %509 = math.exp %508 : vector<16x96xf32>
    %cst_140 = arith.constant 1.000000e+00 : f32
    %510 = vector.broadcast %cst_140 : f32 to vector<16x96xf32>
    %511 = arith.addf %510, %509 : vector<16x96xf32>
    %512 = arith.divf %510, %511 : vector<16x96xf32>
    %513 = vector.extract_strided_slice %506 {offsets = [0, 96], sizes = [16, 32], strides = [1, 1]} : vector<16x128xf32> to vector<16x32xf32>
    %514 = math.tanh %513 : vector<16x32xf32>
    %515 = vector.extract_strided_slice %512 {offsets = [0, 32], sizes = [16, 32], strides = [1, 1]} : vector<16x96xf32> to vector<16x32xf32>
    %516 = arith.mulf %515, %479 : vector<16x32xf32>
    %517 = vector.extract_strided_slice %512 {offsets = [0, 0], sizes = [16, 32], strides = [1, 1]} : vector<16x96xf32> to vector<16x32xf32>
    %518 = arith.mulf %517, %514 : vector<16x32xf32>
    %519 = arith.addf %516, %518 : vector<16x32xf32>
    %520 = vector.extract_strided_slice %512 {offsets = [0, 64], sizes = [16, 32], strides = [1, 1]} : vector<16x96xf32> to vector<16x32xf32>
    %521 = math.tanh %519 : vector<16x32xf32>
    %522 = arith.mulf %520, %521 : vector<16x32xf32>
    %c80_141 = arith.constant 80 : index
    %c0_142 = arith.constant 0 : index
    %523 = vector.load %arg18[%c80_141, %c0_142] : memref<256x128xf32, #tpu.memory_space<vmem>>, vector<16x128xf32>
    %524 = arith.truncf %502 : vector<16x32xf32> to vector<16x32xbf16>
    %cst_143 = arith.constant dense<0.000000e+00> : vector<16x128xf32>
    %525 = tpu.matmul %524, %418, %cst_143 {dimension_numbers = #tpu.dot_dimension_numbers<[1], [0], [0], [1], [0, 0, 1, 1], [], []>} : vector<16x32xbf16>, vector<32x128xbf16>, vector<16x128xf32> -> vector<16x128xf32>
    %526 = arith.addf %523, %525 : vector<16x128xf32>
    %527 = vector.extract_strided_slice %526 {offsets = [0, 0], sizes = [16, 96], strides = [1, 1]} : vector<16x128xf32> to vector<16x96xf32>
    %528 = arith.negf %527 : vector<16x96xf32>
    %529 = math.exp %528 : vector<16x96xf32>
    %cst_144 = arith.constant 1.000000e+00 : f32
    %530 = vector.broadcast %cst_144 : f32 to vector<16x96xf32>
    %531 = arith.addf %530, %529 : vector<16x96xf32>
    %532 = arith.divf %530, %531 : vector<16x96xf32>
    %533 = vector.extract_strided_slice %526 {offsets = [0, 96], sizes = [16, 32], strides = [1, 1]} : vector<16x128xf32> to vector<16x32xf32>
    %534 = math.tanh %533 : vector<16x32xf32>
    %535 = vector.extract_strided_slice %532 {offsets = [0, 32], sizes = [16, 32], strides = [1, 1]} : vector<16x96xf32> to vector<16x32xf32>
    %536 = arith.mulf %535, %499 : vector<16x32xf32>
    %537 = vector.extract_strided_slice %532 {offsets = [0, 0], sizes = [16, 32], strides = [1, 1]} : vector<16x96xf32> to vector<16x32xf32>
    %538 = arith.mulf %537, %534 : vector<16x32xf32>
    %539 = arith.addf %536, %538 : vector<16x32xf32>
    %540 = vector.extract_strided_slice %532 {offsets = [0, 64], sizes = [16, 32], strides = [1, 1]} : vector<16x96xf32> to vector<16x32xf32>
    %541 = math.tanh %539 : vector<16x32xf32>
    %542 = arith.mulf %540, %541 : vector<16x32xf32>
    %c96_145 = arith.constant 96 : index
    %c0_146 = arith.constant 0 : index
    %543 = vector.load %arg18[%c96_145, %c0_146] : memref<256x128xf32, #tpu.memory_space<vmem>>, vector<16x128xf32>
    %544 = arith.truncf %522 : vector<16x32xf32> to vector<16x32xbf16>
    %cst_147 = arith.constant dense<0.000000e+00> : vector<16x128xf32>
    %545 = tpu.matmul %544, %418, %cst_147 {dimension_numbers = #tpu.dot_dimension_numbers<[1], [0], [0], [1], [0, 0, 1, 1], [], []>} : vector<16x32xbf16>, vector<32x128xbf16>, vector<16x128xf32> -> vector<16x128xf32>
    %546 = arith.addf %543, %545 : vector<16x128xf32>
    %547 = vector.extract_strided_slice %546 {offsets = [0, 0], sizes = [16, 96], strides = [1, 1]} : vector<16x128xf32> to vector<16x96xf32>
    %548 = arith.negf %547 : vector<16x96xf32>
    %549 = math.exp %548 : vector<16x96xf32>
    %cst_148 = arith.constant 1.000000e+00 : f32
    %550 = vector.broadcast %cst_148 : f32 to vector<16x96xf32>
    %551 = arith.addf %550, %549 : vector<16x96xf32>
    %552 = arith.divf %550, %551 : vector<16x96xf32>
    %553 = vector.extract_strided_slice %546 {offsets = [0, 96], sizes = [16, 32], strides = [1, 1]} : vector<16x128xf32> to vector<16x32xf32>
    %554 = math.tanh %553 : vector<16x32xf32>
    %555 = vector.extract_strided_slice %552 {offsets = [0, 32], sizes = [16, 32], strides = [1, 1]} : vector<16x96xf32> to vector<16x32xf32>
    %556 = arith.mulf %555, %519 : vector<16x32xf32>
    %557 = vector.extract_strided_slice %552 {offsets = [0, 0], sizes = [16, 32], strides = [1, 1]} : vector<16x96xf32> to vector<16x32xf32>
    %558 = arith.mulf %557, %554 : vector<16x32xf32>
    %559 = arith.addf %556, %558 : vector<16x32xf32>
    %560 = vector.extract_strided_slice %552 {offsets = [0, 64], sizes = [16, 32], strides = [1, 1]} : vector<16x96xf32> to vector<16x32xf32>
    %561 = math.tanh %559 : vector<16x32xf32>
    %562 = arith.mulf %560, %561 : vector<16x32xf32>
    %c112_149 = arith.constant 112 : index
    %c0_150 = arith.constant 0 : index
    %563 = vector.load %arg18[%c112_149, %c0_150] : memref<256x128xf32, #tpu.memory_space<vmem>>, vector<16x128xf32>
    %564 = arith.truncf %542 : vector<16x32xf32> to vector<16x32xbf16>
    %cst_151 = arith.constant dense<0.000000e+00> : vector<16x128xf32>
    %565 = tpu.matmul %564, %418, %cst_151 {dimension_numbers = #tpu.dot_dimension_numbers<[1], [0], [0], [1], [0, 0, 1, 1], [], []>} : vector<16x32xbf16>, vector<32x128xbf16>, vector<16x128xf32> -> vector<16x128xf32>
    %566 = arith.addf %563, %565 : vector<16x128xf32>
    %567 = vector.extract_strided_slice %566 {offsets = [0, 0], sizes = [16, 96], strides = [1, 1]} : vector<16x128xf32> to vector<16x96xf32>
    %568 = arith.negf %567 : vector<16x96xf32>
    %569 = math.exp %568 : vector<16x96xf32>
    %cst_152 = arith.constant 1.000000e+00 : f32
    %570 = vector.broadcast %cst_152 : f32 to vector<16x96xf32>
    %571 = arith.addf %570, %569 : vector<16x96xf32>
    %572 = arith.divf %570, %571 : vector<16x96xf32>
    %573 = vector.extract_strided_slice %566 {offsets = [0, 96], sizes = [16, 32], strides = [1, 1]} : vector<16x128xf32> to vector<16x32xf32>
    %574 = math.tanh %573 : vector<16x32xf32>
    %575 = vector.extract_strided_slice %572 {offsets = [0, 32], sizes = [16, 32], strides = [1, 1]} : vector<16x96xf32> to vector<16x32xf32>
    %576 = arith.mulf %575, %539 : vector<16x32xf32>
    %577 = vector.extract_strided_slice %572 {offsets = [0, 0], sizes = [16, 32], strides = [1, 1]} : vector<16x96xf32> to vector<16x32xf32>
    %578 = arith.mulf %577, %574 : vector<16x32xf32>
    %579 = arith.addf %576, %578 : vector<16x32xf32>
    %580 = vector.extract_strided_slice %572 {offsets = [0, 64], sizes = [16, 32], strides = [1, 1]} : vector<16x96xf32> to vector<16x32xf32>
    %581 = math.tanh %579 : vector<16x32xf32>
    %582 = arith.mulf %580, %581 : vector<16x32xf32>
    %c128_153 = arith.constant 128 : index
    %c0_154 = arith.constant 0 : index
    %583 = vector.load %arg18[%c128_153, %c0_154] : memref<256x128xf32, #tpu.memory_space<vmem>>, vector<16x128xf32>
    %584 = arith.truncf %562 : vector<16x32xf32> to vector<16x32xbf16>
    %cst_155 = arith.constant dense<0.000000e+00> : vector<16x128xf32>
    %585 = tpu.matmul %584, %418, %cst_155 {dimension_numbers = #tpu.dot_dimension_numbers<[1], [0], [0], [1], [0, 0, 1, 1], [], []>} : vector<16x32xbf16>, vector<32x128xbf16>, vector<16x128xf32> -> vector<16x128xf32>
    %586 = arith.addf %583, %585 : vector<16x128xf32>
    %587 = vector.extract_strided_slice %586 {offsets = [0, 0], sizes = [16, 96], strides = [1, 1]} : vector<16x128xf32> to vector<16x96xf32>
    %588 = arith.negf %587 : vector<16x96xf32>
    %589 = math.exp %588 : vector<16x96xf32>
    %cst_156 = arith.constant 1.000000e+00 : f32
    %590 = vector.broadcast %cst_156 : f32 to vector<16x96xf32>
    %591 = arith.addf %590, %589 : vector<16x96xf32>
    %592 = arith.divf %590, %591 : vector<16x96xf32>
    %593 = vector.extract_strided_slice %586 {offsets = [0, 96], sizes = [16, 32], strides = [1, 1]} : vector<16x128xf32> to vector<16x32xf32>
    %594 = math.tanh %593 : vector<16x32xf32>
    %595 = vector.extract_strided_slice %592 {offsets = [0, 32], sizes = [16, 32], strides = [1, 1]} : vector<16x96xf32> to vector<16x32xf32>
    %596 = arith.mulf %595, %559 : vector<16x32xf32>
    %597 = vector.extract_strided_slice %592 {offsets = [0, 0], sizes = [16, 32], strides = [1, 1]} : vector<16x96xf32> to vector<16x32xf32>
    %598 = arith.mulf %597, %594 : vector<16x32xf32>
    %599 = arith.addf %596, %598 : vector<16x32xf32>
    %600 = vector.extract_strided_slice %592 {offsets = [0, 64], sizes = [16, 32], strides = [1, 1]} : vector<16x96xf32> to vector<16x32xf32>
    %601 = math.tanh %599 : vector<16x32xf32>
    %602 = arith.mulf %600, %601 : vector<16x32xf32>
    %c144_157 = arith.constant 144 : index
    %c0_158 = arith.constant 0 : index
    %603 = vector.load %arg18[%c144_157, %c0_158] : memref<256x128xf32, #tpu.memory_space<vmem>>, vector<16x128xf32>
    %604 = arith.truncf %582 : vector<16x32xf32> to vector<16x32xbf16>
    %cst_159 = arith.constant dense<0.000000e+00> : vector<16x128xf32>
    %605 = tpu.matmul %604, %418, %cst_159 {dimension_numbers = #tpu.dot_dimension_numbers<[1], [0], [0], [1], [0, 0, 1, 1], [], []>} : vector<16x32xbf16>, vector<32x128xbf16>, vector<16x128xf32> -> vector<16x128xf32>
    %606 = arith.addf %603, %605 : vector<16x128xf32>
    %607 = vector.extract_strided_slice %606 {offsets = [0, 0], sizes = [16, 96], strides = [1, 1]} : vector<16x128xf32> to vector<16x96xf32>
    %608 = arith.negf %607 : vector<16x96xf32>
    %609 = math.exp %608 : vector<16x96xf32>
    %cst_160 = arith.constant 1.000000e+00 : f32
    %610 = vector.broadcast %cst_160 : f32 to vector<16x96xf32>
    %611 = arith.addf %610, %609 : vector<16x96xf32>
    %612 = arith.divf %610, %611 : vector<16x96xf32>
    %613 = vector.extract_strided_slice %606 {offsets = [0, 96], sizes = [16, 32], strides = [1, 1]} : vector<16x128xf32> to vector<16x32xf32>
    %614 = math.tanh %613 : vector<16x32xf32>
    %615 = vector.extract_strided_slice %612 {offsets = [0, 32], sizes = [16, 32], strides = [1, 1]} : vector<16x96xf32> to vector<16x32xf32>
    %616 = arith.mulf %615, %579 : vector<16x32xf32>
    %617 = vector.extract_strided_slice %612 {offsets = [0, 0], sizes = [16, 32], strides = [1, 1]} : vector<16x96xf32> to vector<16x32xf32>
    %618 = arith.mulf %617, %614 : vector<16x32xf32>
    %619 = arith.addf %616, %618 : vector<16x32xf32>
    %620 = vector.extract_strided_slice %612 {offsets = [0, 64], sizes = [16, 32], strides = [1, 1]} : vector<16x96xf32> to vector<16x32xf32>
    %621 = math.tanh %619 : vector<16x32xf32>
    %622 = arith.mulf %620, %621 : vector<16x32xf32>
    %c160_161 = arith.constant 160 : index
    %c0_162 = arith.constant 0 : index
    %623 = vector.load %arg18[%c160_161, %c0_162] : memref<256x128xf32, #tpu.memory_space<vmem>>, vector<16x128xf32>
    %624 = arith.truncf %602 : vector<16x32xf32> to vector<16x32xbf16>
    %cst_163 = arith.constant dense<0.000000e+00> : vector<16x128xf32>
    %625 = tpu.matmul %624, %418, %cst_163 {dimension_numbers = #tpu.dot_dimension_numbers<[1], [0], [0], [1], [0, 0, 1, 1], [], []>} : vector<16x32xbf16>, vector<32x128xbf16>, vector<16x128xf32> -> vector<16x128xf32>
    %626 = arith.addf %623, %625 : vector<16x128xf32>
    %627 = vector.extract_strided_slice %626 {offsets = [0, 0], sizes = [16, 96], strides = [1, 1]} : vector<16x128xf32> to vector<16x96xf32>
    %628 = arith.negf %627 : vector<16x96xf32>
    %629 = math.exp %628 : vector<16x96xf32>
    %cst_164 = arith.constant 1.000000e+00 : f32
    %630 = vector.broadcast %cst_164 : f32 to vector<16x96xf32>
    %631 = arith.addf %630, %629 : vector<16x96xf32>
    %632 = arith.divf %630, %631 : vector<16x96xf32>
    %633 = vector.extract_strided_slice %626 {offsets = [0, 96], sizes = [16, 32], strides = [1, 1]} : vector<16x128xf32> to vector<16x32xf32>
    %634 = math.tanh %633 : vector<16x32xf32>
    %635 = vector.extract_strided_slice %632 {offsets = [0, 32], sizes = [16, 32], strides = [1, 1]} : vector<16x96xf32> to vector<16x32xf32>
    %636 = arith.mulf %635, %599 : vector<16x32xf32>
    %637 = vector.extract_strided_slice %632 {offsets = [0, 0], sizes = [16, 32], strides = [1, 1]} : vector<16x96xf32> to vector<16x32xf32>
    %638 = arith.mulf %637, %634 : vector<16x32xf32>
    %639 = arith.addf %636, %638 : vector<16x32xf32>
    %640 = vector.extract_strided_slice %632 {offsets = [0, 64], sizes = [16, 32], strides = [1, 1]} : vector<16x96xf32> to vector<16x32xf32>
    %641 = math.tanh %639 : vector<16x32xf32>
    %642 = arith.mulf %640, %641 : vector<16x32xf32>
    %c176_165 = arith.constant 176 : index
    %c0_166 = arith.constant 0 : index
    %643 = vector.load %arg18[%c176_165, %c0_166] : memref<256x128xf32, #tpu.memory_space<vmem>>, vector<16x128xf32>
    %644 = arith.truncf %622 : vector<16x32xf32> to vector<16x32xbf16>
    %cst_167 = arith.constant dense<0.000000e+00> : vector<16x128xf32>
    %645 = tpu.matmul %644, %418, %cst_167 {dimension_numbers = #tpu.dot_dimension_numbers<[1], [0], [0], [1], [0, 0, 1, 1], [], []>} : vector<16x32xbf16>, vector<32x128xbf16>, vector<16x128xf32> -> vector<16x128xf32>
    %646 = arith.addf %643, %645 : vector<16x128xf32>
    %647 = vector.extract_strided_slice %646 {offsets = [0, 0], sizes = [16, 96], strides = [1, 1]} : vector<16x128xf32> to vector<16x96xf32>
    %648 = arith.negf %647 : vector<16x96xf32>
    %649 = math.exp %648 : vector<16x96xf32>
    %cst_168 = arith.constant 1.000000e+00 : f32
    %650 = vector.broadcast %cst_168 : f32 to vector<16x96xf32>
    %651 = arith.addf %650, %649 : vector<16x96xf32>
    %652 = arith.divf %650, %651 : vector<16x96xf32>
    %653 = vector.extract_strided_slice %646 {offsets = [0, 96], sizes = [16, 32], strides = [1, 1]} : vector<16x128xf32> to vector<16x32xf32>
    %654 = math.tanh %653 : vector<16x32xf32>
    %655 = vector.extract_strided_slice %652 {offsets = [0, 32], sizes = [16, 32], strides = [1, 1]} : vector<16x96xf32> to vector<16x32xf32>
    %656 = arith.mulf %655, %619 : vector<16x32xf32>
    %657 = vector.extract_strided_slice %652 {offsets = [0, 0], sizes = [16, 32], strides = [1, 1]} : vector<16x96xf32> to vector<16x32xf32>
    %658 = arith.mulf %657, %654 : vector<16x32xf32>
    %659 = arith.addf %656, %658 : vector<16x32xf32>
    %660 = vector.extract_strided_slice %652 {offsets = [0, 64], sizes = [16, 32], strides = [1, 1]} : vector<16x96xf32> to vector<16x32xf32>
    %661 = math.tanh %659 : vector<16x32xf32>
    %662 = arith.mulf %660, %661 : vector<16x32xf32>
    %c192_169 = arith.constant 192 : index
    %c0_170 = arith.constant 0 : index
    %663 = vector.load %arg18[%c192_169, %c0_170] : memref<256x128xf32, #tpu.memory_space<vmem>>, vector<16x128xf32>
    %664 = arith.truncf %642 : vector<16x32xf32> to vector<16x32xbf16>
    %cst_171 = arith.constant dense<0.000000e+00> : vector<16x128xf32>
    %665 = tpu.matmul %664, %418, %cst_171 {dimension_numbers = #tpu.dot_dimension_numbers<[1], [0], [0], [1], [0, 0, 1, 1], [], []>} : vector<16x32xbf16>, vector<32x128xbf16>, vector<16x128xf32> -> vector<16x128xf32>
    %666 = arith.addf %663, %665 : vector<16x128xf32>
    %667 = vector.extract_strided_slice %666 {offsets = [0, 0], sizes = [16, 96], strides = [1, 1]} : vector<16x128xf32> to vector<16x96xf32>
    %668 = arith.negf %667 : vector<16x96xf32>
    %669 = math.exp %668 : vector<16x96xf32>
    %cst_172 = arith.constant 1.000000e+00 : f32
    %670 = vector.broadcast %cst_172 : f32 to vector<16x96xf32>
    %671 = arith.addf %670, %669 : vector<16x96xf32>
    %672 = arith.divf %670, %671 : vector<16x96xf32>
    %673 = vector.extract_strided_slice %666 {offsets = [0, 96], sizes = [16, 32], strides = [1, 1]} : vector<16x128xf32> to vector<16x32xf32>
    %674 = math.tanh %673 : vector<16x32xf32>
    %675 = vector.extract_strided_slice %672 {offsets = [0, 32], sizes = [16, 32], strides = [1, 1]} : vector<16x96xf32> to vector<16x32xf32>
    %676 = arith.mulf %675, %639 : vector<16x32xf32>
    %677 = vector.extract_strided_slice %672 {offsets = [0, 0], sizes = [16, 32], strides = [1, 1]} : vector<16x96xf32> to vector<16x32xf32>
    %678 = arith.mulf %677, %674 : vector<16x32xf32>
    %679 = arith.addf %676, %678 : vector<16x32xf32>
    %680 = vector.extract_strided_slice %672 {offsets = [0, 64], sizes = [16, 32], strides = [1, 1]} : vector<16x96xf32> to vector<16x32xf32>
    %681 = math.tanh %679 : vector<16x32xf32>
    %682 = arith.mulf %680, %681 : vector<16x32xf32>
    %c208_173 = arith.constant 208 : index
    %c0_174 = arith.constant 0 : index
    %683 = vector.load %arg18[%c208_173, %c0_174] : memref<256x128xf32, #tpu.memory_space<vmem>>, vector<16x128xf32>
    %684 = arith.truncf %662 : vector<16x32xf32> to vector<16x32xbf16>
    %cst_175 = arith.constant dense<0.000000e+00> : vector<16x128xf32>
    %685 = tpu.matmul %684, %418, %cst_175 {dimension_numbers = #tpu.dot_dimension_numbers<[1], [0], [0], [1], [0, 0, 1, 1], [], []>} : vector<16x32xbf16>, vector<32x128xbf16>, vector<16x128xf32> -> vector<16x128xf32>
    %686 = arith.addf %683, %685 : vector<16x128xf32>
    %687 = vector.extract_strided_slice %686 {offsets = [0, 0], sizes = [16, 96], strides = [1, 1]} : vector<16x128xf32> to vector<16x96xf32>
    %688 = arith.negf %687 : vector<16x96xf32>
    %689 = math.exp %688 : vector<16x96xf32>
    %cst_176 = arith.constant 1.000000e+00 : f32
    %690 = vector.broadcast %cst_176 : f32 to vector<16x96xf32>
    %691 = arith.addf %690, %689 : vector<16x96xf32>
    %692 = arith.divf %690, %691 : vector<16x96xf32>
    %693 = vector.extract_strided_slice %686 {offsets = [0, 96], sizes = [16, 32], strides = [1, 1]} : vector<16x128xf32> to vector<16x32xf32>
    %694 = math.tanh %693 : vector<16x32xf32>
    %695 = vector.extract_strided_slice %692 {offsets = [0, 32], sizes = [16, 32], strides = [1, 1]} : vector<16x96xf32> to vector<16x32xf32>
    %696 = arith.mulf %695, %659 : vector<16x32xf32>
    %697 = vector.extract_strided_slice %692 {offsets = [0, 0], sizes = [16, 32], strides = [1, 1]} : vector<16x96xf32> to vector<16x32xf32>
    %698 = arith.mulf %697, %694 : vector<16x32xf32>
    %699 = arith.addf %696, %698 : vector<16x32xf32>
    %700 = vector.extract_strided_slice %692 {offsets = [0, 64], sizes = [16, 32], strides = [1, 1]} : vector<16x96xf32> to vector<16x32xf32>
    %701 = math.tanh %699 : vector<16x32xf32>
    %702 = arith.mulf %700, %701 : vector<16x32xf32>
    %c224_177 = arith.constant 224 : index
    %c0_178 = arith.constant 0 : index
    %703 = vector.load %arg18[%c224_177, %c0_178] : memref<256x128xf32, #tpu.memory_space<vmem>>, vector<16x128xf32>
    %704 = arith.truncf %682 : vector<16x32xf32> to vector<16x32xbf16>
    %cst_179 = arith.constant dense<0.000000e+00> : vector<16x128xf32>
    %705 = tpu.matmul %704, %418, %cst_179 {dimension_numbers = #tpu.dot_dimension_numbers<[1], [0], [0], [1], [0, 0, 1, 1], [], []>} : vector<16x32xbf16>, vector<32x128xbf16>, vector<16x128xf32> -> vector<16x128xf32>
    %706 = arith.addf %703, %705 : vector<16x128xf32>
    %707 = vector.extract_strided_slice %706 {offsets = [0, 0], sizes = [16, 96], strides = [1, 1]} : vector<16x128xf32> to vector<16x96xf32>
    %708 = arith.negf %707 : vector<16x96xf32>
    %709 = math.exp %708 : vector<16x96xf32>
    %cst_180 = arith.constant 1.000000e+00 : f32
    %710 = vector.broadcast %cst_180 : f32 to vector<16x96xf32>
    %711 = arith.addf %710, %709 : vector<16x96xf32>
    %712 = arith.divf %710, %711 : vector<16x96xf32>
    %713 = vector.extract_strided_slice %706 {offsets = [0, 96], sizes = [16, 32], strides = [1, 1]} : vector<16x128xf32> to vector<16x32xf32>
    %714 = math.tanh %713 : vector<16x32xf32>
    %715 = vector.extract_strided_slice %712 {offsets = [0, 32], sizes = [16, 32], strides = [1, 1]} : vector<16x96xf32> to vector<16x32xf32>
    %716 = arith.mulf %715, %679 : vector<16x32xf32>
    %717 = vector.extract_strided_slice %712 {offsets = [0, 0], sizes = [16, 32], strides = [1, 1]} : vector<16x96xf32> to vector<16x32xf32>
    %718 = arith.mulf %717, %714 : vector<16x32xf32>
    %719 = arith.addf %716, %718 : vector<16x32xf32>
    %720 = vector.extract_strided_slice %712 {offsets = [0, 64], sizes = [16, 32], strides = [1, 1]} : vector<16x96xf32> to vector<16x32xf32>
    %721 = math.tanh %719 : vector<16x32xf32>
    %722 = arith.mulf %720, %721 : vector<16x32xf32>
    %c240_181 = arith.constant 240 : index
    %c0_182 = arith.constant 0 : index
    %723 = vector.load %arg18[%c240_181, %c0_182] : memref<256x128xf32, #tpu.memory_space<vmem>>, vector<16x128xf32>
    %724 = arith.truncf %702 : vector<16x32xf32> to vector<16x32xbf16>
    %cst_183 = arith.constant dense<0.000000e+00> : vector<16x128xf32>
    %725 = tpu.matmul %724, %418, %cst_183 {dimension_numbers = #tpu.dot_dimension_numbers<[1], [0], [0], [1], [0, 0, 1, 1], [], []>} : vector<16x32xbf16>, vector<32x128xbf16>, vector<16x128xf32> -> vector<16x128xf32>
    %726 = arith.addf %723, %725 : vector<16x128xf32>
    %727 = vector.extract_strided_slice %726 {offsets = [0, 0], sizes = [16, 96], strides = [1, 1]} : vector<16x128xf32> to vector<16x96xf32>
    %728 = arith.negf %727 : vector<16x96xf32>
    %729 = math.exp %728 : vector<16x96xf32>
    %cst_184 = arith.constant 1.000000e+00 : f32
    %730 = vector.broadcast %cst_184 : f32 to vector<16x96xf32>
    %731 = arith.addf %730, %729 : vector<16x96xf32>
    %732 = arith.divf %730, %731 : vector<16x96xf32>
    %733 = vector.extract_strided_slice %726 {offsets = [0, 96], sizes = [16, 32], strides = [1, 1]} : vector<16x128xf32> to vector<16x32xf32>
    %734 = math.tanh %733 : vector<16x32xf32>
    %735 = vector.extract_strided_slice %732 {offsets = [0, 32], sizes = [16, 32], strides = [1, 1]} : vector<16x96xf32> to vector<16x32xf32>
    %736 = arith.mulf %735, %699 : vector<16x32xf32>
    %737 = vector.extract_strided_slice %732 {offsets = [0, 0], sizes = [16, 32], strides = [1, 1]} : vector<16x96xf32> to vector<16x32xf32>
    %738 = arith.mulf %737, %734 : vector<16x32xf32>
    %739 = arith.addf %736, %738 : vector<16x32xf32>
    %740 = vector.extract_strided_slice %732 {offsets = [0, 64], sizes = [16, 32], strides = [1, 1]} : vector<16x96xf32> to vector<16x32xf32>
    %741 = math.tanh %739 : vector<16x32xf32>
    %742 = arith.mulf %740, %741 : vector<16x32xf32>
    %743 = tpu.concatenate %722, %742 in 0 : vector<16x32xf32>, vector<16x32xf32> -> vector<32x32xf32>
    %744 = tpu.concatenate %719, %739 in 0 : vector<16x32xf32>, vector<16x32xf32> -> vector<32x32xf32>
    %c0_185 = arith.constant 0 : index
    %745 = memref.load %arg8[%c0_185] : memref<3xf32, #tpu.memory_space<smem>>
    %746 = vector.broadcast %745 : f32 to vector<32x32xf32>
    %747 = arith.mulf %416, %746 : vector<32x32xf32>
    %c0_186 = arith.constant 0 : index
    %748 = memref.load %arg9[%c0_186] : memref<3xf32, #tpu.memory_space<smem>>
    %749 = vector.broadcast %748 : f32 to vector<32x32xf32>
    %750 = arith.mulf %417, %749 : vector<32x32xf32>
    %c1 = arith.constant 1 : index
    %751 = memref.load %arg8[%c1] : memref<3xf32, #tpu.memory_space<smem>>
    %752 = vector.broadcast %751 : f32 to vector<32x32xf32>
    %753 = arith.mulf %743, %752 : vector<32x32xf32>
    %754 = arith.addf %747, %753 : vector<32x32xf32>
    %c1_187 = arith.constant 1 : index
    %755 = memref.load %arg9[%c1_187] : memref<3xf32, #tpu.memory_space<smem>>
    %756 = vector.broadcast %755 : f32 to vector<32x32xf32>
    %757 = arith.mulf %744, %756 : vector<32x32xf32>
    %758 = arith.addf %750, %757 : vector<32x32xf32>
    %c2 = arith.constant 2 : index
    %759 = memref.load %arg8[%c2] : memref<3xf32, #tpu.memory_space<smem>>
    %760 = vector.broadcast %759 : f32 to vector<32x32xf32>
    %761 = arith.addf %754, %760 : vector<32x32xf32>
    %cst_188 = arith.constant 0.000000e+00 : f32
    %762 = vector.broadcast %cst_188 : f32 to vector<32x32xf32>
    %763 = arith.maximumf %761, %762 : vector<32x32xf32>
    %c2_189 = arith.constant 2 : index
    %764 = memref.load %arg9[%c2_189] : memref<3xf32, #tpu.memory_space<smem>>
    %765 = vector.broadcast %764 : f32 to vector<32x32xf32>
    %766 = arith.addf %758, %765 : vector<32x32xf32>
    %cst_190 = arith.constant 0.000000e+00 : f32
    %767 = vector.broadcast %cst_190 : f32 to vector<32x32xf32>
    %768 = arith.maximumf %766, %767 : vector<32x32xf32>
    %769 = tpu.concatenate %763, %768 in 1 : vector<32x32xf32>, vector<32x32xf32> -> vector<32x64xf32>
    %770 = arith.truncf %769 : vector<32x64xf32> to vector<32x64xbf16>
    %c0_191 = arith.constant 0 : index
    %c0_192 = arith.constant 0 : index
    %771 = vector.load %arg10[%c0_191, %c0_192] : memref<64x32xbf16, #tpu.memory_space<vmem>>, vector<64x32xbf16>
    %cst_193 = arith.constant dense<0.000000e+00> : vector<32x32xf32>
    %772 = tpu.matmul %770, %771, %cst_193 {dimension_numbers = #tpu.dot_dimension_numbers<[1], [0], [0], [1], [0, 0, 1, 1], [], []>} : vector<32x64xbf16>, vector<64x32xbf16>, vector<32x32xf32> -> vector<32x32xf32>
    %c0_194 = arith.constant 0 : index
    %c0_195 = arith.constant 0 : index
    %773 = vector.load %arg11[%c0_194, %c0_195] : memref<1x32xf32, #tpu.memory_space<vmem>>, vector<1x32xf32>
    %774 = vector.broadcast %773 : vector<1x32xf32> to vector<32x32xf32>
    %775 = arith.addf %772, %774 : vector<32x32xf32>
    %cst_196 = arith.constant 0.000000e+00 : f32
    %776 = vector.broadcast %cst_196 : f32 to vector<32x32xf32>
    %777 = arith.maximumf %775, %776 : vector<32x32xf32>
    %778 = tpu.concatenate %743, %777 in 1 : vector<32x32xf32>, vector<32x32xf32> -> vector<32x64xf32>
    %779 = arith.truncf %778 : vector<32x64xf32> to vector<32x64xbf16>
    %c0_197 = arith.constant 0 : index
    %c0_198 = arith.constant 0 : index
    %780 = vector.load %arg12[%c0_197, %c0_198] : memref<64x64xbf16, #tpu.memory_space<vmem>>, vector<64x64xbf16>
    %cst_199 = arith.constant dense<0.000000e+00> : vector<32x64xf32>
    %781 = tpu.matmul %779, %780, %cst_199 {dimension_numbers = #tpu.dot_dimension_numbers<[1], [0], [0], [1], [0, 0, 1, 1], [], []>} : vector<32x64xbf16>, vector<64x64xbf16>, vector<32x64xf32> -> vector<32x64xf32>
    %c0_200 = arith.constant 0 : index
    %c0_201 = arith.constant 0 : index
    %782 = vector.load %arg13[%c0_200, %c0_201] : memref<1x64xf32, #tpu.memory_space<vmem>>, vector<1x64xf32>
    %783 = vector.broadcast %782 : vector<1x64xf32> to vector<32x64xf32>
    %784 = arith.addf %781, %783 : vector<32x64xf32>
    %cst_202 = arith.constant 0.000000e+00 : f32
    %785 = vector.broadcast %cst_202 : f32 to vector<32x64xf32>
    %786 = arith.maximumf %784, %785 : vector<32x64xf32>
    %787 = arith.truncf %786 : vector<32x64xf32> to vector<32x64xbf16>
    %c0_203 = arith.constant 0 : index
    %c0_204 = arith.constant 0 : index
    %788 = vector.load %arg14[%c0_203, %c0_204] : memref<64x32xbf16, #tpu.memory_space<vmem>>, vector<64x32xbf16>
    %cst_205 = arith.constant dense<0.000000e+00> : vector<32x32xf32>
    %789 = tpu.matmul %787, %788, %cst_205 {dimension_numbers = #tpu.dot_dimension_numbers<[1], [0], [0], [1], [0, 0, 1, 1], [], []>} : vector<32x64xbf16>, vector<64x32xbf16>, vector<32x32xf32> -> vector<32x32xf32>
    %c0_206 = arith.constant 0 : index
    %c0_207 = arith.constant 0 : index
    %790 = vector.load %arg15[%c0_206, %c0_207] : memref<1x32xf32, #tpu.memory_space<vmem>>, vector<1x32xf32>
    %791 = vector.broadcast %790 : vector<1x32xf32> to vector<32x32xf32>
    %792 = arith.addf %789, %791 : vector<32x32xf32>
    %cst_208 = arith.constant 0.000000e+00 : f32
    %793 = vector.broadcast %cst_208 : f32 to vector<32x32xf32>
    %794 = arith.maximumf %792, %793 : vector<32x32xf32>
    %c0_209 = arith.constant 0 : index
    %c0_210 = arith.constant 0 : index
    %795 = vector.load %arg16[%c0_209, %c0_210] : memref<32x32xf32, #tpu.memory_space<vmem>>, vector<32x32xf32>
    tpu.vector_store %arg16[%c0_209, %c0_210], %794 {strides = array<i32>} : memref<32x32xf32, #tpu.memory_space<vmem>>, vector<32x32xf32>,
    return
  }
  func.func @transform_0(%arg0: i32) -> (i32, i32, i32) {
    %c0_i32 = arith.constant 0 : i32
    %c0_i32_0 = arith.constant 0 : i32
    %c0_i32_1 = arith.constant 0 : i32
    return %c0_i32, %arg0, %c0_i32_0 : i32, i32, i32
  }
  func.func @transform_1(%arg0: i32) -> (i32, i32) {
    %c0_i32 = arith.constant 0 : i32
    %c0_i32_0 = arith.constant 0 : i32
    %c0_i32_1 = arith.constant 0 : i32
    return %c0_i32, %c0_i32_0 : i32, i32
  }
  func.func @transform_2(%arg0: i32) -> (i32, i32) {
    %c0_i32 = arith.constant 0 : i32
    %c0_i32_0 = arith.constant 0 : i32
    %c0_i32_1 = arith.constant 0 : i32
    return %c0_i32, %c0_i32_0 : i32, i32
  }
  func.func @transform_3(%arg0: i32) -> (i32, i32) {
    %c0_i32 = arith.constant 0 : i32
    %c0_i32_0 = arith.constant 0 : i32
    %c0_i32_1 = arith.constant 0 : i32
    return %c0_i32, %c0_i32_0 : i32, i32
  }
  func.func @transform_4(%arg0: i32) -> (i32, i32) {
    %c0_i32 = arith.constant 0 : i32
    %c0_i32_0 = arith.constant 0 : i32
    %c0_i32_1 = arith.constant 0 : i32
    return %c0_i32, %c0_i32_0 : i32, i32
  }
  func.func @transform_5(%arg0: i32) -> (i32, i32) {
    %c0_i32 = arith.constant 0 : i32
    %c0_i32_0 = arith.constant 0 : i32
    %c0_i32_1 = arith.constant 0 : i32
    return %c0_i32, %c0_i32_0 : i32, i32
  }
  func.func @transform_6(%arg0: i32) -> (i32, i32) {
    %c0_i32 = arith.constant 0 : i32
    %c0_i32_0 = arith.constant 0 : i32
    %c0_i32_1 = arith.constant 0 : i32
    return %c0_i32, %c0_i32_0 : i32, i32
  }
  func.func @transform_7(%arg0: i32) -> i32 {
    %c0_i32 = arith.constant 0 : i32
    %c0_i32_0 = arith.constant 0 : i32
    return %c0_i32 : i32
  }
  func.func @transform_8(%arg0: i32) -> i32 {
    %c0_i32 = arith.constant 0 : i32
    %c0_i32_0 = arith.constant 0 : i32
    return %c0_i32 : i32
  }
  func.func @transform_9(%arg0: i32) -> (i32, i32) {
    %c0_i32 = arith.constant 0 : i32
    %c0_i32_0 = arith.constant 0 : i32
    %c0_i32_1 = arith.constant 0 : i32
    return %c0_i32, %c0_i32_0 : i32, i32
  }
  func.func @transform_10(%arg0: i32) -> (i32, i32) {
    %c0_i32 = arith.constant 0 : i32
    %c0_i32_0 = arith.constant 0 : i32
    %c0_i32_1 = arith.constant 0 : i32
    return %c0_i32, %c0_i32_0 : i32, i32
  }
  func.func @transform_11(%arg0: i32) -> (i32, i32) {
    %c0_i32 = arith.constant 0 : i32
    %c0_i32_0 = arith.constant 0 : i32
    %c0_i32_1 = arith.constant 0 : i32
    return %c0_i32, %c0_i32_0 : i32, i32
  }
  func.func @transform_12(%arg0: i32) -> (i32, i32) {
    %c0_i32 = arith.constant 0 : i32
    %c0_i32_0 = arith.constant 0 : i32
    %c0_i32_1 = arith.constant 0 : i32
    return %c0_i32, %c0_i32_0 : i32, i32
  }
  func.func @transform_13(%arg0: i32) -> (i32, i32) {
    %c0_i32 = arith.constant 0 : i32
    %c0_i32_0 = arith.constant 0 : i32
    %c0_i32_1 = arith.constant 0 : i32
    return %c0_i32, %c0_i32_0 : i32, i32
  }
  func.func @transform_14(%arg0: i32) -> (i32, i32) {
    %c0_i32 = arith.constant 0 : i32
    %c0_i32_0 = arith.constant 0 : i32
    %c0_i32_1 = arith.constant 0 : i32
    return %c0_i32, %c0_i32_0 : i32, i32
  }
  func.func @transform_15(%arg0: i32) -> (i32, i32) {
    %c0_i32 = arith.constant 0 : i32
    %c0_i32_0 = arith.constant 0 : i32
    return %arg0, %c0_i32 : i32, i32
  }
}

</mosaic_0001>

<llo_original>
// kernel: tpu_custom_call.1
$region0: #{tpu_custom_call.1}
  #allocation0 [shape = 'u32[]', space=smem, size = 0x4, offset = 0x4, fixed_abs, tag = 'smem constant byte address 0x4 - core index']
  #allocation1 [shape = 'u32[72,128]{1,0:T(1,128)}', space=vmem, size = 0x9000, scoped, tag = 'internal scratch']
  #allocation2 [shape = 'f32[256,128]{1,0:T(8,128)}', space=vmem, size = 0x20000, scoped, tag = 'scratch operand']
  #allocation3 [shape = 'f32[256,128]{1,0:T(8,128)}', space=vmem, size = 0x20000, scoped, tag = 'scratch operand']
  %s0 = inlined_call_operand.vmem [shape: f32[8,32,4], index: 0, kind: input, shape index: {}]
  %s1 = inlined_call_operand.vmem [shape: bf16[4,128], index: 1, kind: input, shape index: {}]
  %s2 = inlined_call_operand.vmem [shape: bf16[32,128], index: 2, kind: input, shape index: {}]
  %s3 = inlined_call_operand.vmem [shape: f32[1,128], index: 3, kind: input, shape index: {}]
  %s4 = inlined_call_operand.vmem [shape: bf16[32,128], index: 4, kind: input, shape index: {}]
  %s5 = inlined_call_operand.vmem [shape: bf16[32,128], index: 5, kind: input, shape index: {}]
  %s6 = inlined_call_operand.vmem [shape: f32[1,128], index: 6, kind: input, shape index: {}]
  %s7 = inlined_call_operand.vmem [shape: f32[3], index: 7, kind: input, shape index: {}]
  %s8 = inlined_call_operand.vmem [shape: f32[3], index: 8, kind: input, shape index: {}]
  %s9 = inlined_call_operand.vmem [shape: bf16[64,32], index: 9, kind: input, shape index: {}]
  %s10 = inlined_call_operand.vmem [shape: f32[1,32], index: 10, kind: input, shape index: {}]
  %s11 = inlined_call_operand.vmem [shape: bf16[64,64], index: 11, kind: input, shape index: {}]
  %s12 = inlined_call_operand.vmem [shape: f32[1,64], index: 12, kind: input, shape index: {}]
  %s13 = inlined_call_operand.vmem [shape: bf16[64,32], index: 13, kind: input, shape index: {}]
  %s14 = inlined_call_operand.vmem [shape: f32[1,32], index: 14, kind: input, shape index: {}]
  %s15 = inlined_call_operand.hbm [shape: f32[32,32], index: 15, kind: output, shape index: {}]
  %s16 = sld [smem:[#allocation0]]
  $region78: #{tpu_custom_call.1} parent=0
    _
  %s18 = ssub.s32 1, %s16
  %s19 = scalar_select 0, %s18, %s16
  $region1: #{tpu_custom_call.1} parent=0
    #allocation4 [shape = 'u8[512]{0}', space=smem, size = 0x200, scoped, tag = 'input window, operand 7, single buffered']
    #allocation5 [shape = 's32[1]{0}', space=sflag, size = 0x4, scoped, tag = 'scoped memory for tpu_custom_call.1']
    #allocation6 [shape = 's32[1]{0}', space=sflag, size = 0x4, scoped, tag = 'scoped memory for tpu_custom_call.1']
    #allocation7 [shape = 'u8[512]{0}', space=smem, size = 0x200, scoped, tag = 'input window, operand 8, single buffered']
    #allocation8 [shape = 's32[1]{0}', space=sflag, size = 0x4, scoped, tag = 'scoped memory for tpu_custom_call.1']
    #allocation9 [shape = 'u8[16384]{0}', space=vmem, size = 0x4000, scoped, tag = 'output window, operand 0, single buffered']
    %20 = vsyncpa [#allocation6], 0
    %21 = vsyncpa [#allocation8], 0
    %22 = vsyncpa [#allocation5], 0
    // Predicated region
    $region2: #{tpu_custom_call.1} parent=1 // pred_check
      _
    $region3: #{tpu_custom_call.1} parent=1 // pred_check_branch
      %24 = sbr.rel (0) target = $region5
    $region4: #{tpu_custom_call.1} parent=1 // pred_region
      _
    $region5: #{tpu_custom_call.1} parent=1 // pred_fallthru
      _
    // Predicated region
    $region6: #{tpu_custom_call.1} parent=1 // pred_check
      _
    $region7: #{tpu_custom_call.1} parent=1 // pred_check_branch
      %26 = sbr.rel (0) target = $region9
    $region8: #{tpu_custom_call.1} parent=1 // pred_region
      _
    $region9: #{tpu_custom_call.1} parent=1 // pred_fallthru
      _
    // Predicated region
    $region10: #{tpu_custom_call.1} parent=1 // pred_check
      _
    $region11: #{tpu_custom_call.1} parent=1 // pred_check_branch
      %28 = sbr.rel (0) target = $region13
    $region12: #{tpu_custom_call.1} parent=1 // pred_region
      _
    $region13: #{tpu_custom_call.1} parent=1 // pred_fallthru
      _
    // Predicated region
    $region14: #{tpu_custom_call.1} parent=1 // pred_check
      _
    $region15: #{tpu_custom_call.1} parent=1 // pred_check_branch
      %30 = sbr.rel (0) target = $region17
    $region16: #{tpu_custom_call.1} parent=1 // pred_region
      _
    $region17: #{tpu_custom_call.1} parent=1 // pred_fallthru
      _
    // Predicated region
    $region18: #{tpu_custom_call.1} parent=1 // pred_check
      _
    $region19: #{tpu_custom_call.1} parent=1 // pred_check_branch
      %32 = sbr.rel (0) target = $region21
    $region20: #{tpu_custom_call.1} parent=1 // pred_region
      _
    $region21: #{tpu_custom_call.1} parent=1 // pred_fallthru
      _
    // Predicated region
    $region22: #{tpu_custom_call.1} parent=1 // pred_check
      _
    $region23: #{tpu_custom_call.1} parent=1 // pred_check_branch
      %34 = sbr.rel (0) target = $region25
    $region24: #{tpu_custom_call.1} parent=1 // pred_region
      _
    $region25: #{tpu_custom_call.1} parent=1 // pred_fallthru
      _
    // Predicated region
    $region26: #{tpu_custom_call.1} parent=1 // pred_check
      _
    $region27: #{tpu_custom_call.1} parent=1 // pred_check_branch
      %36 = sbr.rel (0) target = $region29
    $region28: #{tpu_custom_call.1} parent=1 // pred_region
      _
    $region29: #{tpu_custom_call.1} parent=1 // pred_fallthru
      _
    // Predicated region
    $region30: #{tpu_custom_call.1} parent=1 // pred_check
      _
    $region31: #{tpu_custom_call.1} parent=1 // pred_check_branch
      %38 = sbr.rel (0) target = $region33
    $region32: #{tpu_custom_call.1} parent=1 // pred_region
      %40 = vsyncadd [#allocation6], 0
      %s42 = sshll.u32 %s7, 4
      %s43 = int_to_ptr.vmem [resolvable:$true] %s42
      %45 = dma.vmem_to_smem %s43, 16, [#allocation4], [#allocation6]
    $region33: #{tpu_custom_call.1} parent=1 // pred_fallthru
      _
    // Predicated region
    $region34: #{tpu_custom_call.1} parent=1 // pred_check
      _
    $region35: #{tpu_custom_call.1} parent=1 // pred_check_branch
      %47 = sbr.rel (0) target = $region37
    $region36: #{tpu_custom_call.1} parent=1 // pred_region
      %49 = vsyncadd [#allocation8], 0
      %s51 = sshll.u32 %s8, 4
      %s52 = int_to_ptr.vmem [resolvable:$true] %s51
      %54 = dma.vmem_to_smem %s52, 16, [#allocation7], [#allocation8]
    $region37: #{tpu_custom_call.1} parent=1 // pred_fallthru
      _
    // Predicated region
    $region38: #{tpu_custom_call.1} parent=1 // pred_check
      _
    $region39: #{tpu_custom_call.1} parent=1 // pred_check_branch
      %56 = sbr.rel (0) target = $region41
    $region40: #{tpu_custom_call.1} parent=1 // pred_region
      _
    $region41: #{tpu_custom_call.1} parent=1 // pred_fallthru
      _
    // Predicated region
    $region42: #{tpu_custom_call.1} parent=1 // pred_check
      _
    $region43: #{tpu_custom_call.1} parent=1 // pred_check_branch
      %58 = sbr.rel (0) target = $region45
    $region44: #{tpu_custom_call.1} parent=1 // pred_region
      _
    $region45: #{tpu_custom_call.1} parent=1 // pred_fallthru
      _
    // Predicated region
    $region46: #{tpu_custom_call.1} parent=1 // pred_check
      _
    $region47: #{tpu_custom_call.1} parent=1 // pred_check_branch
      %60 = sbr.rel (0) target = $region49
    $region48: #{tpu_custom_call.1} parent=1 // pred_region
      _
    $region49: #{tpu_custom_call.1} parent=1 // pred_fallthru
      _
    // Predicated region
    $region50: #{tpu_custom_call.1} parent=1 // pred_check
      _
    $region51: #{tpu_custom_call.1} parent=1 // pred_check_branch
      %62 = sbr.rel (0) target = $region53
    $region52: #{tpu_custom_call.1} parent=1 // pred_region
      _
    $region53: #{tpu_custom_call.1} parent=1 // pred_fallthru
      _
    // Predicated region
    $region54: #{tpu_custom_call.1} parent=1 // pred_check
      _
    $region55: #{tpu_custom_call.1} parent=1 // pred_check_branch
      %64 = sbr.rel (0) target = $region57
    $region56: #{tpu_custom_call.1} parent=1 // pred_region
      _
    $region57: #{tpu_custom_call.1} parent=1 // pred_fallthru
      _
    // Predicated region
    $region58: #{tpu_custom_call.1} parent=1 // pred_check
      _
    $region59: #{tpu_custom_call.1} parent=1 // pred_check_branch
      %66 = sbr.rel (0) target = $region61
    $region60: #{tpu_custom_call.1} parent=1 // pred_region
      _
    $region61: #{tpu_custom_call.1} parent=1 // pred_fallthru
      _
    // Predicated region
    $region62: #{tpu_custom_call.1} parent=1 // pred_check
      _
    $region63: #{tpu_custom_call.1} parent=1 // pred_check_branch
      %68 = sbr.rel (0) target = $region65
    $region64: #{tpu_custom_call.1} parent=1 // pred_region
      %70 = dma.done [#allocation6], 16
    $region65: #{tpu_custom_call.1} parent=1 // pred_fallthru
      _
    // Predicated region
    $region66: #{tpu_custom_call.1} parent=1 // pred_check
      _
    $region67: #{tpu_custom_call.1} parent=1 // pred_check_branch
      %72 = sbr.rel (0) target = $region69
    $region68: #{tpu_custom_call.1} parent=1 // pred_region
      %74 = dma.done [#allocation8], 16
    $region69: #{tpu_custom_call.1} parent=1 // pred_fallthru
      _
    %75 = sfence
    %v77 = vld [vmem:[%s0] sm:$0xff]
    %v78 = vld [vmem:[%s0 + $0x8] sm:$0xff]
    %v79 = vld [vmem:[%s0 + $0x10] sm:$0xff]
    %v80 = vld [vmem:[%s0 + $0x18] sm:$0xff]
    %v81 = vld [vmem:[%s0 + $0x20] sm:$0xff]
    %v82 = vld [vmem:[%s0 + $0x28] sm:$0xff]
    %v83 = vld [vmem:[%s0 + $0x30] sm:$0xff]
    %v84 = vld [vmem:[%s0 + $0x38] sm:$0xff]
    %v85 = vld [vmem:[%s0 + $0x40] sm:$0xff]
    %v86 = vld [vmem:[%s0 + $0x48] sm:$0xff]
    %v87 = vld [vmem:[%s0 + $0x50] sm:$0xff]
    %v88 = vld [vmem:[%s0 + $0x58] sm:$0xff]
    %v89 = vld [vmem:[%s0 + $0x60] sm:$0xff]
    %v90 = vld [vmem:[%s0 + $0x68] sm:$0xff]
    %v91 = vld [vmem:[%s0 + $0x70] sm:$0xff]
    %v92 = vld [vmem:[%s0 + $0x78] sm:$0xff]
    %v93 = vld [vmem:[%s0 + $0x80] sm:$0xff]
    %v94 = vld [vmem:[%s0 + $0x88] sm:$0xff]
    %v95 = vld [vmem:[%s0 + $0x90] sm:$0xff]
    %v96 = vld [vmem:[%s0 + $0x98] sm:$0xff]
    %v97 = vld [vmem:[%s0 + $0xa0] sm:$0xff]
    %v98 = vld [vmem:[%s0 + $0xa8] sm:$0xff]
    %v99 = vld [vmem:[%s0 + $0xb0] sm:$0xff]
    %v100 = vld [vmem:[%s0 + $0xb8] sm:$0xff]
    %v101 = vld [vmem:[%s0 + $0xc0] sm:$0xff]
    %v102 = vld [vmem:[%s0 + $0xc8] sm:$0xff]
    %v103 = vld [vmem:[%s0 + $0xd0] sm:$0xff]
    %v104 = vld [vmem:[%s0 + $0xd8] sm:$0xff]
    %v105 = vld [vmem:[%s0 + $0xe0] sm:$0xff]
    %v106 = vld [vmem:[%s0 + $0xe8] sm:$0xff]
    %v107 = vld [vmem:[%s0 + $0xf0] sm:$0xff]
    %v108 = vld [vmem:[%s0 + $0xf8] sm:$0xff]
    %v109 = vpack.c.bf16 %v78, %v77
    %v110 = vpack.c.bf16 %v80, %v79
    %v111 = vpack.c.bf16 %v82, %v81
    %v112 = vpack.c.bf16 %v84, %v83
    %v113 = vpack.c.bf16 %v86, %v85
    %v114 = vpack.c.bf16 %v88, %v87
    %v115 = vpack.c.bf16 %v90, %v89
    %v116 = vpack.c.bf16 %v92, %v91
    %v117 = vpack.c.bf16 %v94, %v93
    %v118 = vpack.c.bf16 %v96, %v95
    %v119 = vpack.c.bf16 %v98, %v97
    %v120 = vpack.c.bf16 %v100, %v99
    %v121 = vpack.c.bf16 %v102, %v101
    %v122 = vpack.c.bf16 %v104, %v103
    %v123 = vpack.c.bf16 %v106, %v105
    %v124 = vpack.c.bf16 %v108, %v107
    %v125 = vld [vmem:[%s1] sm:$0x3]
    %v126 = vld [vmem:[%s3] sm:$0x1]
    %v128 = vperm.slane %v126, 0
    %vm130 = vcmask 31744
    %v132 = vsel %vm130, %v109, 0
    %v135 = vsel %vm130, %v110, 0
    %v138 = vsel %vm130, %v111, 0
    %v141 = vsel %vm130, %v112, 0
    %v144 = vsel %vm130, %v113, 0
    %v147 = vsel %vm130, %v114, 0
    %v150 = vsel %vm130, %v115, 0
    %v153 = vsel %vm130, %v116, 0
    %v156 = vsel %vm130, %v117, 0
    %v159 = vsel %vm130, %v118, 0
    %v162 = vsel %vm130, %v119, 0
    %v165 = vsel %vm130, %v120, 0
    %v168 = vsel %vm130, %v121, 0
    %v171 = vsel %vm130, %v122, 0
    %v174 = vsel %vm130, %v123, 0
    %v177 = vsel %vm130, %v124, 0
    %vm179 = vcmask 1041408
    %v181 = vsel %vm179, %v125, 0
    %183 = vmatpush.bf16.msra.mxu0 0
    %184 = vmatpush.bf16.msra.mxu0 0
    %185 = vmatpush.bf16.msra.mxu0 0
    %186 = vmatpush.bf16.msra.mxu0 0
    %187 = vmatpush.bf16.msra.mxu0 0
    %188 = vmatpush.bf16.msra.mxu0 0
    %189 = vmatpush.bf16.msra.mxu0 0
    %190 = vmatpush.bf16.msra.mxu0 %v181
    %191 = vmatmul.bf16.gmra.mxu0 %v132
    %v192 = vpop.f32.mrf.mxu0
    %v193 = vadd.f32 %v128, %v192
    %v194 = vpop.f32.mrf.mxu0
    %v195 = vadd.f32 %v128, %v194
    %196 = vmatmul.bf16.gmra.mxu0 %v135
    %v197 = vpop.f32.mrf.mxu0
    %v198 = vadd.f32 %v128, %v197
    %v199 = vpop.f32.mrf.mxu0
    %v200 = vadd.f32 %v128, %v199
    %201 = vmatmul.bf16.gmra.mxu0 %v138
    %v202 = vpop.f32.mrf.mxu0
    %v203 = vadd.f32 %v128, %v202
    %v204 = vpop.f32.mrf.mxu0
    %v205 = vadd.f32 %v128, %v204
    %206 = vmatmul.bf16.gmra.mxu0 %v141
    %v207 = vpop.f32.mrf.mxu0
    %v208 = vadd.f32 %v128, %v207
    %v209 = vpop.f32.mrf.mxu0
    %v210 = vadd.f32 %v128, %v209
    %211 = vmatmul.bf16.gmra.mxu0 %v144
    %v212 = vpop.f32.mrf.mxu0
    %v213 = vadd.f32 %v128, %v212
    %v214 = vpop.f32.mrf.mxu0
    %v215 = vadd.f32 %v128, %v214
    %216 = vmatmul.bf16.gmra.mxu0 %v147
    %v217 = vpop.f32.mrf.mxu0
    %v218 = vadd.f32 %v128, %v217
    %v219 = vpop.f32.mrf.mxu0
    %v220 = vadd.f32 %v128, %v219
    %221 = vmatmul.bf16.gmra.mxu0 %v150
    %v222 = vpop.f32.mrf.mxu0
    %v223 = vadd.f32 %v128, %v222
    %v224 = vpop.f32.mrf.mxu0
    %v225 = vadd.f32 %v128, %v224
    %226 = vmatmul.bf16.gmra.mxu0 %v153
    %v227 = vpop.f32.mrf.mxu0
    %v228 = vadd.f32 %v128, %v227
    %v229 = vpop.f32.mrf.mxu0
    %v230 = vadd.f32 %v128, %v229
    %231 = vmatmul.bf16.gmra.mxu0 %v156
    %v232 = vpop.f32.mrf.mxu0
    %v233 = vadd.f32 %v128, %v232
    %v234 = vpop.f32.mrf.mxu0
    %v235 = vadd.f32 %v128, %v234
    %236 = vmatmul.bf16.gmra.mxu0 %v159
    %v237 = vpop.f32.mrf.mxu0
    %v238 = vadd.f32 %v128, %v237
    %v239 = vpop.f32.mrf.mxu0
    %v240 = vadd.f32 %v128, %v239
    %241 = vmatmul.bf16.gmra.mxu0 %v162
    %v242 = vpop.f32.mrf.mxu0
    %v243 = vadd.f32 %v128, %v242
    %v244 = vpop.f32.mrf.mxu0
    %v245 = vadd.f32 %v128, %v244
    %246 = vmatmul.bf16.gmra.mxu0 %v165
    %v247 = vpop.f32.mrf.mxu0
    %v248 = vadd.f32 %v128, %v247
    %v249 = vpop.f32.mrf.mxu0
    %v250 = vadd.f32 %v128, %v249
    %251 = vmatmul.bf16.gmra.mxu0 %v168
    %v252 = vpop.f32.mrf.mxu0
    %v253 = vadd.f32 %v128, %v252
    %v254 = vpop.f32.mrf.mxu0
    %v255 = vadd.f32 %v128, %v254
    %256 = vmatmul.bf16.gmra.mxu0 %v171
    %v257 = vpop.f32.mrf.mxu0
    %v258 = vadd.f32 %v128, %v257
    %v259 = vpop.f32.mrf.mxu0
    %v260 = vadd.f32 %v128, %v259
    %261 = vmatmul.bf16.gmra.mxu0 %v174
    %v262 = vpop.f32.mrf.mxu0
    %v263 = vadd.f32 %v128, %v262
    %v264 = vpop.f32.mrf.mxu0
    %v265 = vadd.f32 %v128, %v264
    %266 = vmatmul.bf16.gmra.mxu0 %v177
    %v267 = vpop.f32.mrf.mxu0
    %v268 = vadd.f32 %v128, %v267
    %v269 = vpop.f32.mrf.mxu0
    %v270 = vadd.f32 %v128, %v269
    %271 = vdwg.mxu0
    %272 = vst [vmem:[#allocation2] sm:$0xff] %v193
    %273 = vst [vmem:[#allocation2 + $0x8] sm:$0xff] %v195
    %274 = vst [vmem:[#allocation2 + $0x10] sm:$0xff] %v198
    %275 = vst [vmem:[#allocation2 + $0x18] sm:$0xff] %v200
    %276 = vst [vmem:[#allocation2 + $0x20] sm:$0xff] %v203
    %277 = vst [vmem:[#allocation2 + $0x28] sm:$0xff] %v205
    %278 = vst [vmem:[#allocation2 + $0x30] sm:$0xff] %v208
    %279 = vst [vmem:[#allocation2 + $0x38] sm:$0xff] %v210
    %280 = vst [vmem:[#allocation2 + $0x40] sm:$0xff] %v213
    %281 = vst [vmem:[#allocation2 + $0x48] sm:$0xff] %v215
    %282 = vst [vmem:[#allocation2 + $0x50] sm:$0xff] %v218
    %283 = vst [vmem:[#allocation2 + $0x58] sm:$0xff] %v220
    %284 = vst [vmem:[#allocation2 + $0x60] sm:$0xff] %v223
    %285 = vst [vmem:[#allocation2 + $0x68] sm:$0xff] %v225
    %286 = vst [vmem:[#allocation2 + $0x70] sm:$0xff] %v228
    %287 = vst [vmem:[#allocation2 + $0x78] sm:$0xff] %v230
    %288 = vst [vmem:[#allocation2 + $0x80] sm:$0xff] %v233
    %289 = vst [vmem:[#allocation2 + $0x88] sm:$0xff] %v235
    %290 = vst [vmem:[#allocation2 + $0x90] sm:$0xff] %v238
    %291 = vst [vmem:[#allocation2 + $0x98] sm:$0xff] %v240
    %292 = vst [vmem:[#allocation2 + $0xa0] sm:$0xff] %v243
    %293 = vst [vmem:[#allocation2 + $0xa8] sm:$0xff] %v245
    %294 = vst [vmem:[#allocation2 + $0xb0] sm:$0xff] %v248
    %295 = vst [vmem:[#allocation2 + $0xb8] sm:$0xff] %v250
    %296 = vst [vmem:[#allocation2 + $0xc0] sm:$0xff] %v253
    %297 = vst [vmem:[#allocation2 + $0xc8] sm:$0xff] %v255
    %298 = vst [vmem:[#allocation2 + $0xd0] sm:$0xff] %v258
    %299 = vst [vmem:[#allocation2 + $0xd8] sm:$0xff] %v260
    %300 = vst [vmem:[#allocation2 + $0xe0] sm:$0xff] %v263
    %301 = vst [vmem:[#allocation2 + $0xe8] sm:$0xff] %v265
    %302 = vst [vmem:[#allocation2 + $0xf0] sm:$0xff] %v268
    %303 = vst [vmem:[#allocation2 + $0xf8] sm:$0xff] %v270
    %v304 = vld [vmem:[%s2] sm:$0xf]
    %v305 = vld [vmem:[%s2 + $0x4] sm:$0xf]
    %v306 = vld [vmem:[%s2 + $0x8] sm:$0xf]
    %v307 = vld [vmem:[%s2 + $0xc] sm:$0xf]
    %v308 = vld [vmem:[%s4] sm:$0xf]
    %v309 = vld [vmem:[%s4 + $0x4] sm:$0xf]
    %v310 = vld [vmem:[%s4 + $0x8] sm:$0xf]
    %v311 = vld [vmem:[%s4 + $0xc] sm:$0xf]
    %v312 = vld [vmem:[%s6] sm:$0x1]
    %v313 = vld [vmem:[#allocation2] sm:$0xff]
    %v314 = vld [vmem:[#allocation2 + $0x8] sm:$0xff]
    %v319 = vunpack.c.l.b16 %v304
    %v320 = vunpack.c.l.b16 %v305
    %v321 = vunpack.c.l.b16 %v306
    %v322 = vunpack.c.l.b16 %v307
    %v323 = vpack.c.b16 %v320, %v319
    %v324 = vpack.c.b16 %v322, %v321
    %vm327 = vcmask 261120
    %v329 = vsel %vm327, 0, 0
    %331 = vmatpush.bf16.msra.mxu0 0
    %332 = vmatpush.bf16.msra.mxu0 0
    %333 = vmatpush.bf16.msra.mxu0 0
    %334 = vmatpush.bf16.msra.mxu0 0
    %335 = vmatpush.bf16.msra.mxu0 0
    %336 = vmatpush.bf16.msra.mxu0 0
    %337 = vmatpush.bf16.msra.mxu0 %v324
    %338 = vmatpush.bf16.msra.mxu0 %v323
    %339 = vmatmul.bf16.gmra.mxu0 %v329
    %v340 = vpop.f32.mrf.mxu0
    %v341 = vadd.f32 0.0, %v340
    %v342 = vpop.f32.mrf.mxu0
    %v343 = vadd.f32 0.0, %v342
    %344 = vdwg.mxu0
    %v345 = vadd.f32 %v313, %v341
    %v346 = vadd.f32 %v314, %v343
    %v347 = vxor.u32 %v345, 2147483648
    %v348 = vxor.u32 %v346, 2147483648
    %v349 = vmul.f32 %v347, 1.442695
    %v350 = vpow.pop %v349
    %v351 = vmul.f32 %v348, 1.442695
    %v352 = vpow.pop %v351
    %v353 = vadd.f32 %v350, 1.0
    %v354 = vadd.f32 %v352, 1.0
    %v355 = vrcp.pop %v353
    %v356 = vmul.f32 %v353, %v355
    %v357 = vsub.f32 1.0, %v356
    %v358 = vmul.f32 %v355, %v357
    %v359 = vadd.f32 %v355, %v358
    %vm360 = vweird.f32 %v353
    %vm361 = vweird.f32 %v355
    %vm362 = vmor %vm360, %vm361
    %v363 = vsel %vm362, %v355, %v359
    %v364 = vand.u32 2147483647, %v353
    %vm365 = vcmp.eq.f32.partialorder %v364, 8.507059e+37
    %v366 = vand.u32 %v353, 2147483648
    %v367 = vor.u32 1.1754944e-38, %v366
    %v368 = vsel %vm365, %v367, %v363
    %v369 = vmul.f32 1.0, %v368
    %v370 = vrcp.pop %v354
    %v371 = vmul.f32 %v354, %v370
    %v372 = vsub.f32 1.0, %v371
    %v373 = vmul.f32 %v370, %v372
    %v374 = vadd.f32 %v370, %v373
    %vm375 = vweird.f32 %v354
    %vm376 = vweird.f32 %v370
    %vm377 = vmor %vm375, %vm376
    %v378 = vsel %vm377, %v370, %v374
    %v379 = vand.u32 2147483647, %v354
    %vm380 = vcmp.eq.f32.partialorder %v379, 8.507059e+37
    %v381 = vand.u32 %v354, 2147483648
    %v382 = vor.u32 1.1754944e-38, %v381
    %v383 = vsel %vm380, %v382, %v378
    %v384 = vmul.f32 1.0, %v383
    %v385 = vtanh.pop %v345
    %v386 = vtanh.pop %v346
    %v387 = vmul.f32 %v369, 0.0
    %v388 = vmul.f32 %v384, 0.0
    %391 = vrot.lane.b32.xlu0 %v385, 32
    %v392 = vpop.permute.xlu0 %391
    %393 = vrot.lane.b32.xlu0 %v386, 32
    %v394 = vpop.permute.xlu0 %393
    %v397 = vmul.f32 %v369, %v392
    %v398 = vmul.f32 %v384, %v394
    %401 = vrot.lane.b32.xlu0 %v397, 32
    %v402 = vpop.permute.xlu0 %401
    %403 = vrot.lane.b32.xlu0 %v398, 32
    %v404 = vpop.permute.xlu0 %403
    %v407 = vadd.f32 %v387, %v402
    %v408 = vadd.f32 %v388, %v404
    %v409 = vtanh.pop %v407
    %v410 = vtanh.pop %v408
    %413 = vrot.lane.b32.xlu0 %v409, 32
    %v414 = vpop.permute.xlu0 %413
    %415 = vrot.lane.b32.xlu0 %v410, 32
    %v416 = vpop.permute.xlu0 %415
    %v419 = vmul.f32 %v369, %v414
    %v420 = vmul.f32 %v384, %v416
    %v421 = vpack.c.bf16 %v420, %v419
    %v423 = vperm.slane %v312, 0
    %426 = vrot.lane.b32.xlu0 %v421, 64
    %v427 = vpop.permute.xlu0 %426
    %v432 = vunpack.c.l.b16 %v308
    %v433 = vunpack.c.l.b16 %v309
    %v434 = vunpack.c.l.b16 %v310
    %v435 = vunpack.c.l.b16 %v311
    %v436 = vpack.c.b16 %v433, %v432
    %v437 = vpack.c.b16 %v435, %v434
    %v441 = vsel %vm327, %v427, 0
    %443 = vmatpush.bf16.msra.mxu0 0
    %444 = vmatpush.bf16.msra.mxu0 0
    %445 = vmatpush.bf16.msra.mxu0 0
    %446 = vmatpush.bf16.msra.mxu0 0
    %447 = vmatpush.bf16.msra.mxu0 0
    %448 = vmatpush.bf16.msra.mxu0 0
    %449 = vmatpush.bf16.msra.mxu0 %v437
    %450 = vmatpush.bf16.msra.mxu0 %v436
    %451 = vmatmul.bf16.gmra.mxu0 %v441
    %v452 = vpop.f32.mrf.mxu0
    %v453 = vadd.f32 %v423, %v452
    %v454 = vpop.f32.mrf.mxu0
    %v455 = vadd.f32 %v423, %v454
    %456 = vdwg.mxu0
    %457 = vst [vmem:[#allocation3] sm:$0xff] %v453
    %458 = vst [vmem:[#allocation3 + $0x8] sm:$0xff] %v455
    %v459 = vld [vmem:[#allocation2 + $0x10] sm:$0xff]
    %v460 = vld [vmem:[#allocation2 + $0x18] sm:$0xff]
    %v461 = vadd.f32 %v459, %v341
    %v462 = vadd.f32 %v460, %v343
    %v463 = vxor.u32 %v461, 2147483648
    %v464 = vxor.u32 %v462, 2147483648
    %v465 = vmul.f32 %v463, 1.442695
    %v466 = vpow.pop %v465
    %v467 = vmul.f32 %v464, 1.442695
    %v468 = vpow.pop %v467
    %v469 = vadd.f32 %v466, 1.0
    %v470 = vadd.f32 %v468, 1.0
    %v471 = vrcp.pop %v469
    %v472 = vmul.f32 %v469, %v471
    %v473 = vsub.f32 1.0, %v472
    %v474 = vmul.f32 %v471, %v473
    %v475 = vadd.f32 %v471, %v474
    %vm476 = vweird.f32 %v469
    %vm477 = vweird.f32 %v471
    %vm478 = vmor %vm476, %vm477
    %v479 = vsel %vm478, %v471, %v475
    %v480 = vand.u32 2147483647, %v469
    %vm481 = vcmp.eq.f32.partialorder %v480, 8.507059e+37
    %v482 = vand.u32 %v469, 2147483648
    %v483 = vor.u32 1.1754944e-38, %v482
    %v484 = vsel %vm481, %v483, %v479
    %v485 = vmul.f32 1.0, %v484
    %v486 = vrcp.pop %v470
    %v487 = vmul.f32 %v470, %v486
    %v488 = vsub.f32 1.0, %v487
    %v489 = vmul.f32 %v486, %v488
    %v490 = vadd.f32 %v486, %v489
    %vm491 = vweird.f32 %v470
    %vm492 = vweird.f32 %v486
    %vm493 = vmor %vm491, %vm492
    %v494 = vsel %vm493, %v486, %v490
    %v495 = vand.u32 2147483647, %v470
    %vm496 = vcmp.eq.f32.partialorder %v495, 8.507059e+37
    %v497 = vand.u32 %v470, 2147483648
    %v498 = vor.u32 1.1754944e-38, %v497
    %v499 = vsel %vm496, %v498, %v494
    %v500 = vmul.f32 1.0, %v499
    %v501 = vtanh.pop %v461
    %v502 = vtanh.pop %v462
    %v503 = vmul.f32 %v485, 0.0
    %v504 = vmul.f32 %v500, 0.0
    %507 = vrot.lane.b32.xlu0 %v501, 32
    %v508 = vpop.permute.xlu0 %507
    %509 = vrot.lane.b32.xlu0 %v502, 32
    %v510 = vpop.permute.xlu0 %509
    %v513 = vmul.f32 %v485, %v508
    %v514 = vmul.f32 %v500, %v510
    %517 = vrot.lane.b32.xlu0 %v513, 32
    %v518 = vpop.permute.xlu0 %517
    %519 = vrot.lane.b32.xlu0 %v514, 32
    %v520 = vpop.permute.xlu0 %519
    %v523 = vadd.f32 %v503, %v518
    %v524 = vadd.f32 %v504, %v520
    %v525 = vtanh.pop %v523
    %v526 = vtanh.pop %v524
    %529 = vrot.lane.b32.xlu0 %v525, 32
    %v530 = vpop.permute.xlu0 %529
    %531 = vrot.lane.b32.xlu0 %v526, 32
    %v532 = vpop.permute.xlu0 %531
    %v535 = vmul.f32 %v485, %v530
    %v536 = vmul.f32 %v500, %v532
    %v537 = vpack.c.bf16 %v536, %v535
    %539 = vrot.lane.b32.xlu0 %v537, 64
    %v540 = vpop.permute.xlu0 %539
    %v542 = vsel %vm327, %v540, 0
    %544 = vmatpush.bf16.msra.mxu0 0
    %545 = vmatpush.bf16.msra.mxu0 0
    %546 = vmatpush.bf16.msra.mxu0 0
    %547 = vmatpush.bf16.msra.mxu0 0
    %548 = vmatpush.bf16.msra.mxu0 0
    %549 = vmatpush.bf16.msra.mxu0 0
    %550 = vmatpush.bf16.msra.mxu0 %v437
    %551 = vmatpush.bf16.msra.mxu0 %v436
    %552 = vmatmul.bf16.gmra.mxu0 %v542
    %v553 = vpop.f32.mrf.mxu0
    %v554 = vadd.f32 %v423, %v553
    %v555 = vpop.f32.mrf.mxu0
    %v556 = vadd.f32 %v423, %v555
    %557 = vdwg.mxu0
    %558 = vst [vmem:[#allocation3 + $0x10] sm:$0xff] %v554
    %559 = vst [vmem:[#allocation3 + $0x18] sm:$0xff] %v556
    %v560 = vld [vmem:[#allocation2 + $0x20] sm:$0xff]
    %v561 = vld [vmem:[#allocation2 + $0x28] sm:$0xff]
    %562 = vmatpush.bf16.msra.mxu0 0
    %563 = vmatpush.bf16.msra.mxu0 0
    %564 = vmatpush.bf16.msra.mxu0 0
    %565 = vmatpush.bf16.msra.mxu0 0
    %566 = vmatpush.bf16.msra.mxu0 0
    %567 = vmatpush.bf16.msra.mxu0 0
    %568 = vmatpush.bf16.msra.mxu0 %v324
    %569 = vmatpush.bf16.msra.mxu0 %v323
    %570 = vmatmul.bf16.gmra.mxu0 %v441
    %v571 = vpop.f32.mrf.mxu0
    %v572 = vadd.f32 0.0, %v571
    %v573 = vpop.f32.mrf.mxu0
    %v574 = vadd.f32 0.0, %v573
    %575 = vdwg.mxu0
    %v576 = vadd.f32 %v560, %v572
    %v577 = vadd.f32 %v561, %v574
    %v578 = vxor.u32 %v576, 2147483648
    %v579 = vxor.u32 %v577, 2147483648
    %v580 = vmul.f32 %v578, 1.442695
    %v581 = vpow.pop %v580
    %v582 = vmul.f32 %v579, 1.442695
    %v583 = vpow.pop %v582
    %v584 = vadd.f32 %v581, 1.0
    %v585 = vadd.f32 %v583, 1.0
    %v586 = vrcp.pop %v584
    %v587 = vmul.f32 %v584, %v586
    %v588 = vsub.f32 1.0, %v587
    %v589 = vmul.f32 %v586, %v588
    %v590 = vadd.f32 %v586, %v589
    %vm591 = vweird.f32 %v584
    %vm592 = vweird.f32 %v586
    %vm593 = vmor %vm591, %vm592
    %v594 = vsel %vm593, %v586, %v590
    %v595 = vand.u32 2147483647, %v584
    %vm596 = vcmp.eq.f32.partialorder %v595, 8.507059e+37
    %v597 = vand.u32 %v584, 2147483648
    %v598 = vor.u32 1.1754944e-38, %v597
    %v599 = vsel %vm596, %v598, %v594
    %v600 = vmul.f32 1.0, %v599
    %v601 = vrcp.pop %v585
    %v602 = vmul.f32 %v585, %v601
    %v603 = vsub.f32 1.0, %v602
    %v604 = vmul.f32 %v601, %v603
    %v605 = vadd.f32 %v601, %v604
    %vm606 = vweird.f32 %v585
    %vm607 = vweird.f32 %v601
    %vm608 = vmor %vm606, %vm607
    %v609 = vsel %vm608, %v601, %v605
    %v610 = vand.u32 2147483647, %v585
    %vm611 = vcmp.eq.f32.partialorder %v610, 8.507059e+37
    %v612 = vand.u32 %v585, 2147483648
    %v613 = vor.u32 1.1754944e-38, %v612
    %v614 = vsel %vm611, %v613, %v609
    %v615 = vmul.f32 1.0, %v614
    %v616 = vtanh.pop %v576
    %v617 = vtanh.pop %v577
    %v618 = vmul.f32 %v600, %v407
    %v619 = vmul.f32 %v615, %v408
    %622 = vrot.lane.b32.xlu0 %v616, 32
    %v623 = vpop.permute.xlu0 %622
    %624 = vrot.lane.b32.xlu0 %v617, 32
    %v625 = vpop.permute.xlu0 %624
    %v628 = vmul.f32 %v600, %v623
    %v629 = vmul.f32 %v615, %v625
    %632 = vrot.lane.b32.xlu0 %v628, 32
    %v633 = vpop.permute.xlu0 %632
    %634 = vrot.lane.b32.xlu0 %v629, 32
    %v635 = vpop.permute.xlu0 %634
    %v638 = vadd.f32 %v618, %v633
    %v639 = vadd.f32 %v619, %v635
    %v640 = vtanh.pop %v638
    %v641 = vtanh.pop %v639
    %644 = vrot.lane.b32.xlu0 %v640, 32
    %v645 = vpop.permute.xlu0 %644
    %646 = vrot.lane.b32.xlu0 %v641, 32
    %v647 = vpop.permute.xlu0 %646
    %v650 = vmul.f32 %v600, %v645
    %v651 = vmul.f32 %v615, %v647
    %v652 = vpack.c.bf16 %v651, %v650
    %654 = vrot.lane.b32.xlu0 %v652, 64
    %v655 = vpop.permute.xlu0 %654
    %v657 = vsel %vm327, %v655, 0
    %659 = vmatpush.bf16.msra.mxu0 0
    %660 = vmatpush.bf16.msra.mxu0 0
    %661 = vmatpush.bf16.msra.mxu0 0
    %662 = vmatpush.bf16.msra.mxu0 0
    %663 = vmatpush.bf16.msra.mxu0 0
    %664 = vmatpush.bf16.msra.mxu0 0
    %665 = vmatpush.bf16.msra.mxu0 %v437
    %666 = vmatpush.bf16.msra.mxu0 %v436
    %667 = vmatmul.bf16.gmra.mxu0 %v657
    %v668 = vpop.f32.mrf.mxu0
    %v669 = vadd.f32 %v423, %v668
    %v670 = vpop.f32.mrf.mxu0
    %v671 = vadd.f32 %v423, %v670
    %672 = vdwg.mxu0
    %673 = vst [vmem:[#allocation3 + $0x20] sm:$0xff] %v669
    %674 = vst [vmem:[#allocation3 + $0x28] sm:$0xff] %v671
    %v675 = vld [vmem:[#allocation2 + $0x30] sm:$0xff]
    %v676 = vld [vmem:[#allocation2 + $0x38] sm:$0xff]
    %677 = vmatpush.bf16.msra.mxu0 0
    %678 = vmatpush.bf16.msra.mxu0 0
    %679 = vmatpush.bf16.msra.mxu0 0
    %680 = vmatpush.bf16.msra.mxu0 0
    %681 = vmatpush.bf16.msra.mxu0 0
    %682 = vmatpush.bf16.msra.mxu0 0
    %683 = vmatpush.bf16.msra.mxu0 %v324
    %684 = vmatpush.bf16.msra.mxu0 %v323
    %685 = vmatmul.bf16.gmra.mxu0 %v542
    %v686 = vpop.f32.mrf.mxu0
    %v687 = vadd.f32 0.0, %v686
    %v688 = vpop.f32.mrf.mxu0
    %v689 = vadd.f32 0.0, %v688
    %690 = vdwg.mxu0
    %v691 = vadd.f32 %v675, %v687
    %v692 = vadd.f32 %v676, %v689
    %v693 = vxor.u32 %v691, 2147483648
    %v694 = vxor.u32 %v692, 2147483648
    %v695 = vmul.f32 %v693, 1.442695
    %v696 = vpow.pop %v695
    %v697 = vmul.f32 %v694, 1.442695
    %v698 = vpow.pop %v697
    %v699 = vadd.f32 %v696, 1.0
    %v700 = vadd.f32 %v698, 1.0
    %v701 = vrcp.pop %v699
    %v702 = vmul.f32 %v699, %v701
    %v703 = vsub.f32 1.0, %v702
    %v704 = vmul.f32 %v701, %v703
    %v705 = vadd.f32 %v701, %v704
    %vm706 = vweird.f32 %v699
    %vm707 = vweird.f32 %v701
    %vm708 = vmor %vm706, %vm707
    %v709 = vsel %vm708, %v701, %v705
    %v710 = vand.u32 2147483647, %v699
    %vm711 = vcmp.eq.f32.partialorder %v710, 8.507059e+37
    %v712 = vand.u32 %v699, 2147483648
    %v713 = vor.u32 1.1754944e-38, %v712
    %v714 = vsel %vm711, %v713, %v709
    %v715 = vmul.f32 1.0, %v714
    %v716 = vrcp.pop %v700
    %v717 = vmul.f32 %v700, %v716
    %v718 = vsub.f32 1.0, %v717
    %v719 = vmul.f32 %v716, %v718
    %v720 = vadd.f32 %v716, %v719
    %vm721 = vweird.f32 %v700
    %vm722 = vweird.f32 %v716
    %vm723 = vmor %vm721, %vm722
    %v724 = vsel %vm723, %v716, %v720
    %v725 = vand.u32 2147483647, %v700
    %vm726 = vcmp.eq.f32.partialorder %v725, 8.507059e+37
    %v727 = vand.u32 %v700, 2147483648
    %v728 = vor.u32 1.1754944e-38, %v727
    %v729 = vsel %vm726, %v728, %v724
    %v730 = vmul.f32 1.0, %v729
    %v731 = vtanh.pop %v691
    %v732 = vtanh.pop %v692
    %v733 = vmul.f32 %v715, %v523
    %v734 = vmul.f32 %v730, %v524
    %737 = vrot.lane.b32.xlu0 %v731, 32
    %v738 = vpop.permute.xlu0 %737
    %739 = vrot.lane.b32.xlu0 %v732, 32
    %v740 = vpop.permute.xlu0 %739
    %v743 = vmul.f32 %v715, %v738
    %v744 = vmul.f32 %v730, %v740
    %747 = vrot.lane.b32.xlu0 %v743, 32
    %v748 = vpop.permute.xlu0 %747
    %749 = vrot.lane.b32.xlu0 %v744, 32
    %v750 = vpop.permute.xlu0 %749
    %v753 = vadd.f32 %v733, %v748
    %v754 = vadd.f32 %v734, %v750
    %v755 = vtanh.pop %v753
    %v756 = vtanh.pop %v754
    %759 = vrot.lane.b32.xlu0 %v755, 32
    %v760 = vpop.permute.xlu0 %759
    %761 = vrot.lane.b32.xlu0 %v756, 32
    %v762 = vpop.permute.xlu0 %761
    %v765 = vmul.f32 %v715, %v760
    %v766 = vmul.f32 %v730, %v762
    %v767 = vpack.c.bf16 %v766, %v765
    %769 = vrot.lane.b32.xlu0 %v767, 64
    %v770 = vpop.permute.xlu0 %769
    %v772 = vsel %vm327, %v770, 0
    %774 = vmatpush.bf16.msra.mxu0 0
    %775 = vmatpush.bf16.msra.mxu0 0
    %776 = vmatpush.bf16.msra.mxu0 0
    %777 = vmatpush.bf16.msra.mxu0 0
    %778 = vmatpush.bf16.msra.mxu0 0
    %779 = vmatpush.bf16.msra.mxu0 0
    %780 = vmatpush.bf16.msra.mxu0 %v437
    %781 = vmatpush.bf16.msra.mxu0 %v436
    %782 = vmatmul.bf16.gmra.mxu0 %v772
    %v783 = vpop.f32.mrf.mxu0
    %v784 = vadd.f32 %v423, %v783
    %v785 = vpop.f32.mrf.mxu0
    %v786 = vadd.f32 %v423, %v785
    %787 = vdwg.mxu0
    %788 = vst [vmem:[#allocation3 + $0x30] sm:$0xff] %v784
    %789 = vst [vmem:[#allocation3 + $0x38] sm:$0xff] %v786
    %v790 = vld [vmem:[#allocation2 + $0x40] sm:$0xff]
    %v791 = vld [vmem:[#allocation2 + $0x48] sm:$0xff]
    %792 = vmatpush.bf16.msra.mxu0 0
    %793 = vmatpush.bf16.msra.mxu0 0
    %794 = vmatpush.bf16.msra.mxu0 0
    %795 = vmatpush.bf16.msra.mxu0 0
    %796 = vmatpush.bf16.msra.mxu0 0
    %797 = vmatpush.bf16.msra.mxu0 0
    %798 = vmatpush.bf16.msra.mxu0 %v324
    %799 = vmatpush.bf16.msra.mxu0 %v323
    %800 = vmatmul.bf16.gmra.mxu0 %v657
    %v801 = vpop.f32.mrf.mxu0
    %v802 = vadd.f32 0.0, %v801
    %v803 = vpop.f32.mrf.mxu0
    %v804 = vadd.f32 0.0, %v803
    %805 = vdwg.mxu0
    %v806 = vadd.f32 %v790, %v802
    %v807 = vadd.f32 %v791, %v804
    %v808 = vxor.u32 %v806, 2147483648
    %v809 = vxor.u32 %v807, 2147483648
    %v810 = vmul.f32 %v808, 1.442695
    %v811 = vpow.pop %v810
    %v812 = vmul.f32 %v809, 1.442695
    %v813 = vpow.pop %v812
    %v814 = vadd.f32 %v811, 1.0
    %v815 = vadd.f32 %v813, 1.0
    %v816 = vrcp.pop %v814
    %v817 = vmul.f32 %v814, %v816
    %v818 = vsub.f32 1.0, %v817
    %v819 = vmul.f32 %v816, %v818
    %v820 = vadd.f32 %v816, %v819
    %vm821 = vweird.f32 %v814
    %vm822 = vweird.f32 %v816
    %vm823 = vmor %vm821, %vm822
    %v824 = vsel %vm823, %v816, %v820
    %v825 = vand.u32 2147483647, %v814
    %vm826 = vcmp.eq.f32.partialorder %v825, 8.507059e+37
    %v827 = vand.u32 %v814, 2147483648
    %v828 = vor.u32 1.1754944e-38, %v827
    %v829 = vsel %vm826, %v828, %v824
    %v830 = vmul.f32 1.0, %v829
    %v831 = vrcp.pop %v815
    %v832 = vmul.f32 %v815, %v831
    %v833 = vsub.f32 1.0, %v832
    %v834 = vmul.f32 %v831, %v833
    %v835 = vadd.f32 %v831, %v834
    %vm836 = vweird.f32 %v815
    %vm837 = vweird.f32 %v831
    %vm838 = vmor %vm836, %vm837
    %v839 = vsel %vm838, %v831, %v835
    %v840 = vand.u32 2147483647, %v815
    %vm841 = vcmp.eq.f32.partialorder %v840, 8.507059e+37
    %v842 = vand.u32 %v815, 2147483648
    %v843 = vor.u32 1.1754944e-38, %v842
    %v844 = vsel %vm841, %v843, %v839
    %v845 = vmul.f32 1.0, %v844
    %v846 = vtanh.pop %v806
    %v847 = vtanh.pop %v807
    %v848 = vmul.f32 %v830, %v638
    %v849 = vmul.f32 %v845, %v639
    %852 = vrot.lane.b32.xlu0 %v846, 32
    %v853 = vpop.permute.xlu0 %852
    %854 = vrot.lane.b32.xlu0 %v847, 32
    %v855 = vpop.permute.xlu0 %854
    %v858 = vmul.f32 %v830, %v853
    %v859 = vmul.f32 %v845, %v855
    %862 = vrot.lane.b32.xlu0 %v858, 32
    %v863 = vpop.permute.xlu0 %862
    %864 = vrot.lane.b32.xlu0 %v859, 32
    %v865 = vpop.permute.xlu0 %864
    %v868 = vadd.f32 %v848, %v863
    %v869 = vadd.f32 %v849, %v865
    %v870 = vtanh.pop %v868
    %v871 = vtanh.pop %v869
    %874 = vrot.lane.b32.xlu0 %v870, 32
    %v875 = vpop.permute.xlu0 %874
    %876 = vrot.lane.b32.xlu0 %v871, 32
    %v877 = vpop.permute.xlu0 %876
    %v880 = vmul.f32 %v830, %v875
    %v881 = vmul.f32 %v845, %v877
    %v882 = vpack.c.bf16 %v881, %v880
    %884 = vrot.lane.b32.xlu0 %v882, 64
    %v885 = vpop.permute.xlu0 %884
    %v887 = vsel %vm327, %v885, 0
    %889 = vmatpush.bf16.msra.mxu0 0
    %890 = vmatpush.bf16.msra.mxu0 0
    %891 = vmatpush.bf16.msra.mxu0 0
    %892 = vmatpush.bf16.msra.mxu0 0
    %893 = vmatpush.bf16.msra.mxu0 0
    %894 = vmatpush.bf16.msra.mxu0 0
    %895 = vmatpush.bf16.msra.mxu0 %v437
    %896 = vmatpush.bf16.msra.mxu0 %v436
    %897 = vmatmul.bf16.gmra.mxu0 %v887
    %v898 = vpop.f32.mrf.mxu0
    %v899 = vadd.f32 %v423, %v898
    %v900 = vpop.f32.mrf.mxu0
    %v901 = vadd.f32 %v423, %v900
    %902 = vdwg.mxu0
    %903 = vst [vmem:[#allocation3 + $0x40] sm:$0xff] %v899
    %904 = vst [vmem:[#allocation3 + $0x48] sm:$0xff] %v901
    %v905 = vld [vmem:[#allocation2 + $0x50] sm:$0xff]
    %v906 = vld [vmem:[#allocation2 + $0x58] sm:$0xff]
    %907 = vmatpush.bf16.msra.mxu0 0
    %908 = vmatpush.bf16.msra.mxu0 0
    %909 = vmatpush.bf16.msra.mxu0 0
    %910 = vmatpush.bf16.msra.mxu0 0
    %911 = vmatpush.bf16.msra.mxu0 0
    %912 = vmatpush.bf16.msra.mxu0 0
    %913 = vmatpush.bf16.msra.mxu0 %v324
    %914 = vmatpush.bf16.msra.mxu0 %v323
    %915 = vmatmul.bf16.gmra.mxu0 %v772
    %v916 = vpop.f32.mrf.mxu0
    %v917 = vadd.f32 0.0, %v916
    %v918 = vpop.f32.mrf.mxu0
    %v919 = vadd.f32 0.0, %v918
    %920 = vdwg.mxu0
    %v921 = vadd.f32 %v905, %v917
    %v922 = vadd.f32 %v906, %v919
    %v923 = vxor.u32 %v921, 2147483648
    %v924 = vxor.u32 %v922, 2147483648
    %v925 = vmul.f32 %v923, 1.442695
    %v926 = vpow.pop %v925
    %v927 = vmul.f32 %v924, 1.442695
    %v928 = vpow.pop %v927
    %v929 = vadd.f32 %v926, 1.0
    %v930 = vadd.f32 %v928, 1.0
    %v931 = vrcp.pop %v929
    %v932 = vmul.f32 %v929, %v931
    %v933 = vsub.f32 1.0, %v932
    %v934 = vmul.f32 %v931, %v933
    %v935 = vadd.f32 %v931, %v934
    %vm936 = vweird.f32 %v929
    %vm937 = vweird.f32 %v931
    %vm938 = vmor %vm936, %vm937
    %v939 = vsel %vm938, %v931, %v935
    %v940 = vand.u32 2147483647, %v929
    %vm941 = vcmp.eq.f32.partialorder %v940, 8.507059e+37
    %v942 = vand.u32 %v929, 2147483648
    %v943 = vor.u32 1.1754944e-38, %v942
    %v944 = vsel %vm941, %v943, %v939
    %v945 = vmul.f32 1.0, %v944
    %v946 = vrcp.pop %v930
    %v947 = vmul.f32 %v930, %v946
    %v948 = vsub.f32 1.0, %v947
    %v949 = vmul.f32 %v946, %v948
    %v950 = vadd.f32 %v946, %v949
    %vm951 = vweird.f32 %v930
    %vm952 = vweird.f32 %v946
    %vm953 = vmor %vm951, %vm952
    %v954 = vsel %vm953, %v946, %v950
    %v955 = vand.u32 2147483647, %v930
    %vm956 = vcmp.eq.f32.partialorder %v955, 8.507059e+37
    %v957 = vand.u32 %v930, 2147483648
    %v958 = vor.u32 1.1754944e-38, %v957
    %v959 = vsel %vm956, %v958, %v954
    %v960 = vmul.f32 1.0, %v959
    %v961 = vtanh.pop %v921
    %v962 = vtanh.pop %v922
    %v963 = vmul.f32 %v945, %v753
    %v964 = vmul.f32 %v960, %v754
    %967 = vrot.lane.b32.xlu0 %v961, 32
    %v968 = vpop.permute.xlu0 %967
    %969 = vrot.lane.b32.xlu0 %v962, 32
    %v970 = vpop.permute.xlu0 %969
    %v973 = vmul.f32 %v945, %v968
    %v974 = vmul.f32 %v960, %v970
    %977 = vrot.lane.b32.xlu0 %v973, 32
    %v978 = vpop.permute.xlu0 %977
    %979 = vrot.lane.b32.xlu0 %v974, 32
    %v980 = vpop.permute.xlu0 %979
    %v983 = vadd.f32 %v963, %v978
    %v984 = vadd.f32 %v964, %v980
    %v985 = vtanh.pop %v983
    %v986 = vtanh.pop %v984
    %989 = vrot.lane.b32.xlu0 %v985, 32
    %v990 = vpop.permute.xlu0 %989
    %991 = vrot.lane.b32.xlu0 %v986, 32
    %v992 = vpop.permute.xlu0 %991
    %v995 = vmul.f32 %v945, %v990
    %v996 = vmul.f32 %v960, %v992
    %v997 = vpack.c.bf16 %v996, %v995
    %999 = vrot.lane.b32.xlu0 %v997, 64
    %v1000 = vpop.permute.xlu0 %999
    %v1002 = vsel %vm327, %v1000, 0
    %1004 = vmatpush.bf16.msra.mxu0 0
    %1005 = vmatpush.bf16.msra.mxu0 0
    %1006 = vmatpush.bf16.msra.mxu0 0
    %1007 = vmatpush.bf16.msra.mxu0 0
    %1008 = vmatpush.bf16.msra.mxu0 0
    %1009 = vmatpush.bf16.msra.mxu0 0
    %1010 = vmatpush.bf16.msra.mxu0 %v437
    %1011 = vmatpush.bf16.msra.mxu0 %v436
    %1012 = vmatmul.bf16.gmra.mxu0 %v1002
    %v1013 = vpop.f32.mrf.mxu0
    %v1014 = vadd.f32 %v423, %v1013
    %v1015 = vpop.f32.mrf.mxu0
    %v1016 = vadd.f32 %v423, %v1015
    %1017 = vdwg.mxu0
    %1018 = vst [vmem:[#allocation3 + $0x50] sm:$0xff] %v1014
    %1019 = vst [vmem:[#allocation3 + $0x58] sm:$0xff] %v1016
    %v1020 = vld [vmem:[#allocation2 + $0x60] sm:$0xff]
    %v1021 = vld [vmem:[#allocation2 + $0x68] sm:$0xff]
    %1022 = vmatpush.bf16.msra.mxu0 0
    %1023 = vmatpush.bf16.msra.mxu0 0
    %1024 = vmatpush.bf16.msra.mxu0 0
    %1025 = vmatpush.bf16.msra.mxu0 0
    %1026 = vmatpush.bf16.msra.mxu0 0
    %1027 = vmatpush.bf16.msra.mxu0 0
    %1028 = vmatpush.bf16.msra.mxu0 %v324
    %1029 = vmatpush.bf16.msra.mxu0 %v323
    %1030 = vmatmul.bf16.gmra.mxu0 %v887
    %v1031 = vpop.f32.mrf.mxu0
    %v1032 = vadd.f32 0.0, %v1031
    %v1033 = vpop.f32.mrf.mxu0
    %v1034 = vadd.f32 0.0, %v1033
    %1035 = vdwg.mxu0
    %v1036 = vadd.f32 %v1020, %v1032
    %v1037 = vadd.f32 %v1021, %v1034
    %v1038 = vxor.u32 %v1036, 2147483648
    %v1039 = vxor.u32 %v1037, 2147483648
    %v1040 = vmul.f32 %v1038, 1.442695
    %v1041 = vpow.pop %v1040
    %v1042 = vmul.f32 %v1039, 1.442695
    %v1043 = vpow.pop %v1042
    %v1044 = vadd.f32 %v1041, 1.0
    %v1045 = vadd.f32 %v1043, 1.0
    %v1046 = vrcp.pop %v1044
    %v1047 = vmul.f32 %v1044, %v1046
    %v1048 = vsub.f32 1.0, %v1047
    %v1049 = vmul.f32 %v1046, %v1048
    %v1050 = vadd.f32 %v1046, %v1049
    %vm1051 = vweird.f32 %v1044
    %vm1052 = vweird.f32 %v1046
    %vm1053 = vmor %vm1051, %vm1052
    %v1054 = vsel %vm1053, %v1046, %v1050
    %v1055 = vand.u32 2147483647, %v1044
    %vm1056 = vcmp.eq.f32.partialorder %v1055, 8.507059e+37
    %v1057 = vand.u32 %v1044, 2147483648
    %v1058 = vor.u32 1.1754944e-38, %v1057
    %v1059 = vsel %vm1056, %v1058, %v1054
    %v1060 = vmul.f32 1.0, %v1059
    %v1061 = vrcp.pop %v1045
    %v1062 = vmul.f32 %v1045, %v1061
    %v1063 = vsub.f32 1.0, %v1062
    %v1064 = vmul.f32 %v1061, %v1063
    %v1065 = vadd.f32 %v1061, %v1064
    %vm1066 = vweird.f32 %v1045
    %vm1067 = vweird.f32 %v1061
    %vm1068 = vmor %vm1066, %vm1067
    %v1069 = vsel %vm1068, %v1061, %v1065
    %v1070 = vand.u32 2147483647, %v1045
    %vm1071 = vcmp.eq.f32.partialorder %v1070, 8.507059e+37
    %v1072 = vand.u32 %v1045, 2147483648
    %v1073 = vor.u32 1.1754944e-38, %v1072
    %v1074 = vsel %vm1071, %v1073, %v1069
    %v1075 = vmul.f32 1.0, %v1074
    %v1076 = vtanh.pop %v1036
    %v1077 = vtanh.pop %v1037
    %v1078 = vmul.f32 %v1060, %v868
    %v1079 = vmul.f32 %v1075, %v869
    %1082 = vrot.lane.b32.xlu0 %v1076, 32
    %v1083 = vpop.permute.xlu0 %1082
    %1084 = vrot.lane.b32.xlu0 %v1077, 32
    %v1085 = vpop.permute.xlu0 %1084
    %v1088 = vmul.f32 %v1060, %v1083
    %v1089 = vmul.f32 %v1075, %v1085
    %1092 = vrot.lane.b32.xlu0 %v1088, 32
    %v1093 = vpop.permute.xlu0 %1092
    %1094 = vrot.lane.b32.xlu0 %v1089, 32
    %v1095 = vpop.permute.xlu0 %1094
    %v1098 = vadd.f32 %v1078, %v1093
    %v1099 = vadd.f32 %v1079, %v1095
    %v1100 = vtanh.pop %v1098
    %v1101 = vtanh.pop %v1099
    %1104 = vrot.lane.b32.xlu0 %v1100, 32
    %v1105 = vpop.permute.xlu0 %1104
    %1106 = vrot.lane.b32.xlu0 %v1101, 32
    %v1107 = vpop.permute.xlu0 %1106
    %v1110 = vmul.f32 %v1060, %v1105
    %v1111 = vmul.f32 %v1075, %v1107
    %v1112 = vpack.c.bf16 %v1111, %v1110
    %1114 = vrot.lane.b32.xlu0 %v1112, 64
    %v1115 = vpop.permute.xlu0 %1114
    %v1117 = vsel %vm327, %v1115, 0
    %1119 = vmatpush.bf16.msra.mxu0 0
    %1120 = vmatpush.bf16.msra.mxu0 0
    %1121 = vmatpush.bf16.msra.mxu0 0
    %1122 = vmatpush.bf16.msra.mxu0 0
    %1123 = vmatpush.bf16.msra.mxu0 0
    %1124 = vmatpush.bf16.msra.mxu0 0
    %1125 = vmatpush.bf16.msra.mxu0 %v437
    %1126 = vmatpush.bf16.msra.mxu0 %v436
    %1127 = vmatmul.bf16.gmra.mxu0 %v1117
    %v1128 = vpop.f32.mrf.mxu0
    %v1129 = vadd.f32 %v423, %v1128
    %v1130 = vpop.f32.mrf.mxu0
    %v1131 = vadd.f32 %v423, %v1130
    %1132 = vdwg.mxu0
    %1133 = vst [vmem:[#allocation3 + $0x60] sm:$0xff] %v1129
    %1134 = vst [vmem:[#allocation3 + $0x68] sm:$0xff] %v1131
    %v1135 = vld [vmem:[#allocation2 + $0x70] sm:$0xff]
    %v1136 = vld [vmem:[#allocation2 + $0x78] sm:$0xff]
    %1137 = vmatpush.bf16.msra.mxu0 0
    %1138 = vmatpush.bf16.msra.mxu0 0
    %1139 = vmatpush.bf16.msra.mxu0 0
    %1140 = vmatpush.bf16.msra.mxu0 0
    %1141 = vmatpush.bf16.msra.mxu0 0
    %1142 = vmatpush.bf16.msra.mxu0 0
    %1143 = vmatpush.bf16.msra.mxu0 %v324
    %1144 = vmatpush.bf16.msra.mxu0 %v323
    %1145 = vmatmul.bf16.gmra.mxu0 %v1002
    %v1146 = vpop.f32.mrf.mxu0
    %v1147 = vadd.f32 0.0, %v1146
    %v1148 = vpop.f32.mrf.mxu0
    %v1149 = vadd.f32 0.0, %v1148
    %1150 = vdwg.mxu0
    %v1151 = vadd.f32 %v1135, %v1147
    %v1152 = vadd.f32 %v1136, %v1149
    %v1153 = vxor.u32 %v1151, 2147483648
    %v1154 = vxor.u32 %v1152, 2147483648
    %v1155 = vmul.f32 %v1153, 1.442695
    %v1156 = vpow.pop %v1155
    %v1157 = vmul.f32 %v1154, 1.442695
    %v1158 = vpow.pop %v1157
    %v1159 = vadd.f32 %v1156, 1.0
    %v1160 = vadd.f32 %v1158, 1.0
    %v1161 = vrcp.pop %v1159
    %v1162 = vmul.f32 %v1159, %v1161
    %v1163 = vsub.f32 1.0, %v1162
    %v1164 = vmul.f32 %v1161, %v1163
    %v1165 = vadd.f32 %v1161, %v1164
    %vm1166 = vweird.f32 %v1159
    %vm1167 = vweird.f32 %v1161
    %vm1168 = vmor %vm1166, %vm1167
    %v1169 = vsel %vm1168, %v1161, %v1165
    %v1170 = vand.u32 2147483647, %v1159
    %vm1171 = vcmp.eq.f32.partialorder %v1170, 8.507059e+37
    %v1172 = vand.u32 %v1159, 2147483648
    %v1173 = vor.u32 1.1754944e-38, %v1172
    %v1174 = vsel %vm1171, %v1173, %v1169
    %v1175 = vmul.f32 1.0, %v1174
    %v1176 = vrcp.pop %v1160
    %v1177 = vmul.f32 %v1160, %v1176
    %v1178 = vsub.f32 1.0, %v1177
    %v1179 = vmul.f32 %v1176, %v1178
    %v1180 = vadd.f32 %v1176, %v1179
    %vm1181 = vweird.f32 %v1160
    %vm1182 = vweird.f32 %v1176
    %vm1183 = vmor %vm1181, %vm1182
    %v1184 = vsel %vm1183, %v1176, %v1180
    %v1185 = vand.u32 2147483647, %v1160
    %vm1186 = vcmp.eq.f32.partialorder %v1185, 8.507059e+37
    %v1187 = vand.u32 %v1160, 2147483648
    %v1188 = vor.u32 1.1754944e-38, %v1187
    %v1189 = vsel %vm1186, %v1188, %v1184
    %v1190 = vmul.f32 1.0, %v1189
    %v1191 = vtanh.pop %v1151
    %v1192 = vtanh.pop %v1152
    %v1193 = vmul.f32 %v1175, %v983
    %v1194 = vmul.f32 %v1190, %v984
    %1197 = vrot.lane.b32.xlu0 %v1191, 32
    %v1198 = vpop.permute.xlu0 %1197
    %1199 = vrot.lane.b32.xlu0 %v1192, 32
    %v1200 = vpop.permute.xlu0 %1199
    %v1203 = vmul.f32 %v1175, %v1198
    %v1204 = vmul.f32 %v1190, %v1200
    %1207 = vrot.lane.b32.xlu0 %v1203, 32
    %v1208 = vpop.permute.xlu0 %1207
    %1209 = vrot.lane.b32.xlu0 %v1204, 32
    %v1210 = vpop.permute.xlu0 %1209
    %v1213 = vadd.f32 %v1193, %v1208
    %v1214 = vadd.f32 %v1194, %v1210
    %v1215 = vtanh.pop %v1213
    %v1216 = vtanh.pop %v1214
    %1219 = vrot.lane.b32.xlu0 %v1215, 32
    %v1220 = vpop.permute.xlu0 %1219
    %1221 = vrot.lane.b32.xlu0 %v1216, 32
    %v1222 = vpop.permute.xlu0 %1221
    %v1225 = vmul.f32 %v1175, %v1220
    %v1226 = vmul.f32 %v1190, %v1222
    %v1227 = vpack.c.bf16 %v1226, %v1225
    %1229 = vrot.lane.b32.xlu0 %v1227, 64
    %v1230 = vpop.permute.xlu0 %1229
    %v1232 = vsel %vm327, %v1230, 0
    %1234 = vmatpush.bf16.msra.mxu0 0
    %1235 = vmatpush.bf16.msra.mxu0 0
    %1236 = vmatpush.bf16.msra.mxu0 0
    %1237 = vmatpush.bf16.msra.mxu0 0
    %1238 = vmatpush.bf16.msra.mxu0 0
    %1239 = vmatpush.bf16.msra.mxu0 0
    %1240 = vmatpush.bf16.msra.mxu0 %v437
    %1241 = vmatpush.bf16.msra.mxu0 %v436
    %1242 = vmatmul.bf16.gmra.mxu0 %v1232
    %v1243 = vpop.f32.mrf.mxu0
    %v1244 = vadd.f32 %v423, %v1243
    %v1245 = vpop.f32.mrf.mxu0
    %v1246 = vadd.f32 %v423, %v1245
    %1247 = vdwg.mxu0
    %1248 = vst [vmem:[#allocation3 + $0x70] sm:$0xff] %v1244
    %1249 = vst [vmem:[#allocation3 + $0x78] sm:$0xff] %v1246
    %v1250 = vld [vmem:[#allocation2 + $0x80] sm:$0xff]
    %v1251 = vld [vmem:[#allocation2 + $0x88] sm:$0xff]
    %1252 = vmatpush.bf16.msra.mxu0 0
    %1253 = vmatpush.bf16.msra.mxu0 0
    %1254 = vmatpush.bf16.msra.mxu0 0
    %1255 = vmatpush.bf16.msra.mxu0 0
    %1256 = vmatpush.bf16.msra.mxu0 0
    %1257 = vmatpush.bf16.msra.mxu0 0
    %1258 = vmatpush.bf16.msra.mxu0 %v324
    %1259 = vmatpush.bf16.msra.mxu0 %v323
    %1260 = vmatmul.bf16.gmra.mxu0 %v1117
    %v1261 = vpop.f32.mrf.mxu0
    %v1262 = vadd.f32 0.0, %v1261
    %v1263 = vpop.f32.mrf.mxu0
    %v1264 = vadd.f32 0.0, %v1263
    %1265 = vdwg.mxu0
    %v1266 = vadd.f32 %v1250, %v1262
    %v1267 = vadd.f32 %v1251, %v1264
    %v1268 = vxor.u32 %v1266, 2147483648
    %v1269 = vxor.u32 %v1267, 2147483648
    %v1270 = vmul.f32 %v1268, 1.442695
    %v1271 = vpow.pop %v1270
    %v1272 = vmul.f32 %v1269, 1.442695
    %v1273 = vpow.pop %v1272
    %v1274 = vadd.f32 %v1271, 1.0
    %v1275 = vadd.f32 %v1273, 1.0
    %v1276 = vrcp.pop %v1274
    %v1277 = vmul.f32 %v1274, %v1276
    %v1278 = vsub.f32 1.0, %v1277
    %v1279 = vmul.f32 %v1276, %v1278
    %v1280 = vadd.f32 %v1276, %v1279
    %vm1281 = vweird.f32 %v1274
    %vm1282 = vweird.f32 %v1276
    %vm1283 = vmor %vm1281, %vm1282
    %v1284 = vsel %vm1283, %v1276, %v1280
    %v1285 = vand.u32 2147483647, %v1274
    %vm1286 = vcmp.eq.f32.partialorder %v1285, 8.507059e+37
    %v1287 = vand.u32 %v1274, 2147483648
    %v1288 = vor.u32 1.1754944e-38, %v1287
    %v1289 = vsel %vm1286, %v1288, %v1284
    %v1290 = vmul.f32 1.0, %v1289
    %v1291 = vrcp.pop %v1275
    %v1292 = vmul.f32 %v1275, %v1291
    %v1293 = vsub.f32 1.0, %v1292
    %v1294 = vmul.f32 %v1291, %v1293
    %v1295 = vadd.f32 %v1291, %v1294
    %vm1296 = vweird.f32 %v1275
    %vm1297 = vweird.f32 %v1291
    %vm1298 = vmor %vm1296, %vm1297
    %v1299 = vsel %vm1298, %v1291, %v1295
    %v1300 = vand.u32 2147483647, %v1275
    %vm1301 = vcmp.eq.f32.partialorder %v1300, 8.507059e+37
    %v1302 = vand.u32 %v1275, 2147483648
    %v1303 = vor.u32 1.1754944e-38, %v1302
    %v1304 = vsel %vm1301, %v1303, %v1299
    %v1305 = vmul.f32 1.0, %v1304
    %v1306 = vtanh.pop %v1266
    %v1307 = vtanh.pop %v1267
    %v1308 = vmul.f32 %v1290, %v1098
    %v1309 = vmul.f32 %v1305, %v1099
    %1312 = vrot.lane.b32.xlu0 %v1306, 32
    %v1313 = vpop.permute.xlu0 %1312
    %1314 = vrot.lane.b32.xlu0 %v1307, 32
    %v1315 = vpop.permute.xlu0 %1314
    %v1318 = vmul.f32 %v1290, %v1313
    %v1319 = vmul.f32 %v1305, %v1315
    %1322 = vrot.lane.b32.xlu0 %v1318, 32
    %v1323 = vpop.permute.xlu0 %1322
    %1324 = vrot.lane.b32.xlu0 %v1319, 32
    %v1325 = vpop.permute.xlu0 %1324
    %v1328 = vadd.f32 %v1308, %v1323
    %v1329 = vadd.f32 %v1309, %v1325
    %v1330 = vtanh.pop %v1328
    %v1331 = vtanh.pop %v1329
    %1334 = vrot.lane.b32.xlu0 %v1330, 32
    %v1335 = vpop.permute.xlu0 %1334
    %1336 = vrot.lane.b32.xlu0 %v1331, 32
    %v1337 = vpop.permute.xlu0 %1336
    %v1340 = vmul.f32 %v1290, %v1335
    %v1341 = vmul.f32 %v1305, %v1337
    %v1342 = vpack.c.bf16 %v1341, %v1340
    %1344 = vrot.lane.b32.xlu0 %v1342, 64
    %v1345 = vpop.permute.xlu0 %1344
    %v1347 = vsel %vm327, %v1345, 0
    %1349 = vmatpush.bf16.msra.mxu0 0
    %1350 = vmatpush.bf16.msra.mxu0 0
    %1351 = vmatpush.bf16.msra.mxu0 0
    %1352 = vmatpush.bf16.msra.mxu0 0
    %1353 = vmatpush.bf16.msra.mxu0 0
    %1354 = vmatpush.bf16.msra.mxu0 0
    %1355 = vmatpush.bf16.msra.mxu0 %v437
    %1356 = vmatpush.bf16.msra.mxu0 %v436
    %1357 = vmatmul.bf16.gmra.mxu0 %v1347
    %v1358 = vpop.f32.mrf.mxu0
    %v1359 = vadd.f32 %v423, %v1358
    %v1360 = vpop.f32.mrf.mxu0
    %v1361 = vadd.f32 %v423, %v1360
    %1362 = vdwg.mxu0
    %1363 = vst [vmem:[#allocation3 + $0x80] sm:$0xff] %v1359
    %1364 = vst [vmem:[#allocation3 + $0x88] sm:$0xff] %v1361
    %v1365 = vld [vmem:[#allocation2 + $0x90] sm:$0xff]
    %v1366 = vld [vmem:[#allocation2 + $0x98] sm:$0xff]
    %1367 = vmatpush.bf16.msra.mxu0 0
    %1368 = vmatpush.bf16.msra.mxu0 0
    %1369 = vmatpush.bf16.msra.mxu0 0
    %1370 = vmatpush.bf16.msra.mxu0 0
    %1371 = vmatpush.bf16.msra.mxu0 0
    %1372 = vmatpush.bf16.msra.mxu0 0
    %1373 = vmatpush.bf16.msra.mxu0 %v324
    %1374 = vmatpush.bf16.msra.mxu0 %v323
    %1375 = vmatmul.bf16.gmra.mxu0 %v1232
    %v1376 = vpop.f32.mrf.mxu0
    %v1377 = vadd.f32 0.0, %v1376
    %v1378 = vpop.f32.mrf.mxu0
    %v1379 = vadd.f32 0.0, %v1378
    %1380 = vdwg.mxu0
    %v1381 = vadd.f32 %v1365, %v1377
    %v1382 = vadd.f32 %v1366, %v1379
    %v1383 = vxor.u32 %v1381, 2147483648
    %v1384 = vxor.u32 %v1382, 2147483648
    %v1385 = vmul.f32 %v1383, 1.442695
    %v1386 = vpow.pop %v1385
    %v1387 = vmul.f32 %v1384, 1.442695
    %v1388 = vpow.pop %v1387
    %v1389 = vadd.f32 %v1386, 1.0
    %v1390 = vadd.f32 %v1388, 1.0
    %v1391 = vrcp.pop %v1389
    %v1392 = vmul.f32 %v1389, %v1391
    %v1393 = vsub.f32 1.0, %v1392
    %v1394 = vmul.f32 %v1391, %v1393
    %v1395 = vadd.f32 %v1391, %v1394
    %vm1396 = vweird.f32 %v1389
    %vm1397 = vweird.f32 %v1391
    %vm1398 = vmor %vm1396, %vm1397
    %v1399 = vsel %vm1398, %v1391, %v1395
    %v1400 = vand.u32 2147483647, %v1389
    %vm1401 = vcmp.eq.f32.partialorder %v1400, 8.507059e+37
    %v1402 = vand.u32 %v1389, 2147483648
    %v1403 = vor.u32 1.1754944e-38, %v1402
    %v1404 = vsel %vm1401, %v1403, %v1399
    %v1405 = vmul.f32 1.0, %v1404
    %v1406 = vrcp.pop %v1390
    %v1407 = vmul.f32 %v1390, %v1406
    %v1408 = vsub.f32 1.0, %v1407
    %v1409 = vmul.f32 %v1406, %v1408
    %v1410 = vadd.f32 %v1406, %v1409
    %vm1411 = vweird.f32 %v1390
    %vm1412 = vweird.f32 %v1406
    %vm1413 = vmor %vm1411, %vm1412
    %v1414 = vsel %vm1413, %v1406, %v1410
    %v1415 = vand.u32 2147483647, %v1390
    %vm1416 = vcmp.eq.f32.partialorder %v1415, 8.507059e+37
    %v1417 = vand.u32 %v1390, 2147483648
    %v1418 = vor.u32 1.1754944e-38, %v1417
    %v1419 = vsel %vm1416, %v1418, %v1414
    %v1420 = vmul.f32 1.0, %v1419
    %v1421 = vtanh.pop %v1381
    %v1422 = vtanh.pop %v1382
    %v1423 = vmul.f32 %v1405, %v1213
    %v1424 = vmul.f32 %v1420, %v1214
    %1427 = vrot.lane.b32.xlu0 %v1421, 32
    %v1428 = vpop.permute.xlu0 %1427
    %1429 = vrot.lane.b32.xlu0 %v1422, 32
    %v1430 = vpop.permute.xlu0 %1429
    %v1433 = vmul.f32 %v1405, %v1428
    %v1434 = vmul.f32 %v1420, %v1430
    %1437 = vrot.lane.b32.xlu0 %v1433, 32
    %v1438 = vpop.permute.xlu0 %1437
    %1439 = vrot.lane.b32.xlu0 %v1434, 32
    %v1440 = vpop.permute.xlu0 %1439
    %v1443 = vadd.f32 %v1423, %v1438
    %v1444 = vadd.f32 %v1424, %v1440
    %v1445 = vtanh.pop %v1443
    %v1446 = vtanh.pop %v1444
    %1449 = vrot.lane.b32.xlu0 %v1445, 32
    %v1450 = vpop.permute.xlu0 %1449
    %1451 = vrot.lane.b32.xlu0 %v1446, 32
    %v1452 = vpop.permute.xlu0 %1451
    %v1455 = vmul.f32 %v1405, %v1450
    %v1456 = vmul.f32 %v1420, %v1452
    %v1457 = vpack.c.bf16 %v1456, %v1455
    %1459 = vrot.lane.b32.xlu0 %v1457, 64
    %v1460 = vpop.permute.xlu0 %1459
    %v1462 = vsel %vm327, %v1460, 0
    %1464 = vmatpush.bf16.msra.mxu0 0
    %1465 = vmatpush.bf16.msra.mxu0 0
    %1466 = vmatpush.bf16.msra.mxu0 0
    %1467 = vmatpush.bf16.msra.mxu0 0
    %1468 = vmatpush.bf16.msra.mxu0 0
    %1469 = vmatpush.bf16.msra.mxu0 0
    %1470 = vmatpush.bf16.msra.mxu0 %v437
    %1471 = vmatpush.bf16.msra.mxu0 %v436
    %1472 = vmatmul.bf16.gmra.mxu0 %v1462
    %v1473 = vpop.f32.mrf.mxu0
    %v1474 = vadd.f32 %v423, %v1473
    %v1475 = vpop.f32.mrf.mxu0
    %v1476 = vadd.f32 %v423, %v1475
    %1477 = vdwg.mxu0
    %1478 = vst [vmem:[#allocation3 + $0x90] sm:$0xff] %v1474
    %1479 = vst [vmem:[#allocation3 + $0x98] sm:$0xff] %v1476
    %v1480 = vld [vmem:[#allocation2 + $0xa0] sm:$0xff]
    %v1481 = vld [vmem:[#allocation2 + $0xa8] sm:$0xff]
    %1482 = vmatpush.bf16.msra.mxu0 0
    %1483 = vmatpush.bf16.msra.mxu0 0
    %1484 = vmatpush.bf16.msra.mxu0 0
    %1485 = vmatpush.bf16.msra.mxu0 0
    %1486 = vmatpush.bf16.msra.mxu0 0
    %1487 = vmatpush.bf16.msra.mxu0 0
    %1488 = vmatpush.bf16.msra.mxu0 %v324
    %1489 = vmatpush.bf16.msra.mxu0 %v323
    %1490 = vmatmul.bf16.gmra.mxu0 %v1347
    %v1491 = vpop.f32.mrf.mxu0
    %v1492 = vadd.f32 0.0, %v1491
    %v1493 = vpop.f32.mrf.mxu0
    %v1494 = vadd.f32 0.0, %v1493
    %1495 = vdwg.mxu0
    %v1496 = vadd.f32 %v1480, %v1492
    %v1497 = vadd.f32 %v1481, %v1494
    %v1498 = vxor.u32 %v1496, 2147483648
    %v1499 = vxor.u32 %v1497, 2147483648
    %v1500 = vmul.f32 %v1498, 1.442695
    %v1501 = vpow.pop %v1500
    %v1502 = vmul.f32 %v1499, 1.442695
    %v1503 = vpow.pop %v1502
    %v1504 = vadd.f32 %v1501, 1.0
    %v1505 = vadd.f32 %v1503, 1.0
    %v1506 = vrcp.pop %v1504
    %v1507 = vmul.f32 %v1504, %v1506
    %v1508 = vsub.f32 1.0, %v1507
    %v1509 = vmul.f32 %v1506, %v1508
    %v1510 = vadd.f32 %v1506, %v1509
    %vm1511 = vweird.f32 %v1504
    %vm1512 = vweird.f32 %v1506
    %vm1513 = vmor %vm1511, %vm1512
    %v1514 = vsel %vm1513, %v1506, %v1510
    %v1515 = vand.u32 2147483647, %v1504
    %vm1516 = vcmp.eq.f32.partialorder %v1515, 8.507059e+37
    %v1517 = vand.u32 %v1504, 2147483648
    %v1518 = vor.u32 1.1754944e-38, %v1517
    %v1519 = vsel %vm1516, %v1518, %v1514
    %v1520 = vmul.f32 1.0, %v1519
    %v1521 = vrcp.pop %v1505
    %v1522 = vmul.f32 %v1505, %v1521
    %v1523 = vsub.f32 1.0, %v1522
    %v1524 = vmul.f32 %v1521, %v1523
    %v1525 = vadd.f32 %v1521, %v1524
    %vm1526 = vweird.f32 %v1505
    %vm1527 = vweird.f32 %v1521
    %vm1528 = vmor %vm1526, %vm1527
    %v1529 = vsel %vm1528, %v1521, %v1525
    %v1530 = vand.u32 2147483647, %v1505
    %vm1531 = vcmp.eq.f32.partialorder %v1530, 8.507059e+37
    %v1532 = vand.u32 %v1505, 2147483648
    %v1533 = vor.u32 1.1754944e-38, %v1532
    %v1534 = vsel %vm1531, %v1533, %v1529
    %v1535 = vmul.f32 1.0, %v1534
    %v1536 = vtanh.pop %v1496
    %v1537 = vtanh.pop %v1497
    %v1538 = vmul.f32 %v1520, %v1328
    %v1539 = vmul.f32 %v1535, %v1329
    %1542 = vrot.lane.b32.xlu0 %v1536, 32
    %v1543 = vpop.permute.xlu0 %1542
    %1544 = vrot.lane.b32.xlu0 %v1537, 32
    %v1545 = vpop.permute.xlu0 %1544
    %v1548 = vmul.f32 %v1520, %v1543
    %v1549 = vmul.f32 %v1535, %v1545
    %1552 = vrot.lane.b32.xlu0 %v1548, 32
    %v1553 = vpop.permute.xlu0 %1552
    %1554 = vrot.lane.b32.xlu0 %v1549, 32
    %v1555 = vpop.permute.xlu0 %1554
    %v1558 = vadd.f32 %v1538, %v1553
    %v1559 = vadd.f32 %v1539, %v1555
    %v1560 = vtanh.pop %v1558
    %v1561 = vtanh.pop %v1559
    %1564 = vrot.lane.b32.xlu0 %v1560, 32
    %v1565 = vpop.permute.xlu0 %1564
    %1566 = vrot.lane.b32.xlu0 %v1561, 32
    %v1567 = vpop.permute.xlu0 %1566
    %v1570 = vmul.f32 %v1520, %v1565
    %v1571 = vmul.f32 %v1535, %v1567
    %v1572 = vpack.c.bf16 %v1571, %v1570
    %1574 = vrot.lane.b32.xlu0 %v1572, 64
    %v1575 = vpop.permute.xlu0 %1574
    %v1577 = vsel %vm327, %v1575, 0
    %1579 = vmatpush.bf16.msra.mxu0 0
    %1580 = vmatpush.bf16.msra.mxu0 0
    %1581 = vmatpush.bf16.msra.mxu0 0
    %1582 = vmatpush.bf16.msra.mxu0 0
    %1583 = vmatpush.bf16.msra.mxu0 0
    %1584 = vmatpush.bf16.msra.mxu0 0
    %1585 = vmatpush.bf16.msra.mxu0 %v437
    %1586 = vmatpush.bf16.msra.mxu0 %v436
    %1587 = vmatmul.bf16.gmra.mxu0 %v1577
    %v1588 = vpop.f32.mrf.mxu0
    %v1589 = vadd.f32 %v423, %v1588
    %v1590 = vpop.f32.mrf.mxu0
    %v1591 = vadd.f32 %v423, %v1590
    %1592 = vdwg.mxu0
    %1593 = vst [vmem:[#allocation3 + $0xa0] sm:$0xff] %v1589
    %1594 = vst [vmem:[#allocation3 + $0xa8] sm:$0xff] %v1591
    %v1595 = vld [vmem:[#allocation2 + $0xb0] sm:$0xff]
    %v1596 = vld [vmem:[#allocation2 + $0xb8] sm:$0xff]
    %1597 = vmatpush.bf16.msra.mxu0 0
    %1598 = vmatpush.bf16.msra.mxu0 0
    %1599 = vmatpush.bf16.msra.mxu0 0
    %1600 = vmatpush.bf16.msra.mxu0 0
    %1601 = vmatpush.bf16.msra.mxu0 0
    %1602 = vmatpush.bf16.msra.mxu0 0
    %1603 = vmatpush.bf16.msra.mxu0 %v324
    %1604 = vmatpush.bf16.msra.mxu0 %v323
    %1605 = vmatmul.bf16.gmra.mxu0 %v1462
    %v1606 = vpop.f32.mrf.mxu0
    %v1607 = vadd.f32 0.0, %v1606
    %v1608 = vpop.f32.mrf.mxu0
    %v1609 = vadd.f32 0.0, %v1608
    %1610 = vdwg.mxu0
    %v1611 = vadd.f32 %v1595, %v1607
    %v1612 = vadd.f32 %v1596, %v1609
    %v1613 = vxor.u32 %v1611, 2147483648
    %v1614 = vxor.u32 %v1612, 2147483648
    %v1615 = vmul.f32 %v1613, 1.442695
    %v1616 = vpow.pop %v1615
    %v1617 = vmul.f32 %v1614, 1.442695
    %v1618 = vpow.pop %v1617
    %v1619 = vadd.f32 %v1616, 1.0
    %v1620 = vadd.f32 %v1618, 1.0
    %v1621 = vrcp.pop %v1619
    %v1622 = vmul.f32 %v1619, %v1621
    %v1623 = vsub.f32 1.0, %v1622
    %v1624 = vmul.f32 %v1621, %v1623
    %v1625 = vadd.f32 %v1621, %v1624
    %vm1626 = vweird.f32 %v1619
    %vm1627 = vweird.f32 %v1621
    %vm1628 = vmor %vm1626, %vm1627
    %v1629 = vsel %vm1628, %v1621, %v1625
    %v1630 = vand.u32 2147483647, %v1619
    %vm1631 = vcmp.eq.f32.partialorder %v1630, 8.507059e+37
    %v1632 = vand.u32 %v1619, 2147483648
    %v1633 = vor.u32 1.1754944e-38, %v1632
    %v1634 = vsel %vm1631, %v1633, %v1629
    %v1635 = vmul.f32 1.0, %v1634
    %v1636 = vrcp.pop %v1620
    %v1637 = vmul.f32 %v1620, %v1636
    %v1638 = vsub.f32 1.0, %v1637
    %v1639 = vmul.f32 %v1636, %v1638
    %v1640 = vadd.f32 %v1636, %v1639
    %vm1641 = vweird.f32 %v1620
    %vm1642 = vweird.f32 %v1636
    %vm1643 = vmor %vm1641, %vm1642
    %v1644 = vsel %vm1643, %v1636, %v1640
    %v1645 = vand.u32 2147483647, %v1620
    %vm1646 = vcmp.eq.f32.partialorder %v1645, 8.507059e+37
    %v1647 = vand.u32 %v1620, 2147483648
    %v1648 = vor.u32 1.1754944e-38, %v1647
    %v1649 = vsel %vm1646, %v1648, %v1644
    %v1650 = vmul.f32 1.0, %v1649
    %v1651 = vtanh.pop %v1611
    %v1652 = vtanh.pop %v1612
    %v1653 = vmul.f32 %v1635, %v1443
    %v1654 = vmul.f32 %v1650, %v1444
    %1657 = vrot.lane.b32.xlu0 %v1651, 32
    %v1658 = vpop.permute.xlu0 %1657
    %1659 = vrot.lane.b32.xlu0 %v1652, 32
    %v1660 = vpop.permute.xlu0 %1659
    %v1663 = vmul.f32 %v1635, %v1658
    %v1664 = vmul.f32 %v1650, %v1660
    %1667 = vrot.lane.b32.xlu0 %v1663, 32
    %v1668 = vpop.permute.xlu0 %1667
    %1669 = vrot.lane.b32.xlu0 %v1664, 32
    %v1670 = vpop.permute.xlu0 %1669
    %v1673 = vadd.f32 %v1653, %v1668
    %v1674 = vadd.f32 %v1654, %v1670
    %v1675 = vtanh.pop %v1673
    %v1676 = vtanh.pop %v1674
    %1679 = vrot.lane.b32.xlu0 %v1675, 32
    %v1680 = vpop.permute.xlu0 %1679
    %1681 = vrot.lane.b32.xlu0 %v1676, 32
    %v1682 = vpop.permute.xlu0 %1681
    %v1685 = vmul.f32 %v1635, %v1680
    %v1686 = vmul.f32 %v1650, %v1682
    %v1687 = vpack.c.bf16 %v1686, %v1685
    %1689 = vrot.lane.b32.xlu0 %v1687, 64
    %v1690 = vpop.permute.xlu0 %1689
    %v1692 = vsel %vm327, %v1690, 0
    %1694 = vmatpush.bf16.msra.mxu0 0
    %1695 = vmatpush.bf16.msra.mxu0 0
    %1696 = vmatpush.bf16.msra.mxu0 0
    %1697 = vmatpush.bf16.msra.mxu0 0
    %1698 = vmatpush.bf16.msra.mxu0 0
    %1699 = vmatpush.bf16.msra.mxu0 0
    %1700 = vmatpush.bf16.msra.mxu0 %v437
    %1701 = vmatpush.bf16.msra.mxu0 %v436
    %1702 = vmatmul.bf16.gmra.mxu0 %v1692
    %v1703 = vpop.f32.mrf.mxu0
    %v1704 = vadd.f32 %v423, %v1703
    %v1705 = vpop.f32.mrf.mxu0
    %v1706 = vadd.f32 %v423, %v1705
    %1707 = vdwg.mxu0
    %1708 = vst [vmem:[#allocation3 + $0xb0] sm:$0xff] %v1704
    %1709 = vst [vmem:[#allocation3 + $0xb8] sm:$0xff] %v1706
    %v1710 = vld [vmem:[#allocation2 + $0xc0] sm:$0xff]
    %v1711 = vld [vmem:[#allocation2 + $0xc8] sm:$0xff]
    %1712 = vmatpush.bf16.msra.mxu0 0
    %1713 = vmatpush.bf16.msra.mxu0 0
    %1714 = vmatpush.bf16.msra.mxu0 0
    %1715 = vmatpush.bf16.msra.mxu0 0
    %1716 = vmatpush.bf16.msra.mxu0 0
    %1717 = vmatpush.bf16.msra.mxu0 0
    %1718 = vmatpush.bf16.msra.mxu0 %v324
    %1719 = vmatpush.bf16.msra.mxu0 %v323
    %1720 = vmatmul.bf16.gmra.mxu0 %v1577
    %v1721 = vpop.f32.mrf.mxu0
    %v1722 = vadd.f32 0.0, %v1721
    %v1723 = vpop.f32.mrf.mxu0
    %v1724 = vadd.f32 0.0, %v1723
    %1725 = vdwg.mxu0
    %v1726 = vadd.f32 %v1710, %v1722
    %v1727 = vadd.f32 %v1711, %v1724
    %v1728 = vxor.u32 %v1726, 2147483648
    %v1729 = vxor.u32 %v1727, 2147483648
    %v1730 = vmul.f32 %v1728, 1.442695
    %v1731 = vpow.pop %v1730
    %v1732 = vmul.f32 %v1729, 1.442695
    %v1733 = vpow.pop %v1732
    %v1734 = vadd.f32 %v1731, 1.0
    %v1735 = vadd.f32 %v1733, 1.0
    %v1736 = vrcp.pop %v1734
    %v1737 = vmul.f32 %v1734, %v1736
    %v1738 = vsub.f32 1.0, %v1737
    %v1739 = vmul.f32 %v1736, %v1738
    %v1740 = vadd.f32 %v1736, %v1739
    %vm1741 = vweird.f32 %v1734
    %vm1742 = vweird.f32 %v1736
    %vm1743 = vmor %vm1741, %vm1742
    %v1744 = vsel %vm1743, %v1736, %v1740
    %v1745 = vand.u32 2147483647, %v1734
    %vm1746 = vcmp.eq.f32.partialorder %v1745, 8.507059e+37
    %v1747 = vand.u32 %v1734, 2147483648
    %v1748 = vor.u32 1.1754944e-38, %v1747
    %v1749 = vsel %vm1746, %v1748, %v1744
    %v1750 = vmul.f32 1.0, %v1749
    %v1751 = vrcp.pop %v1735
    %v1752 = vmul.f32 %v1735, %v1751
    %v1753 = vsub.f32 1.0, %v1752
    %v1754 = vmul.f32 %v1751, %v1753
    %v1755 = vadd.f32 %v1751, %v1754
    %vm1756 = vweird.f32 %v1735
    %vm1757 = vweird.f32 %v1751
    %vm1758 = vmor %vm1756, %vm1757
    %v1759 = vsel %vm1758, %v1751, %v1755
    %v1760 = vand.u32 2147483647, %v1735
    %vm1761 = vcmp.eq.f32.partialorder %v1760, 8.507059e+37
    %v1762 = vand.u32 %v1735, 2147483648
    %v1763 = vor.u32 1.1754944e-38, %v1762
    %v1764 = vsel %vm1761, %v1763, %v1759
    %v1765 = vmul.f32 1.0, %v1764
    %v1766 = vtanh.pop %v1726
    %v1767 = vtanh.pop %v1727
    %v1768 = vmul.f32 %v1750, %v1558
    %v1769 = vmul.f32 %v1765, %v1559
    %1772 = vrot.lane.b32.xlu0 %v1766, 32
    %v1773 = vpop.permute.xlu0 %1772
    %1774 = vrot.lane.b32.xlu0 %v1767, 32
    %v1775 = vpop.permute.xlu0 %1774
    %v1778 = vmul.f32 %v1750, %v1773
    %v1779 = vmul.f32 %v1765, %v1775
    %1782 = vrot.lane.b32.xlu0 %v1778, 32
    %v1783 = vpop.permute.xlu0 %1782
    %1784 = vrot.lane.b32.xlu0 %v1779, 32
    %v1785 = vpop.permute.xlu0 %1784
    %v1788 = vadd.f32 %v1768, %v1783
    %v1789 = vadd.f32 %v1769, %v1785
    %v1790 = vtanh.pop %v1788
    %v1791 = vtanh.pop %v1789
    %1794 = vrot.lane.b32.xlu0 %v1790, 32
    %v1795 = vpop.permute.xlu0 %1794
    %1796 = vrot.lane.b32.xlu0 %v1791, 32
    %v1797 = vpop.permute.xlu0 %1796
    %v1800 = vmul.f32 %v1750, %v1795
    %v1801 = vmul.f32 %v1765, %v1797
    %v1802 = vpack.c.bf16 %v1801, %v1800
    %1804 = vrot.lane.b32.xlu0 %v1802, 64
    %v1805 = vpop.permute.xlu0 %1804
    %v1807 = vsel %vm327, %v1805, 0
    %1809 = vmatpush.bf16.msra.mxu0 0
    %1810 = vmatpush.bf16.msra.mxu0 0
    %1811 = vmatpush.bf16.msra.mxu0 0
    %1812 = vmatpush.bf16.msra.mxu0 0
    %1813 = vmatpush.bf16.msra.mxu0 0
    %1814 = vmatpush.bf16.msra.mxu0 0
    %1815 = vmatpush.bf16.msra.mxu0 %v437
    %1816 = vmatpush.bf16.msra.mxu0 %v436
    %1817 = vmatmul.bf16.gmra.mxu0 %v1807
    %v1818 = vpop.f32.mrf.mxu0
    %v1819 = vadd.f32 %v423, %v1818
    %v1820 = vpop.f32.mrf.mxu0
    %v1821 = vadd.f32 %v423, %v1820
    %1822 = vdwg.mxu0
    %1823 = vst [vmem:[#allocation3 + $0xc0] sm:$0xff] %v1819
    %1824 = vst [vmem:[#allocation3 + $0xc8] sm:$0xff] %v1821
    %v1825 = vld [vmem:[#allocation2 + $0xd0] sm:$0xff]
    %v1826 = vld [vmem:[#allocation2 + $0xd8] sm:$0xff]
    %1827 = vmatpush.bf16.msra.mxu0 0
    %1828 = vmatpush.bf16.msra.mxu0 0
    %1829 = vmatpush.bf16.msra.mxu0 0
    %1830 = vmatpush.bf16.msra.mxu0 0
    %1831 = vmatpush.bf16.msra.mxu0 0
    %1832 = vmatpush.bf16.msra.mxu0 0
    %1833 = vmatpush.bf16.msra.mxu0 %v324
    %1834 = vmatpush.bf16.msra.mxu0 %v323
    %1835 = vmatmul.bf16.gmra.mxu0 %v1692
    %v1836 = vpop.f32.mrf.mxu0
    %v1837 = vadd.f32 0.0, %v1836
    %v1838 = vpop.f32.mrf.mxu0
    %v1839 = vadd.f32 0.0, %v1838
    %1840 = vdwg.mxu0
    %v1841 = vadd.f32 %v1825, %v1837
    %v1842 = vadd.f32 %v1826, %v1839
    %v1843 = vxor.u32 %v1841, 2147483648
    %v1844 = vxor.u32 %v1842, 2147483648
    %v1845 = vmul.f32 %v1843, 1.442695
    %v1846 = vpow.pop %v1845
    %v1847 = vmul.f32 %v1844, 1.442695
    %v1848 = vpow.pop %v1847
    %v1849 = vadd.f32 %v1846, 1.0
    %v1850 = vadd.f32 %v1848, 1.0
    %v1851 = vrcp.pop %v1849
    %v1852 = vmul.f32 %v1849, %v1851
    %v1853 = vsub.f32 1.0, %v1852
    %v1854 = vmul.f32 %v1851, %v1853
    %v1855 = vadd.f32 %v1851, %v1854
    %vm1856 = vweird.f32 %v1849
    %vm1857 = vweird.f32 %v1851
    %vm1858 = vmor %vm1856, %vm1857
    %v1859 = vsel %vm1858, %v1851, %v1855
    %v1860 = vand.u32 2147483647, %v1849
    %vm1861 = vcmp.eq.f32.partialorder %v1860, 8.507059e+37
    %v1862 = vand.u32 %v1849, 2147483648
    %v1863 = vor.u32 1.1754944e-38, %v1862
    %v1864 = vsel %vm1861, %v1863, %v1859
    %v1865 = vmul.f32 1.0, %v1864
    %v1866 = vrcp.pop %v1850
    %v1867 = vmul.f32 %v1850, %v1866
    %v1868 = vsub.f32 1.0, %v1867
    %v1869 = vmul.f32 %v1866, %v1868
    %v1870 = vadd.f32 %v1866, %v1869
    %vm1871 = vweird.f32 %v1850
    %vm1872 = vweird.f32 %v1866
    %vm1873 = vmor %vm1871, %vm1872
    %v1874 = vsel %vm1873, %v1866, %v1870
    %v1875 = vand.u32 2147483647, %v1850
    %vm1876 = vcmp.eq.f32.partialorder %v1875, 8.507059e+37
    %v1877 = vand.u32 %v1850, 2147483648
    %v1878 = vor.u32 1.1754944e-38, %v1877
    %v1879 = vsel %vm1876, %v1878, %v1874
    %v1880 = vmul.f32 1.0, %v1879
    %v1881 = vtanh.pop %v1841
    %v1882 = vtanh.pop %v1842
    %v1883 = vmul.f32 %v1865, %v1673
    %v1884 = vmul.f32 %v1880, %v1674
    %1887 = vrot.lane.b32.xlu0 %v1881, 32
    %v1888 = vpop.permute.xlu0 %1887
    %1889 = vrot.lane.b32.xlu0 %v1882, 32
    %v1890 = vpop.permute.xlu0 %1889
    %v1893 = vmul.f32 %v1865, %v1888
    %v1894 = vmul.f32 %v1880, %v1890
    %1897 = vrot.lane.b32.xlu0 %v1893, 32
    %v1898 = vpop.permute.xlu0 %1897
    %1899 = vrot.lane.b32.xlu0 %v1894, 32
    %v1900 = vpop.permute.xlu0 %1899
    %v1903 = vadd.f32 %v1883, %v1898
    %v1904 = vadd.f32 %v1884, %v1900
    %v1905 = vtanh.pop %v1903
    %v1906 = vtanh.pop %v1904
    %1909 = vrot.lane.b32.xlu0 %v1905, 32
    %v1910 = vpop.permute.xlu0 %1909
    %1911 = vrot.lane.b32.xlu0 %v1906, 32
    %v1912 = vpop.permute.xlu0 %1911
    %v1915 = vmul.f32 %v1865, %v1910
    %v1916 = vmul.f32 %v1880, %v1912
    %v1917 = vpack.c.bf16 %v1916, %v1915
    %1919 = vrot.lane.b32.xlu0 %v1917, 64
    %v1920 = vpop.permute.xlu0 %1919
    %v1922 = vsel %vm327, %v1920, 0
    %1924 = vmatpush.bf16.msra.mxu0 0
    %1925 = vmatpush.bf16.msra.mxu0 0
    %1926 = vmatpush.bf16.msra.mxu0 0
    %1927 = vmatpush.bf16.msra.mxu0 0
    %1928 = vmatpush.bf16.msra.mxu0 0
    %1929 = vmatpush.bf16.msra.mxu0 0
    %1930 = vmatpush.bf16.msra.mxu0 %v437
    %1931 = vmatpush.bf16.msra.mxu0 %v436
    %1932 = vmatmul.bf16.gmra.mxu0 %v1922
    %v1933 = vpop.f32.mrf.mxu0
    %v1934 = vadd.f32 %v423, %v1933
    %v1935 = vpop.f32.mrf.mxu0
    %v1936 = vadd.f32 %v423, %v1935
    %1937 = vdwg.mxu0
    %1938 = vst [vmem:[#allocation3 + $0xd0] sm:$0xff] %v1934
    %1939 = vst [vmem:[#allocation3 + $0xd8] sm:$0xff] %v1936
    %v1940 = vld [vmem:[#allocation2 + $0xe0] sm:$0xff]
    %v1941 = vld [vmem:[#allocation2 + $0xe8] sm:$0xff]
    %1942 = vmatpush.bf16.msra.mxu0 0
    %1943 = vmatpush.bf16.msra.mxu0 0
    %1944 = vmatpush.bf16.msra.mxu0 0
    %1945 = vmatpush.bf16.msra.mxu0 0
    %1946 = vmatpush.bf16.msra.mxu0 0
    %1947 = vmatpush.bf16.msra.mxu0 0
    %1948 = vmatpush.bf16.msra.mxu0 %v324
    %1949 = vmatpush.bf16.msra.mxu0 %v323
    %1950 = vmatmul.bf16.gmra.mxu0 %v1807
    %v1951 = vpop.f32.mrf.mxu0
    %v1952 = vadd.f32 0.0, %v1951
    %v1953 = vpop.f32.mrf.mxu0
    %v1954 = vadd.f32 0.0, %v1953
    %1955 = vdwg.mxu0
    %v1956 = vadd.f32 %v1940, %v1952
    %v1957 = vadd.f32 %v1941, %v1954
    %v1958 = vxor.u32 %v1956, 2147483648
    %v1959 = vxor.u32 %v1957, 2147483648
    %v1960 = vmul.f32 %v1958, 1.442695
    %v1961 = vpow.pop %v1960
    %v1962 = vmul.f32 %v1959, 1.442695
    %v1963 = vpow.pop %v1962
    %v1964 = vadd.f32 %v1961, 1.0
    %v1965 = vadd.f32 %v1963, 1.0
    %v1966 = vrcp.pop %v1964
    %v1967 = vmul.f32 %v1964, %v1966
    %v1968 = vsub.f32 1.0, %v1967
    %v1969 = vmul.f32 %v1966, %v1968
    %v1970 = vadd.f32 %v1966, %v1969
    %vm1971 = vweird.f32 %v1964
    %vm1972 = vweird.f32 %v1966
    %vm1973 = vmor %vm1971, %vm1972
    %v1974 = vsel %vm1973, %v1966, %v1970
    %v1975 = vand.u32 2147483647, %v1964
    %vm1976 = vcmp.eq.f32.partialorder %v1975, 8.507059e+37
    %v1977 = vand.u32 %v1964, 2147483648
    %v1978 = vor.u32 1.1754944e-38, %v1977
    %v1979 = vsel %vm1976, %v1978, %v1974
    %v1980 = vmul.f32 1.0, %v1979
    %v1981 = vrcp.pop %v1965
    %v1982 = vmul.f32 %v1965, %v1981
    %v1983 = vsub.f32 1.0, %v1982
    %v1984 = vmul.f32 %v1981, %v1983
    %v1985 = vadd.f32 %v1981, %v1984
    %vm1986 = vweird.f32 %v1965
    %vm1987 = vweird.f32 %v1981
    %vm1988 = vmor %vm1986, %vm1987
    %v1989 = vsel %vm1988, %v1981, %v1985
    %v1990 = vand.u32 2147483647, %v1965
    %vm1991 = vcmp.eq.f32.partialorder %v1990, 8.507059e+37
    %v1992 = vand.u32 %v1965, 2147483648
    %v1993 = vor.u32 1.1754944e-38, %v1992
    %v1994 = vsel %vm1991, %v1993, %v1989
    %v1995 = vmul.f32 1.0, %v1994
    %v1996 = vtanh.pop %v1956
    %v1997 = vtanh.pop %v1957
    %v1998 = vmul.f32 %v1980, %v1788
    %v1999 = vmul.f32 %v1995, %v1789
    %2002 = vrot.lane.b32.xlu0 %v1996, 32
    %v2003 = vpop.permute.xlu0 %2002
    %2004 = vrot.lane.b32.xlu0 %v1997, 32
    %v2005 = vpop.permute.xlu0 %2004
    %v2008 = vmul.f32 %v1980, %v2003
    %v2009 = vmul.f32 %v1995, %v2005
    %2012 = vrot.lane.b32.xlu0 %v2008, 32
    %v2013 = vpop.permute.xlu0 %2012
    %2014 = vrot.lane.b32.xlu0 %v2009, 32
    %v2015 = vpop.permute.xlu0 %2014
    %v2018 = vadd.f32 %v1998, %v2013
    %v2019 = vadd.f32 %v1999, %v2015
    %v2020 = vtanh.pop %v2018
    %v2021 = vtanh.pop %v2019
    %2024 = vrot.lane.b32.xlu0 %v2020, 32
    %v2025 = vpop.permute.xlu0 %2024
    %2026 = vrot.lane.b32.xlu0 %v2021, 32
    %v2027 = vpop.permute.xlu0 %2026
    %v2030 = vmul.f32 %v1980, %v2025
    %v2031 = vmul.f32 %v1995, %v2027
    %v2032 = vpack.c.bf16 %v2031, %v2030
    %2034 = vrot.lane.b32.xlu0 %v2032, 64
    %v2035 = vpop.permute.xlu0 %2034
    %v2037 = vsel %vm327, %v2035, 0
    %2039 = vmatpush.bf16.msra.mxu0 0
    %2040 = vmatpush.bf16.msra.mxu0 0
    %2041 = vmatpush.bf16.msra.mxu0 0
    %2042 = vmatpush.bf16.msra.mxu0 0
    %2043 = vmatpush.bf16.msra.mxu0 0
    %2044 = vmatpush.bf16.msra.mxu0 0
    %2045 = vmatpush.bf16.msra.mxu0 %v437
    %2046 = vmatpush.bf16.msra.mxu0 %v436
    %2047 = vmatmul.bf16.gmra.mxu0 %v2037
    %v2048 = vpop.f32.mrf.mxu0
    %v2049 = vadd.f32 %v423, %v2048
    %v2050 = vpop.f32.mrf.mxu0
    %v2051 = vadd.f32 %v423, %v2050
    %2052 = vdwg.mxu0
    %2053 = vst [vmem:[#allocation3 + $0xe0] sm:$0xff] %v2049
    %2054 = vst [vmem:[#allocation3 + $0xe8] sm:$0xff] %v2051
    %v2055 = vld [vmem:[#allocation2 + $0xf0] sm:$0xff]
    %v2056 = vld [vmem:[#allocation2 + $0xf8] sm:$0xff]
    %2057 = vmatpush.bf16.msra.mxu0 0
    %2058 = vmatpush.bf16.msra.mxu0 0
    %2059 = vmatpush.bf16.msra.mxu0 0
    %2060 = vmatpush.bf16.msra.mxu0 0
    %2061 = vmatpush.bf16.msra.mxu0 0
    %2062 = vmatpush.bf16.msra.mxu0 0
    %2063 = vmatpush.bf16.msra.mxu0 %v324
    %2064 = vmatpush.bf16.msra.mxu0 %v323
    %2065 = vmatmul.bf16.gmra.mxu0 %v1922
    %v2066 = vpop.f32.mrf.mxu0
    %v2067 = vadd.f32 0.0, %v2066
    %v2068 = vpop.f32.mrf.mxu0
    %v2069 = vadd.f32 0.0, %v2068
    %2070 = vdwg.mxu0
    %v2071 = vadd.f32 %v2055, %v2067
    %v2072 = vadd.f32 %v2056, %v2069
    %v2073 = vxor.u32 %v2071, 2147483648
    %v2074 = vxor.u32 %v2072, 2147483648
    %v2075 = vmul.f32 %v2073, 1.442695
    %v2076 = vpow.pop %v2075
    %v2077 = vmul.f32 %v2074, 1.442695
    %v2078 = vpow.pop %v2077
    %v2079 = vadd.f32 %v2076, 1.0
    %v2080 = vadd.f32 %v2078, 1.0
    %v2081 = vrcp.pop %v2079
    %v2082 = vmul.f32 %v2079, %v2081
    %v2083 = vsub.f32 1.0, %v2082
    %v2084 = vmul.f32 %v2081, %v2083
    %v2085 = vadd.f32 %v2081, %v2084
    %vm2086 = vweird.f32 %v2079
    %vm2087 = vweird.f32 %v2081
    %vm2088 = vmor %vm2086, %vm2087
    %v2089 = vsel %vm2088, %v2081, %v2085
    %v2090 = vand.u32 2147483647, %v2079
    %vm2091 = vcmp.eq.f32.partialorder %v2090, 8.507059e+37
    %v2092 = vand.u32 %v2079, 2147483648
    %v2093 = vor.u32 1.1754944e-38, %v2092
    %v2094 = vsel %vm2091, %v2093, %v2089
    %v2095 = vmul.f32 1.0, %v2094
    %v2096 = vrcp.pop %v2080
    %v2097 = vmul.f32 %v2080, %v2096
    %v2098 = vsub.f32 1.0, %v2097
    %v2099 = vmul.f32 %v2096, %v2098
    %v2100 = vadd.f32 %v2096, %v2099
    %vm2101 = vweird.f32 %v2080
    %vm2102 = vweird.f32 %v2096
    %vm2103 = vmor %vm2101, %vm2102
    %v2104 = vsel %vm2103, %v2096, %v2100
    %v2105 = vand.u32 2147483647, %v2080
    %vm2106 = vcmp.eq.f32.partialorder %v2105, 8.507059e+37
    %v2107 = vand.u32 %v2080, 2147483648
    %v2108 = vor.u32 1.1754944e-38, %v2107
    %v2109 = vsel %vm2106, %v2108, %v2104
    %v2110 = vmul.f32 1.0, %v2109
    %v2111 = vtanh.pop %v2071
    %v2112 = vtanh.pop %v2072
    %v2113 = vmul.f32 %v2095, %v1903
    %v2114 = vmul.f32 %v2110, %v1904
    %2117 = vrot.lane.b32.xlu0 %v2111, 32
    %v2118 = vpop.permute.xlu0 %2117
    %2119 = vrot.lane.b32.xlu0 %v2112, 32
    %v2120 = vpop.permute.xlu0 %2119
    %v2123 = vmul.f32 %v2095, %v2118
    %v2124 = vmul.f32 %v2110, %v2120
    %2127 = vrot.lane.b32.xlu0 %v2123, 32
    %v2128 = vpop.permute.xlu0 %2127
    %2129 = vrot.lane.b32.xlu0 %v2124, 32
    %v2130 = vpop.permute.xlu0 %2129
    %v2133 = vadd.f32 %v2113, %v2128
    %v2134 = vadd.f32 %v2114, %v2130
    %v2135 = vtanh.pop %v2133
    %v2136 = vtanh.pop %v2134
    %2139 = vrot.lane.b32.xlu0 %v2135, 32
    %v2140 = vpop.permute.xlu0 %2139
    %2141 = vrot.lane.b32.xlu0 %v2136, 32
    %v2142 = vpop.permute.xlu0 %2141
    %v2145 = vmul.f32 %v2095, %v2140
    %v2146 = vmul.f32 %v2110, %v2142
    %v2147 = vpack.c.bf16 %v2146, %v2145
    %2149 = vrot.lane.b32.xlu0 %v2147, 64
    %v2150 = vpop.permute.xlu0 %2149
    %v2152 = vsel %vm327, %v2150, 0
    %2154 = vmatpush.bf16.msra.mxu0 0
    %2155 = vmatpush.bf16.msra.mxu0 0
    %2156 = vmatpush.bf16.msra.mxu0 0
    %2157 = vmatpush.bf16.msra.mxu0 0
    %2158 = vmatpush.bf16.msra.mxu0 0
    %2159 = vmatpush.bf16.msra.mxu0 0
    %2160 = vmatpush.bf16.msra.mxu0 %v437
    %2161 = vmatpush.bf16.msra.mxu0 %v436
    %2162 = vmatmul.bf16.gmra.mxu0 %v2152
    %v2163 = vpop.f32.mrf.mxu0
    %v2164 = vadd.f32 %v423, %v2163
    %v2165 = vpop.f32.mrf.mxu0
    %v2166 = vadd.f32 %v423, %v2165
    %2167 = vdwg.mxu0
    %2168 = vst [vmem:[#allocation3 + $0xf0] sm:$0xff] %v2164
    %2169 = vst [vmem:[#allocation3 + $0xf8] sm:$0xff] %v2166
    %v2170 = vld [vmem:[%s5] sm:$0xf]
    %v2171 = vld [vmem:[%s5 + $0x4] sm:$0xf]
    %v2172 = vld [vmem:[%s5 + $0x8] sm:$0xf]
    %v2173 = vld [vmem:[%s5 + $0xc] sm:$0xf]
    %v2174 = vld [vmem:[#allocation3] sm:$0xff]
    %v2175 = vld [vmem:[#allocation3 + $0x8] sm:$0xff]
    %v2180 = vunpack.c.l.b16 %v2170
    %v2181 = vunpack.c.l.b16 %v2171
    %v2182 = vunpack.c.l.b16 %v2172
    %v2183 = vunpack.c.l.b16 %v2173
    %v2184 = vpack.c.b16 %v2181, %v2180
    %v2185 = vpack.c.b16 %v2183, %v2182
    %2188 = vmatpush.bf16.msra.mxu0 0
    %2189 = vmatpush.bf16.msra.mxu0 0
    %2190 = vmatpush.bf16.msra.mxu0 0
    %2191 = vmatpush.bf16.msra.mxu0 0
    %2192 = vmatpush.bf16.msra.mxu0 0
    %2193 = vmatpush.bf16.msra.mxu0 0
    %2194 = vmatpush.bf16.msra.mxu0 %v2185
    %2195 = vmatpush.bf16.msra.mxu0 %v2184
    %2196 = vmatmul.bf16.gmra.mxu0 %v329
    %v2197 = vpop.f32.mrf.mxu0
    %v2198 = vadd.f32 0.0, %v2197
    %v2199 = vpop.f32.mrf.mxu0
    %v2200 = vadd.f32 0.0, %v2199
    %2201 = vdwg.mxu0
    %v2202 = vadd.f32 %v2174, %v2198
    %v2203 = vadd.f32 %v2175, %v2200
    %v2204 = vxor.u32 %v2202, 2147483648
    %v2205 = vxor.u32 %v2203, 2147483648
    %v2206 = vmul.f32 %v2204, 1.442695
    %v2207 = vpow.pop %v2206
    %v2208 = vmul.f32 %v2205, 1.442695
    %v2209 = vpow.pop %v2208
    %v2210 = vadd.f32 %v2207, 1.0
    %v2211 = vadd.f32 %v2209, 1.0
    %v2212 = vrcp.pop %v2210
    %v2213 = vmul.f32 %v2210, %v2212
    %v2214 = vsub.f32 1.0, %v2213
    %v2215 = vmul.f32 %v2212, %v2214
    %v2216 = vadd.f32 %v2212, %v2215
    %vm2217 = vweird.f32 %v2210
    %vm2218 = vweird.f32 %v2212
    %vm2219 = vmor %vm2217, %vm2218
    %v2220 = vsel %vm2219, %v2212, %v2216
    %v2221 = vand.u32 2147483647, %v2210
    %vm2222 = vcmp.eq.f32.partialorder %v2221, 8.507059e+37
    %v2223 = vand.u32 %v2210, 2147483648
    %v2224 = vor.u32 1.1754944e-38, %v2223
    %v2225 = vsel %vm2222, %v2224, %v2220
    %v2226 = vmul.f32 1.0, %v2225
    %v2227 = vrcp.pop %v2211
    %v2228 = vmul.f32 %v2211, %v2227
    %v2229 = vsub.f32 1.0, %v2228
    %v2230 = vmul.f32 %v2227, %v2229
    %v2231 = vadd.f32 %v2227, %v2230
    %vm2232 = vweird.f32 %v2211
    %vm2233 = vweird.f32 %v2227
    %vm2234 = vmor %vm2232, %vm2233
    %v2235 = vsel %vm2234, %v2227, %v2231
    %v2236 = vand.u32 2147483647, %v2211
    %vm2237 = vcmp.eq.f32.partialorder %v2236, 8.507059e+37
    %v2238 = vand.u32 %v2211, 2147483648
    %v2239 = vor.u32 1.1754944e-38, %v2238
    %v2240 = vsel %vm2237, %v2239, %v2235
    %v2241 = vmul.f32 1.0, %v2240
    %v2242 = vtanh.pop %v2202
    %v2243 = vtanh.pop %v2203
    %v2244 = vmul.f32 %v2226, 0.0
    %v2245 = vmul.f32 %v2241, 0.0
    %2248 = vrot.lane.b32.xlu0 %v2242, 32
    %v2249 = vpop.permute.xlu0 %2248
    %2250 = vrot.lane.b32.xlu0 %v2243, 32
    %v2251 = vpop.permute.xlu0 %2250
    %v2254 = vmul.f32 %v2226, %v2249
    %v2255 = vmul.f32 %v2241, %v2251
    %2258 = vrot.lane.b32.xlu0 %v2254, 32
    %v2259 = vpop.permute.xlu0 %2258
    %2260 = vrot.lane.b32.xlu0 %v2255, 32
    %v2261 = vpop.permute.xlu0 %2260
    %v2264 = vadd.f32 %v2244, %v2259
    %v2265 = vadd.f32 %v2245, %v2261
    %v2266 = vtanh.pop %v2264
    %v2267 = vtanh.pop %v2265
    %2270 = vrot.lane.b32.xlu0 %v2266, 32
    %v2271 = vpop.permute.xlu0 %2270
    %2272 = vrot.lane.b32.xlu0 %v2267, 32
    %v2273 = vpop.permute.xlu0 %2272
    %v2276 = vmul.f32 %v2226, %v2271
    %v2277 = vmul.f32 %v2241, %v2273
    %v2278 = vld [vmem:[#allocation3 + $0x10] sm:$0xff]
    %v2279 = vld [vmem:[#allocation3 + $0x18] sm:$0xff]
    %v2280 = vadd.f32 %v2278, %v2198
    %v2281 = vadd.f32 %v2279, %v2200
    %v2282 = vxor.u32 %v2280, 2147483648
    %v2283 = vxor.u32 %v2281, 2147483648
    %v2284 = vmul.f32 %v2282, 1.442695
    %v2285 = vpow.pop %v2284
    %v2286 = vmul.f32 %v2283, 1.442695
    %v2287 = vpow.pop %v2286
    %v2288 = vadd.f32 %v2285, 1.0
    %v2289 = vadd.f32 %v2287, 1.0
    %v2290 = vrcp.pop %v2288
    %v2291 = vmul.f32 %v2288, %v2290
    %v2292 = vsub.f32 1.0, %v2291
    %v2293 = vmul.f32 %v2290, %v2292
    %v2294 = vadd.f32 %v2290, %v2293
    %vm2295 = vweird.f32 %v2288
    %vm2296 = vweird.f32 %v2290
    %vm2297 = vmor %vm2295, %vm2296
    %v2298 = vsel %vm2297, %v2290, %v2294
    %v2299 = vand.u32 2147483647, %v2288
    %vm2300 = vcmp.eq.f32.partialorder %v2299, 8.507059e+37
    %v2301 = vand.u32 %v2288, 2147483648
    %v2302 = vor.u32 1.1754944e-38, %v2301
    %v2303 = vsel %vm2300, %v2302, %v2298
    %v2304 = vmul.f32 1.0, %v2303
    %v2305 = vrcp.pop %v2289
    %v2306 = vmul.f32 %v2289, %v2305
    %v2307 = vsub.f32 1.0, %v2306
    %v2308 = vmul.f32 %v2305, %v2307
    %v2309 = vadd.f32 %v2305, %v2308
    %vm2310 = vweird.f32 %v2289
    %vm2311 = vweird.f32 %v2305
    %vm2312 = vmor %vm2310, %vm2311
    %v2313 = vsel %vm2312, %v2305, %v2309
    %v2314 = vand.u32 2147483647, %v2289
    %vm2315 = vcmp.eq.f32.partialorder %v2314, 8.507059e+37
    %v2316 = vand.u32 %v2289, 2147483648
    %v2317 = vor.u32 1.1754944e-38, %v2316
    %v2318 = vsel %vm2315, %v2317, %v2313
    %v2319 = vmul.f32 1.0, %v2318
    %v2320 = vtanh.pop %v2280
    %v2321 = vtanh.pop %v2281
    %v2322 = vmul.f32 %v2304, 0.0
    %v2323 = vmul.f32 %v2319, 0.0
    %2326 = vrot.lane.b32.xlu0 %v2320, 32
    %v2327 = vpop.permute.xlu0 %2326
    %2328 = vrot.lane.b32.xlu0 %v2321, 32
    %v2329 = vpop.permute.xlu0 %2328
    %v2332 = vmul.f32 %v2304, %v2327
    %v2333 = vmul.f32 %v2319, %v2329
    %2336 = vrot.lane.b32.xlu0 %v2332, 32
    %v2337 = vpop.permute.xlu0 %2336
    %2338 = vrot.lane.b32.xlu0 %v2333, 32
    %v2339 = vpop.permute.xlu0 %2338
    %v2342 = vadd.f32 %v2322, %v2337
    %v2343 = vadd.f32 %v2323, %v2339
    %v2344 = vtanh.pop %v2342
    %v2345 = vtanh.pop %v2343
    %2348 = vrot.lane.b32.xlu0 %v2344, 32
    %v2349 = vpop.permute.xlu0 %2348
    %2350 = vrot.lane.b32.xlu0 %v2345, 32
    %v2351 = vpop.permute.xlu0 %2350
    %v2354 = vmul.f32 %v2304, %v2349
    %v2355 = vmul.f32 %v2319, %v2351
    %v2356 = vld [vmem:[#allocation3 + $0x20] sm:$0xff]
    %v2357 = vld [vmem:[#allocation3 + $0x28] sm:$0xff]
    %v2358 = vpack.c.bf16 %v2277, %v2276
    %2360 = vrot.lane.b32.xlu0 %v2358, 64
    %v2361 = vpop.permute.xlu0 %2360
    %v2363 = vsel %vm327, %v2361, 0
    %2365 = vmatpush.bf16.msra.mxu0 0
    %2366 = vmatpush.bf16.msra.mxu0 0
    %2367 = vmatpush.bf16.msra.mxu0 0
    %2368 = vmatpush.bf16.msra.mxu0 0
    %2369 = vmatpush.bf16.msra.mxu0 0
    %2370 = vmatpush.bf16.msra.mxu0 0
    %2371 = vmatpush.bf16.msra.mxu0 %v2185
    %2372 = vmatpush.bf16.msra.mxu0 %v2184
    %2373 = vmatmul.bf16.gmra.mxu0 %v2363
    %v2374 = vpop.f32.mrf.mxu0
    %v2375 = vadd.f32 0.0, %v2374
    %v2376 = vpop.f32.mrf.mxu0
    %v2377 = vadd.f32 0.0, %v2376
    %2378 = vdwg.mxu0
    %v2379 = vadd.f32 %v2356, %v2375
    %v2380 = vadd.f32 %v2357, %v2377
    %v2381 = vxor.u32 %v2379, 2147483648
    %v2382 = vxor.u32 %v2380, 2147483648
    %v2383 = vmul.f32 %v2381, 1.442695
    %v2384 = vpow.pop %v2383
    %v2385 = vmul.f32 %v2382, 1.442695
    %v2386 = vpow.pop %v2385
    %v2387 = vadd.f32 %v2384, 1.0
    %v2388 = vadd.f32 %v2386, 1.0
    %v2389 = vrcp.pop %v2387
    %v2390 = vmul.f32 %v2387, %v2389
    %v2391 = vsub.f32 1.0, %v2390
    %v2392 = vmul.f32 %v2389, %v2391
    %v2393 = vadd.f32 %v2389, %v2392
    %vm2394 = vweird.f32 %v2387
    %vm2395 = vweird.f32 %v2389
    %vm2396 = vmor %vm2394, %vm2395
    %v2397 = vsel %vm2396, %v2389, %v2393
    %v2398 = vand.u32 2147483647, %v2387
    %vm2399 = vcmp.eq.f32.partialorder %v2398, 8.507059e+37
    %v2400 = vand.u32 %v2387, 2147483648
    %v2401 = vor.u32 1.1754944e-38, %v2400
    %v2402 = vsel %vm2399, %v2401, %v2397
    %v2403 = vmul.f32 1.0, %v2402
    %v2404 = vrcp.pop %v2388
    %v2405 = vmul.f32 %v2388, %v2404
    %v2406 = vsub.f32 1.0, %v2405
    %v2407 = vmul.f32 %v2404, %v2406
    %v2408 = vadd.f32 %v2404, %v2407
    %vm2409 = vweird.f32 %v2388
    %vm2410 = vweird.f32 %v2404
    %vm2411 = vmor %vm2409, %vm2410
    %v2412 = vsel %vm2411, %v2404, %v2408
    %v2413 = vand.u32 2147483647, %v2388
    %vm2414 = vcmp.eq.f32.partialorder %v2413, 8.507059e+37
    %v2415 = vand.u32 %v2388, 2147483648
    %v2416 = vor.u32 1.1754944e-38, %v2415
    %v2417 = vsel %vm2414, %v2416, %v2412
    %v2418 = vmul.f32 1.0, %v2417
    %v2419 = vtanh.pop %v2379
    %v2420 = vtanh.pop %v2380
    %v2421 = vmul.f32 %v2403, %v2264
    %v2422 = vmul.f32 %v2418, %v2265
    %2425 = vrot.lane.b32.xlu0 %v2419, 32
    %v2426 = vpop.permute.xlu0 %2425
    %2427 = vrot.lane.b32.xlu0 %v2420, 32
    %v2428 = vpop.permute.xlu0 %2427
    %v2431 = vmul.f32 %v2403, %v2426
    %v2432 = vmul.f32 %v2418, %v2428
    %2435 = vrot.lane.b32.xlu0 %v2431, 32
    %v2436 = vpop.permute.xlu0 %2435
    %2437 = vrot.lane.b32.xlu0 %v2432, 32
    %v2438 = vpop.permute.xlu0 %2437
    %v2441 = vadd.f32 %v2421, %v2436
    %v2442 = vadd.f32 %v2422, %v2438
    %v2443 = vtanh.pop %v2441
    %v2444 = vtanh.pop %v2442
    %2447 = vrot.lane.b32.xlu0 %v2443, 32
    %v2448 = vpop.permute.xlu0 %2447
    %2449 = vrot.lane.b32.xlu0 %v2444, 32
    %v2450 = vpop.permute.xlu0 %2449
    %v2453 = vmul.f32 %v2403, %v2448
    %v2454 = vmul.f32 %v2418, %v2450
    %v2455 = vld [vmem:[#allocation3 + $0x30] sm:$0xff]
    %v2456 = vld [vmem:[#allocation3 + $0x38] sm:$0xff]
    %v2457 = vpack.c.bf16 %v2355, %v2354
    %2459 = vrot.lane.b32.xlu0 %v2457, 64
    %v2460 = vpop.permute.xlu0 %2459
    %v2462 = vsel %vm327, %v2460, 0
    %2464 = vmatpush.bf16.msra.mxu0 0
    %2465 = vmatpush.bf16.msra.mxu0 0
    %2466 = vmatpush.bf16.msra.mxu0 0
    %2467 = vmatpush.bf16.msra.mxu0 0
    %2468 = vmatpush.bf16.msra.mxu0 0
    %2469 = vmatpush.bf16.msra.mxu0 0
    %2470 = vmatpush.bf16.msra.mxu0 %v2185
    %2471 = vmatpush.bf16.msra.mxu0 %v2184
    %2472 = vmatmul.bf16.gmra.mxu0 %v2462
    %v2473 = vpop.f32.mrf.mxu0
    %v2474 = vadd.f32 0.0, %v2473
    %v2475 = vpop.f32.mrf.mxu0
    %v2476 = vadd.f32 0.0, %v2475
    %2477 = vdwg.mxu0
    %v2478 = vadd.f32 %v2455, %v2474
    %v2479 = vadd.f32 %v2456, %v2476
    %v2480 = vxor.u32 %v2478, 2147483648
    %v2481 = vxor.u32 %v2479, 2147483648
    %v2482 = vmul.f32 %v2480, 1.442695
    %v2483 = vpow.pop %v2482
    %v2484 = vmul.f32 %v2481, 1.442695
    %v2485 = vpow.pop %v2484
    %v2486 = vadd.f32 %v2483, 1.0
    %v2487 = vadd.f32 %v2485, 1.0
    %v2488 = vrcp.pop %v2486
    %v2489 = vmul.f32 %v2486, %v2488
    %v2490 = vsub.f32 1.0, %v2489
    %v2491 = vmul.f32 %v2488, %v2490
    %v2492 = vadd.f32 %v2488, %v2491
    %vm2493 = vweird.f32 %v2486
    %vm2494 = vweird.f32 %v2488
    %vm2495 = vmor %vm2493, %vm2494
    %v2496 = vsel %vm2495, %v2488, %v2492
    %v2497 = vand.u32 2147483647, %v2486
    %vm2498 = vcmp.eq.f32.partialorder %v2497, 8.507059e+37
    %v2499 = vand.u32 %v2486, 2147483648
    %v2500 = vor.u32 1.1754944e-38, %v2499
    %v2501 = vsel %vm2498, %v2500, %v2496
    %v2502 = vmul.f32 1.0, %v2501
    %v2503 = vrcp.pop %v2487
    %v2504 = vmul.f32 %v2487, %v2503
    %v2505 = vsub.f32 1.0, %v2504
    %v2506 = vmul.f32 %v2503, %v2505
    %v2507 = vadd.f32 %v2503, %v2506
    %vm2508 = vweird.f32 %v2487
    %vm2509 = vweird.f32 %v2503
    %vm2510 = vmor %vm2508, %vm2509
    %v2511 = vsel %vm2510, %v2503, %v2507
    %v2512 = vand.u32 2147483647, %v2487
    %vm2513 = vcmp.eq.f32.partialorder %v2512, 8.507059e+37
    %v2514 = vand.u32 %v2487, 2147483648
    %v2515 = vor.u32 1.1754944e-38, %v2514
    %v2516 = vsel %vm2513, %v2515, %v2511
    %v2517 = vmul.f32 1.0, %v2516
    %v2518 = vtanh.pop %v2478
    %v2519 = vtanh.pop %v2479
    %v2520 = vmul.f32 %v2502, %v2342
    %v2521 = vmul.f32 %v2517, %v2343
    %2524 = vrot.lane.b32.xlu0 %v2518, 32
    %v2525 = vpop.permute.xlu0 %2524
    %2526 = vrot.lane.b32.xlu0 %v2519, 32
    %v2527 = vpop.permute.xlu0 %2526
    %v2530 = vmul.f32 %v2502, %v2525
    %v2531 = vmul.f32 %v2517, %v2527
    %2534 = vrot.lane.b32.xlu0 %v2530, 32
    %v2535 = vpop.permute.xlu0 %2534
    %2536 = vrot.lane.b32.xlu0 %v2531, 32
    %v2537 = vpop.permute.xlu0 %2536
    %v2540 = vadd.f32 %v2520, %v2535
    %v2541 = vadd.f32 %v2521, %v2537
    %v2542 = vtanh.pop %v2540
    %v2543 = vtanh.pop %v2541
    %2546 = vrot.lane.b32.xlu0 %v2542, 32
    %v2547 = vpop.permute.xlu0 %2546
    %2548 = vrot.lane.b32.xlu0 %v2543, 32
    %v2549 = vpop.permute.xlu0 %2548
    %v2552 = vmul.f32 %v2502, %v2547
    %v2553 = vmul.f32 %v2517, %v2549
    %v2554 = vld [vmem:[#allocation3 + $0x40] sm:$0xff]
    %v2555 = vld [vmem:[#allocation3 + $0x48] sm:$0xff]
    %v2556 = vpack.c.bf16 %v2454, %v2453
    %2558 = vrot.lane.b32.xlu0 %v2556, 64
    %v2559 = vpop.permute.xlu0 %2558
    %v2561 = vsel %vm327, %v2559, 0
    %2563 = vmatpush.bf16.msra.mxu0 0
    %2564 = vmatpush.bf16.msra.mxu0 0
    %2565 = vmatpush.bf16.msra.mxu0 0
    %2566 = vmatpush.bf16.msra.mxu0 0
    %2567 = vmatpush.bf16.msra.mxu0 0
    %2568 = vmatpush.bf16.msra.mxu0 0
    %2569 = vmatpush.bf16.msra.mxu0 %v2185
    %2570 = vmatpush.bf16.msra.mxu0 %v2184
    %2571 = vmatmul.bf16.gmra.mxu0 %v2561
    %v2572 = vpop.f32.mrf.mxu0
    %v2573 = vadd.f32 0.0, %v2572
    %v2574 = vpop.f32.mrf.mxu0
    %v2575 = vadd.f32 0.0, %v2574
    %2576 = vdwg.mxu0
    %v2577 = vadd.f32 %v2554, %v2573
    %v2578 = vadd.f32 %v2555, %v2575
    %v2579 = vxor.u32 %v2577, 2147483648
    %v2580 = vxor.u32 %v2578, 2147483648
    %v2581 = vmul.f32 %v2579, 1.442695
    %v2582 = vpow.pop %v2581
    %v2583 = vmul.f32 %v2580, 1.442695
    %v2584 = vpow.pop %v2583
    %v2585 = vadd.f32 %v2582, 1.0
    %v2586 = vadd.f32 %v2584, 1.0
    %v2587 = vrcp.pop %v2585
    %v2588 = vmul.f32 %v2585, %v2587
    %v2589 = vsub.f32 1.0, %v2588
    %v2590 = vmul.f32 %v2587, %v2589
    %v2591 = vadd.f32 %v2587, %v2590
    %vm2592 = vweird.f32 %v2585
    %vm2593 = vweird.f32 %v2587
    %vm2594 = vmor %vm2592, %vm2593
    %v2595 = vsel %vm2594, %v2587, %v2591
    %v2596 = vand.u32 2147483647, %v2585
    %vm2597 = vcmp.eq.f32.partialorder %v2596, 8.507059e+37
    %v2598 = vand.u32 %v2585, 2147483648
    %v2599 = vor.u32 1.1754944e-38, %v2598
    %v2600 = vsel %vm2597, %v2599, %v2595
    %v2601 = vmul.f32 1.0, %v2600
    %v2602 = vrcp.pop %v2586
    %v2603 = vmul.f32 %v2586, %v2602
    %v2604 = vsub.f32 1.0, %v2603
    %v2605 = vmul.f32 %v2602, %v2604
    %v2606 = vadd.f32 %v2602, %v2605
    %vm2607 = vweird.f32 %v2586
    %vm2608 = vweird.f32 %v2602
    %vm2609 = vmor %vm2607, %vm2608
    %v2610 = vsel %vm2609, %v2602, %v2606
    %v2611 = vand.u32 2147483647, %v2586
    %vm2612 = vcmp.eq.f32.partialorder %v2611, 8.507059e+37
    %v2613 = vand.u32 %v2586, 2147483648
    %v2614 = vor.u32 1.1754944e-38, %v2613
    %v2615 = vsel %vm2612, %v2614, %v2610
    %v2616 = vmul.f32 1.0, %v2615
    %v2617 = vtanh.pop %v2577
    %v2618 = vtanh.pop %v2578
    %v2619 = vmul.f32 %v2601, %v2441
    %v2620 = vmul.f32 %v2616, %v2442
    %2623 = vrot.lane.b32.xlu0 %v2617, 32
    %v2624 = vpop.permute.xlu0 %2623
    %2625 = vrot.lane.b32.xlu0 %v2618, 32
    %v2626 = vpop.permute.xlu0 %2625
    %v2629 = vmul.f32 %v2601, %v2624
    %v2630 = vmul.f32 %v2616, %v2626
    %2633 = vrot.lane.b32.xlu0 %v2629, 32
    %v2634 = vpop.permute.xlu0 %2633
    %2635 = vrot.lane.b32.xlu0 %v2630, 32
    %v2636 = vpop.permute.xlu0 %2635
    %v2639 = vadd.f32 %v2619, %v2634
    %v2640 = vadd.f32 %v2620, %v2636
    %v2641 = vtanh.pop %v2639
    %v2642 = vtanh.pop %v2640
    %2645 = vrot.lane.b32.xlu0 %v2641, 32
    %v2646 = vpop.permute.xlu0 %2645
    %2647 = vrot.lane.b32.xlu0 %v2642, 32
    %v2648 = vpop.permute.xlu0 %2647
    %v2651 = vmul.f32 %v2601, %v2646
    %v2652 = vmul.f32 %v2616, %v2648
    %v2653 = vld [vmem:[#allocation3 + $0x50] sm:$0xff]
    %v2654 = vld [vmem:[#allocation3 + $0x58] sm:$0xff]
    %v2655 = vpack.c.bf16 %v2553, %v2552
    %2657 = vrot.lane.b32.xlu0 %v2655, 64
    %v2658 = vpop.permute.xlu0 %2657
    %v2660 = vsel %vm327, %v2658, 0
    %2662 = vmatpush.bf16.msra.mxu0 0
    %2663 = vmatpush.bf16.msra.mxu0 0
    %2664 = vmatpush.bf16.msra.mxu0 0
    %2665 = vmatpush.bf16.msra.mxu0 0
    %2666 = vmatpush.bf16.msra.mxu0 0
    %2667 = vmatpush.bf16.msra.mxu0 0
    %2668 = vmatpush.bf16.msra.mxu0 %v2185
    %2669 = vmatpush.bf16.msra.mxu0 %v2184
    %2670 = vmatmul.bf16.gmra.mxu0 %v2660
    %v2671 = vpop.f32.mrf.mxu0
    %v2672 = vadd.f32 0.0, %v2671
    %v2673 = vpop.f32.mrf.mxu0
    %v2674 = vadd.f32 0.0, %v2673
    %2675 = vdwg.mxu0
    %v2676 = vadd.f32 %v2653, %v2672
    %v2677 = vadd.f32 %v2654, %v2674
    %v2678 = vxor.u32 %v2676, 2147483648
    %v2679 = vxor.u32 %v2677, 2147483648
    %v2680 = vmul.f32 %v2678, 1.442695
    %v2681 = vpow.pop %v2680
    %v2682 = vmul.f32 %v2679, 1.442695
    %v2683 = vpow.pop %v2682
    %v2684 = vadd.f32 %v2681, 1.0
    %v2685 = vadd.f32 %v2683, 1.0
    %v2686 = vrcp.pop %v2684
    %v2687 = vmul.f32 %v2684, %v2686
    %v2688 = vsub.f32 1.0, %v2687
    %v2689 = vmul.f32 %v2686, %v2688
    %v2690 = vadd.f32 %v2686, %v2689
    %vm2691 = vweird.f32 %v2684
    %vm2692 = vweird.f32 %v2686
    %vm2693 = vmor %vm2691, %vm2692
    %v2694 = vsel %vm2693, %v2686, %v2690
    %v2695 = vand.u32 2147483647, %v2684
    %vm2696 = vcmp.eq.f32.partialorder %v2695, 8.507059e+37
    %v2697 = vand.u32 %v2684, 2147483648
    %v2698 = vor.u32 1.1754944e-38, %v2697
    %v2699 = vsel %vm2696, %v2698, %v2694
    %v2700 = vmul.f32 1.0, %v2699
    %v2701 = vrcp.pop %v2685
    %v2702 = vmul.f32 %v2685, %v2701
    %v2703 = vsub.f32 1.0, %v2702
    %v2704 = vmul.f32 %v2701, %v2703
    %v2705 = vadd.f32 %v2701, %v2704
    %vm2706 = vweird.f32 %v2685
    %vm2707 = vweird.f32 %v2701
    %vm2708 = vmor %vm2706, %vm2707
    %v2709 = vsel %vm2708, %v2701, %v2705
    %v2710 = vand.u32 2147483647, %v2685
    %vm2711 = vcmp.eq.f32.partialorder %v2710, 8.507059e+37
    %v2712 = vand.u32 %v2685, 2147483648
    %v2713 = vor.u32 1.1754944e-38, %v2712
    %v2714 = vsel %vm2711, %v2713, %v2709
    %v2715 = vmul.f32 1.0, %v2714
    %v2716 = vtanh.pop %v2676
    %v2717 = vtanh.pop %v2677
    %v2718 = vmul.f32 %v2700, %v2540
    %v2719 = vmul.f32 %v2715, %v2541
    %2722 = vrot.lane.b32.xlu0 %v2716, 32
    %v2723 = vpop.permute.xlu0 %2722
    %2724 = vrot.lane.b32.xlu0 %v2717, 32
    %v2725 = vpop.permute.xlu0 %2724
    %v2728 = vmul.f32 %v2700, %v2723
    %v2729 = vmul.f32 %v2715, %v2725
    %2732 = vrot.lane.b32.xlu0 %v2728, 32
    %v2733 = vpop.permute.xlu0 %2732
    %2734 = vrot.lane.b32.xlu0 %v2729, 32
    %v2735 = vpop.permute.xlu0 %2734
    %v2738 = vadd.f32 %v2718, %v2733
    %v2739 = vadd.f32 %v2719, %v2735
    %v2740 = vtanh.pop %v2738
    %v2741 = vtanh.pop %v2739
    %2744 = vrot.lane.b32.xlu0 %v2740, 32
    %v2745 = vpop.permute.xlu0 %2744
    %2746 = vrot.lane.b32.xlu0 %v2741, 32
    %v2747 = vpop.permute.xlu0 %2746
    %v2750 = vmul.f32 %v2700, %v2745
    %v2751 = vmul.f32 %v2715, %v2747
    %v2752 = vld [vmem:[#allocation3 + $0x60] sm:$0xff]
    %v2753 = vld [vmem:[#allocation3 + $0x68] sm:$0xff]
    %v2754 = vpack.c.bf16 %v2652, %v2651
    %2756 = vrot.lane.b32.xlu0 %v2754, 64
    %v2757 = vpop.permute.xlu0 %2756
    %v2759 = vsel %vm327, %v2757, 0
    %2761 = vmatpush.bf16.msra.mxu0 0
    %2762 = vmatpush.bf16.msra.mxu0 0
    %2763 = vmatpush.bf16.msra.mxu0 0
    %2764 = vmatpush.bf16.msra.mxu0 0
    %2765 = vmatpush.bf16.msra.mxu0 0
    %2766 = vmatpush.bf16.msra.mxu0 0
    %2767 = vmatpush.bf16.msra.mxu0 %v2185
    %2768 = vmatpush.bf16.msra.mxu0 %v2184
    %2769 = vmatmul.bf16.gmra.mxu0 %v2759
    %v2770 = vpop.f32.mrf.mxu0
    %v2771 = vadd.f32 0.0, %v2770
    %v2772 = vpop.f32.mrf.mxu0
    %v2773 = vadd.f32 0.0, %v2772
    %2774 = vdwg.mxu0
    %v2775 = vadd.f32 %v2752, %v2771
    %v2776 = vadd.f32 %v2753, %v2773
    %v2777 = vxor.u32 %v2775, 2147483648
    %v2778 = vxor.u32 %v2776, 2147483648
    %v2779 = vmul.f32 %v2777, 1.442695
    %v2780 = vpow.pop %v2779
    %v2781 = vmul.f32 %v2778, 1.442695
    %v2782 = vpow.pop %v2781
    %v2783 = vadd.f32 %v2780, 1.0
    %v2784 = vadd.f32 %v2782, 1.0
    %v2785 = vrcp.pop %v2783
    %v2786 = vmul.f32 %v2783, %v2785
    %v2787 = vsub.f32 1.0, %v2786
    %v2788 = vmul.f32 %v2785, %v2787
    %v2789 = vadd.f32 %v2785, %v2788
    %vm2790 = vweird.f32 %v2783
    %vm2791 = vweird.f32 %v2785
    %vm2792 = vmor %vm2790, %vm2791
    %v2793 = vsel %vm2792, %v2785, %v2789
    %v2794 = vand.u32 2147483647, %v2783
    %vm2795 = vcmp.eq.f32.partialorder %v2794, 8.507059e+37
    %v2796 = vand.u32 %v2783, 2147483648
    %v2797 = vor.u32 1.1754944e-38, %v2796
    %v2798 = vsel %vm2795, %v2797, %v2793
    %v2799 = vmul.f32 1.0, %v2798
    %v2800 = vrcp.pop %v2784
    %v2801 = vmul.f32 %v2784, %v2800
    %v2802 = vsub.f32 1.0, %v2801
    %v2803 = vmul.f32 %v2800, %v2802
    %v2804 = vadd.f32 %v2800, %v2803
    %vm2805 = vweird.f32 %v2784
    %vm2806 = vweird.f32 %v2800
    %vm2807 = vmor %vm2805, %vm2806
    %v2808 = vsel %vm2807, %v2800, %v2804
    %v2809 = vand.u32 2147483647, %v2784
    %vm2810 = vcmp.eq.f32.partialorder %v2809, 8.507059e+37
    %v2811 = vand.u32 %v2784, 2147483648
    %v2812 = vor.u32 1.1754944e-38, %v2811
    %v2813 = vsel %vm2810, %v2812, %v2808
    %v2814 = vmul.f32 1.0, %v2813
    %v2815 = vtanh.pop %v2775
    %v2816 = vtanh.pop %v2776
    %v2817 = vmul.f32 %v2799, %v2639
    %v2818 = vmul.f32 %v2814, %v2640
    %2821 = vrot.lane.b32.xlu0 %v2815, 32
    %v2822 = vpop.permute.xlu0 %2821
    %2823 = vrot.lane.b32.xlu0 %v2816, 32
    %v2824 = vpop.permute.xlu0 %2823
    %v2827 = vmul.f32 %v2799, %v2822
    %v2828 = vmul.f32 %v2814, %v2824
    %2831 = vrot.lane.b32.xlu0 %v2827, 32
    %v2832 = vpop.permute.xlu0 %2831
    %2833 = vrot.lane.b32.xlu0 %v2828, 32
    %v2834 = vpop.permute.xlu0 %2833
    %v2837 = vadd.f32 %v2817, %v2832
    %v2838 = vadd.f32 %v2818, %v2834
    %v2839 = vtanh.pop %v2837
    %v2840 = vtanh.pop %v2838
    %2843 = vrot.lane.b32.xlu0 %v2839, 32
    %v2844 = vpop.permute.xlu0 %2843
    %2845 = vrot.lane.b32.xlu0 %v2840, 32
    %v2846 = vpop.permute.xlu0 %2845
    %v2849 = vmul.f32 %v2799, %v2844
    %v2850 = vmul.f32 %v2814, %v2846
    %v2851 = vld [vmem:[#allocation3 + $0x70] sm:$0xff]
    %v2852 = vld [vmem:[#allocation3 + $0x78] sm:$0xff]
    %v2853 = vpack.c.bf16 %v2751, %v2750
    %2855 = vrot.lane.b32.xlu0 %v2853, 64
    %v2856 = vpop.permute.xlu0 %2855
    %v2858 = vsel %vm327, %v2856, 0
    %2860 = vmatpush.bf16.msra.mxu0 0
    %2861 = vmatpush.bf16.msra.mxu0 0
    %2862 = vmatpush.bf16.msra.mxu0 0
    %2863 = vmatpush.bf16.msra.mxu0 0
    %2864 = vmatpush.bf16.msra.mxu0 0
    %2865 = vmatpush.bf16.msra.mxu0 0
    %2866 = vmatpush.bf16.msra.mxu0 %v2185
    %2867 = vmatpush.bf16.msra.mxu0 %v2184
    %2868 = vmatmul.bf16.gmra.mxu0 %v2858
    %v2869 = vpop.f32.mrf.mxu0
    %v2870 = vadd.f32 0.0, %v2869
    %v2871 = vpop.f32.mrf.mxu0
    %v2872 = vadd.f32 0.0, %v2871
    %2873 = vdwg.mxu0
    %v2874 = vadd.f32 %v2851, %v2870
    %v2875 = vadd.f32 %v2852, %v2872
    %v2876 = vxor.u32 %v2874, 2147483648
    %v2877 = vxor.u32 %v2875, 2147483648
    %v2878 = vmul.f32 %v2876, 1.442695
    %v2879 = vpow.pop %v2878
    %v2880 = vmul.f32 %v2877, 1.442695
    %v2881 = vpow.pop %v2880
    %v2882 = vadd.f32 %v2879, 1.0
    %v2883 = vadd.f32 %v2881, 1.0
    %v2884 = vrcp.pop %v2882
    %v2885 = vmul.f32 %v2882, %v2884
    %v2886 = vsub.f32 1.0, %v2885
    %v2887 = vmul.f32 %v2884, %v2886
    %v2888 = vadd.f32 %v2884, %v2887
    %vm2889 = vweird.f32 %v2882
    %vm2890 = vweird.f32 %v2884
    %vm2891 = vmor %vm2889, %vm2890
    %v2892 = vsel %vm2891, %v2884, %v2888
    %v2893 = vand.u32 2147483647, %v2882
    %vm2894 = vcmp.eq.f32.partialorder %v2893, 8.507059e+37
    %v2895 = vand.u32 %v2882, 2147483648
    %v2896 = vor.u32 1.1754944e-38, %v2895
    %v2897 = vsel %vm2894, %v2896, %v2892
    %v2898 = vmul.f32 1.0, %v2897
    %v2899 = vrcp.pop %v2883
    %v2900 = vmul.f32 %v2883, %v2899
    %v2901 = vsub.f32 1.0, %v2900
    %v2902 = vmul.f32 %v2899, %v2901
    %v2903 = vadd.f32 %v2899, %v2902
    %vm2904 = vweird.f32 %v2883
    %vm2905 = vweird.f32 %v2899
    %vm2906 = vmor %vm2904, %vm2905
    %v2907 = vsel %vm2906, %v2899, %v2903
    %v2908 = vand.u32 2147483647, %v2883
    %vm2909 = vcmp.eq.f32.partialorder %v2908, 8.507059e+37
    %v2910 = vand.u32 %v2883, 2147483648
    %v2911 = vor.u32 1.1754944e-38, %v2910
    %v2912 = vsel %vm2909, %v2911, %v2907
    %v2913 = vmul.f32 1.0, %v2912
    %v2914 = vtanh.pop %v2874
    %v2915 = vtanh.pop %v2875
    %v2916 = vmul.f32 %v2898, %v2738
    %v2917 = vmul.f32 %v2913, %v2739
    %2920 = vrot.lane.b32.xlu0 %v2914, 32
    %v2921 = vpop.permute.xlu0 %2920
    %2922 = vrot.lane.b32.xlu0 %v2915, 32
    %v2923 = vpop.permute.xlu0 %2922
    %v2926 = vmul.f32 %v2898, %v2921
    %v2927 = vmul.f32 %v2913, %v2923
    %2930 = vrot.lane.b32.xlu0 %v2926, 32
    %v2931 = vpop.permute.xlu0 %2930
    %2932 = vrot.lane.b32.xlu0 %v2927, 32
    %v2933 = vpop.permute.xlu0 %2932
    %v2936 = vadd.f32 %v2916, %v2931
    %v2937 = vadd.f32 %v2917, %v2933
    %v2938 = vtanh.pop %v2936
    %v2939 = vtanh.pop %v2937
    %2942 = vrot.lane.b32.xlu0 %v2938, 32
    %v2943 = vpop.permute.xlu0 %2942
    %2944 = vrot.lane.b32.xlu0 %v2939, 32
    %v2945 = vpop.permute.xlu0 %2944
    %v2948 = vmul.f32 %v2898, %v2943
    %v2949 = vmul.f32 %v2913, %v2945
    %v2950 = vld [vmem:[#allocation3 + $0x80] sm:$0xff]
    %v2951 = vld [vmem:[#allocation3 + $0x88] sm:$0xff]
    %v2952 = vpack.c.bf16 %v2850, %v2849
    %2954 = vrot.lane.b32.xlu0 %v2952, 64
    %v2955 = vpop.permute.xlu0 %2954
    %v2957 = vsel %vm327, %v2955, 0
    %2959 = vmatpush.bf16.msra.mxu0 0
    %2960 = vmatpush.bf16.msra.mxu0 0
    %2961 = vmatpush.bf16.msra.mxu0 0
    %2962 = vmatpush.bf16.msra.mxu0 0
    %2963 = vmatpush.bf16.msra.mxu0 0
    %2964 = vmatpush.bf16.msra.mxu0 0
    %2965 = vmatpush.bf16.msra.mxu0 %v2185
    %2966 = vmatpush.bf16.msra.mxu0 %v2184
    %2967 = vmatmul.bf16.gmra.mxu0 %v2957
    %v2968 = vpop.f32.mrf.mxu0
    %v2969 = vadd.f32 0.0, %v2968
    %v2970 = vpop.f32.mrf.mxu0
    %v2971 = vadd.f32 0.0, %v2970
    %2972 = vdwg.mxu0
    %v2973 = vadd.f32 %v2950, %v2969
    %v2974 = vadd.f32 %v2951, %v2971
    %v2975 = vxor.u32 %v2973, 2147483648
    %v2976 = vxor.u32 %v2974, 2147483648
    %v2977 = vmul.f32 %v2975, 1.442695
    %v2978 = vpow.pop %v2977
    %v2979 = vmul.f32 %v2976, 1.442695
    %v2980 = vpow.pop %v2979
    %v2981 = vadd.f32 %v2978, 1.0
    %v2982 = vadd.f32 %v2980, 1.0
    %v2983 = vrcp.pop %v2981
    %v2984 = vmul.f32 %v2981, %v2983
    %v2985 = vsub.f32 1.0, %v2984
    %v2986 = vmul.f32 %v2983, %v2985
    %v2987 = vadd.f32 %v2983, %v2986
    %vm2988 = vweird.f32 %v2981
    %vm2989 = vweird.f32 %v2983
    %vm2990 = vmor %vm2988, %vm2989
    %v2991 = vsel %vm2990, %v2983, %v2987
    %v2992 = vand.u32 2147483647, %v2981
    %vm2993 = vcmp.eq.f32.partialorder %v2992, 8.507059e+37
    %v2994 = vand.u32 %v2981, 2147483648
    %v2995 = vor.u32 1.1754944e-38, %v2994
    %v2996 = vsel %vm2993, %v2995, %v2991
    %v2997 = vmul.f32 1.0, %v2996
    %v2998 = vrcp.pop %v2982
    %v2999 = vmul.f32 %v2982, %v2998
    %v3000 = vsub.f32 1.0, %v2999
    %v3001 = vmul.f32 %v2998, %v3000
    %v3002 = vadd.f32 %v2998, %v3001
    %vm3003 = vweird.f32 %v2982
    %vm3004 = vweird.f32 %v2998
    %vm3005 = vmor %vm3003, %vm3004
    %v3006 = vsel %vm3005, %v2998, %v3002
    %v3007 = vand.u32 2147483647, %v2982
    %vm3008 = vcmp.eq.f32.partialorder %v3007, 8.507059e+37
    %v3009 = vand.u32 %v2982, 2147483648
    %v3010 = vor.u32 1.1754944e-38, %v3009
    %v3011 = vsel %vm3008, %v3010, %v3006
    %v3012 = vmul.f32 1.0, %v3011
    %v3013 = vtanh.pop %v2973
    %v3014 = vtanh.pop %v2974
    %v3015 = vmul.f32 %v2997, %v2837
    %v3016 = vmul.f32 %v3012, %v2838
    %3019 = vrot.lane.b32.xlu0 %v3013, 32
    %v3020 = vpop.permute.xlu0 %3019
    %3021 = vrot.lane.b32.xlu0 %v3014, 32
    %v3022 = vpop.permute.xlu0 %3021
    %v3025 = vmul.f32 %v2997, %v3020
    %v3026 = vmul.f32 %v3012, %v3022
    %3029 = vrot.lane.b32.xlu0 %v3025, 32
    %v3030 = vpop.permute.xlu0 %3029
    %3031 = vrot.lane.b32.xlu0 %v3026, 32
    %v3032 = vpop.permute.xlu0 %3031
    %v3035 = vadd.f32 %v3015, %v3030
    %v3036 = vadd.f32 %v3016, %v3032
    %v3037 = vtanh.pop %v3035
    %v3038 = vtanh.pop %v3036
    %3041 = vrot.lane.b32.xlu0 %v3037, 32
    %v3042 = vpop.permute.xlu0 %3041
    %3043 = vrot.lane.b32.xlu0 %v3038, 32
    %v3044 = vpop.permute.xlu0 %3043
    %v3047 = vmul.f32 %v2997, %v3042
    %v3048 = vmul.f32 %v3012, %v3044
    %v3049 = vld [vmem:[#allocation3 + $0x90] sm:$0xff]
    %v3050 = vld [vmem:[#allocation3 + $0x98] sm:$0xff]
    %v3051 = vpack.c.bf16 %v2949, %v2948
    %3053 = vrot.lane.b32.xlu0 %v3051, 64
    %v3054 = vpop.permute.xlu0 %3053
    %v3056 = vsel %vm327, %v3054, 0
    %3058 = vmatpush.bf16.msra.mxu0 0
    %3059 = vmatpush.bf16.msra.mxu0 0
    %3060 = vmatpush.bf16.msra.mxu0 0
    %3061 = vmatpush.bf16.msra.mxu0 0
    %3062 = vmatpush.bf16.msra.mxu0 0
    %3063 = vmatpush.bf16.msra.mxu0 0
    %3064 = vmatpush.bf16.msra.mxu0 %v2185
    %3065 = vmatpush.bf16.msra.mxu0 %v2184
    %3066 = vmatmul.bf16.gmra.mxu0 %v3056
    %v3067 = vpop.f32.mrf.mxu0
    %v3068 = vadd.f32 0.0, %v3067
    %v3069 = vpop.f32.mrf.mxu0
    %v3070 = vadd.f32 0.0, %v3069
    %3071 = vdwg.mxu0
    %v3072 = vadd.f32 %v3049, %v3068
    %v3073 = vadd.f32 %v3050, %v3070
    %v3074 = vxor.u32 %v3072, 2147483648
    %v3075 = vxor.u32 %v3073, 2147483648
    %v3076 = vmul.f32 %v3074, 1.442695
    %v3077 = vpow.pop %v3076
    %v3078 = vmul.f32 %v3075, 1.442695
    %v3079 = vpow.pop %v3078
    %v3080 = vadd.f32 %v3077, 1.0
    %v3081 = vadd.f32 %v3079, 1.0
    %v3082 = vrcp.pop %v3080
    %v3083 = vmul.f32 %v3080, %v3082
    %v3084 = vsub.f32 1.0, %v3083
    %v3085 = vmul.f32 %v3082, %v3084
    %v3086 = vadd.f32 %v3082, %v3085
    %vm3087 = vweird.f32 %v3080
    %vm3088 = vweird.f32 %v3082
    %vm3089 = vmor %vm3087, %vm3088
    %v3090 = vsel %vm3089, %v3082, %v3086
    %v3091 = vand.u32 2147483647, %v3080
    %vm3092 = vcmp.eq.f32.partialorder %v3091, 8.507059e+37
    %v3093 = vand.u32 %v3080, 2147483648
    %v3094 = vor.u32 1.1754944e-38, %v3093
    %v3095 = vsel %vm3092, %v3094, %v3090
    %v3096 = vmul.f32 1.0, %v3095
    %v3097 = vrcp.pop %v3081
    %v3098 = vmul.f32 %v3081, %v3097
    %v3099 = vsub.f32 1.0, %v3098
    %v3100 = vmul.f32 %v3097, %v3099
    %v3101 = vadd.f32 %v3097, %v3100
    %vm3102 = vweird.f32 %v3081
    %vm3103 = vweird.f32 %v3097
    %vm3104 = vmor %vm3102, %vm3103
    %v3105 = vsel %vm3104, %v3097, %v3101
    %v3106 = vand.u32 2147483647, %v3081
    %vm3107 = vcmp.eq.f32.partialorder %v3106, 8.507059e+37
    %v3108 = vand.u32 %v3081, 2147483648
    %v3109 = vor.u32 1.1754944e-38, %v3108
    %v3110 = vsel %vm3107, %v3109, %v3105
    %v3111 = vmul.f32 1.0, %v3110
    %v3112 = vtanh.pop %v3072
    %v3113 = vtanh.pop %v3073
    %v3114 = vmul.f32 %v3096, %v2936
    %v3115 = vmul.f32 %v3111, %v2937
    %3118 = vrot.lane.b32.xlu0 %v3112, 32
    %v3119 = vpop.permute.xlu0 %3118
    %3120 = vrot.lane.b32.xlu0 %v3113, 32
    %v3121 = vpop.permute.xlu0 %3120
    %v3124 = vmul.f32 %v3096, %v3119
    %v3125 = vmul.f32 %v3111, %v3121
    %3128 = vrot.lane.b32.xlu0 %v3124, 32
    %v3129 = vpop.permute.xlu0 %3128
    %3130 = vrot.lane.b32.xlu0 %v3125, 32
    %v3131 = vpop.permute.xlu0 %3130
    %v3134 = vadd.f32 %v3114, %v3129
    %v3135 = vadd.f32 %v3115, %v3131
    %v3136 = vtanh.pop %v3134
    %v3137 = vtanh.pop %v3135
    %3140 = vrot.lane.b32.xlu0 %v3136, 32
    %v3141 = vpop.permute.xlu0 %3140
    %3142 = vrot.lane.b32.xlu0 %v3137, 32
    %v3143 = vpop.permute.xlu0 %3142
    %v3146 = vmul.f32 %v3096, %v3141
    %v3147 = vmul.f32 %v3111, %v3143
    %v3148 = vld [vmem:[#allocation3 + $0xa0] sm:$0xff]
    %v3149 = vld [vmem:[#allocation3 + $0xa8] sm:$0xff]
    %v3150 = vpack.c.bf16 %v3048, %v3047
    %3152 = vrot.lane.b32.xlu0 %v3150, 64
    %v3153 = vpop.permute.xlu0 %3152
    %v3155 = vsel %vm327, %v3153, 0
    %3157 = vmatpush.bf16.msra.mxu0 0
    %3158 = vmatpush.bf16.msra.mxu0 0
    %3159 = vmatpush.bf16.msra.mxu0 0
    %3160 = vmatpush.bf16.msra.mxu0 0
    %3161 = vmatpush.bf16.msra.mxu0 0
    %3162 = vmatpush.bf16.msra.mxu0 0
    %3163 = vmatpush.bf16.msra.mxu0 %v2185
    %3164 = vmatpush.bf16.msra.mxu0 %v2184
    %3165 = vmatmul.bf16.gmra.mxu0 %v3155
    %v3166 = vpop.f32.mrf.mxu0
    %v3167 = vadd.f32 0.0, %v3166
    %v3168 = vpop.f32.mrf.mxu0
    %v3169 = vadd.f32 0.0, %v3168
    %3170 = vdwg.mxu0
    %v3171 = vadd.f32 %v3148, %v3167
    %v3172 = vadd.f32 %v3149, %v3169
    %v3173 = vxor.u32 %v3171, 2147483648
    %v3174 = vxor.u32 %v3172, 2147483648
    %v3175 = vmul.f32 %v3173, 1.442695
    %v3176 = vpow.pop %v3175
    %v3177 = vmul.f32 %v3174, 1.442695
    %v3178 = vpow.pop %v3177
    %v3179 = vadd.f32 %v3176, 1.0
    %v3180 = vadd.f32 %v3178, 1.0
    %v3181 = vrcp.pop %v3179
    %v3182 = vmul.f32 %v3179, %v3181
    %v3183 = vsub.f32 1.0, %v3182
    %v3184 = vmul.f32 %v3181, %v3183
    %v3185 = vadd.f32 %v3181, %v3184
    %vm3186 = vweird.f32 %v3179
    %vm3187 = vweird.f32 %v3181
    %vm3188 = vmor %vm3186, %vm3187
    %v3189 = vsel %vm3188, %v3181, %v3185
    %v3190 = vand.u32 2147483647, %v3179
    %vm3191 = vcmp.eq.f32.partialorder %v3190, 8.507059e+37
    %v3192 = vand.u32 %v3179, 2147483648
    %v3193 = vor.u32 1.1754944e-38, %v3192
    %v3194 = vsel %vm3191, %v3193, %v3189
    %v3195 = vmul.f32 1.0, %v3194
    %v3196 = vrcp.pop %v3180
    %v3197 = vmul.f32 %v3180, %v3196
    %v3198 = vsub.f32 1.0, %v3197
    %v3199 = vmul.f32 %v3196, %v3198
    %v3200 = vadd.f32 %v3196, %v3199
    %vm3201 = vweird.f32 %v3180
    %vm3202 = vweird.f32 %v3196
    %vm3203 = vmor %vm3201, %vm3202
    %v3204 = vsel %vm3203, %v3196, %v3200
    %v3205 = vand.u32 2147483647, %v3180
    %vm3206 = vcmp.eq.f32.partialorder %v3205, 8.507059e+37
    %v3207 = vand.u32 %v3180, 2147483648
    %v3208 = vor.u32 1.1754944e-38, %v3207
    %v3209 = vsel %vm3206, %v3208, %v3204
    %v3210 = vmul.f32 1.0, %v3209
    %v3211 = vtanh.pop %v3171
    %v3212 = vtanh.pop %v3172
    %v3213 = vmul.f32 %v3195, %v3035
    %v3214 = vmul.f32 %v3210, %v3036
    %3217 = vrot.lane.b32.xlu0 %v3211, 32
    %v3218 = vpop.permute.xlu0 %3217
    %3219 = vrot.lane.b32.xlu0 %v3212, 32
    %v3220 = vpop.permute.xlu0 %3219
    %v3223 = vmul.f32 %v3195, %v3218
    %v3224 = vmul.f32 %v3210, %v3220
    %3227 = vrot.lane.b32.xlu0 %v3223, 32
    %v3228 = vpop.permute.xlu0 %3227
    %3229 = vrot.lane.b32.xlu0 %v3224, 32
    %v3230 = vpop.permute.xlu0 %3229
    %v3233 = vadd.f32 %v3213, %v3228
    %v3234 = vadd.f32 %v3214, %v3230
    %v3235 = vtanh.pop %v3233
    %v3236 = vtanh.pop %v3234
    %3239 = vrot.lane.b32.xlu0 %v3235, 32
    %v3240 = vpop.permute.xlu0 %3239
    %3241 = vrot.lane.b32.xlu0 %v3236, 32
    %v3242 = vpop.permute.xlu0 %3241
    %v3245 = vmul.f32 %v3195, %v3240
    %v3246 = vmul.f32 %v3210, %v3242
    %v3247 = vld [vmem:[#allocation3 + $0xb0] sm:$0xff]
    %v3248 = vld [vmem:[#allocation3 + $0xb8] sm:$0xff]
    %v3249 = vpack.c.bf16 %v3147, %v3146
    %3251 = vrot.lane.b32.xlu0 %v3249, 64
    %v3252 = vpop.permute.xlu0 %3251
    %v3254 = vsel %vm327, %v3252, 0
    %3256 = vmatpush.bf16.msra.mxu0 0
    %3257 = vmatpush.bf16.msra.mxu0 0
    %3258 = vmatpush.bf16.msra.mxu0 0
    %3259 = vmatpush.bf16.msra.mxu0 0
    %3260 = vmatpush.bf16.msra.mxu0 0
    %3261 = vmatpush.bf16.msra.mxu0 0
    %3262 = vmatpush.bf16.msra.mxu0 %v2185
    %3263 = vmatpush.bf16.msra.mxu0 %v2184
    %3264 = vmatmul.bf16.gmra.mxu0 %v3254
    %v3265 = vpop.f32.mrf.mxu0
    %v3266 = vadd.f32 0.0, %v3265
    %v3267 = vpop.f32.mrf.mxu0
    %v3268 = vadd.f32 0.0, %v3267
    %3269 = vdwg.mxu0
    %v3270 = vadd.f32 %v3247, %v3266
    %v3271 = vadd.f32 %v3248, %v3268
    %v3272 = vxor.u32 %v3270, 2147483648
    %v3273 = vxor.u32 %v3271, 2147483648
    %v3274 = vmul.f32 %v3272, 1.442695
    %v3275 = vpow.pop %v3274
    %v3276 = vmul.f32 %v3273, 1.442695
    %v3277 = vpow.pop %v3276
    %v3278 = vadd.f32 %v3275, 1.0
    %v3279 = vadd.f32 %v3277, 1.0
    %v3280 = vrcp.pop %v3278
    %v3281 = vmul.f32 %v3278, %v3280
    %v3282 = vsub.f32 1.0, %v3281
    %v3283 = vmul.f32 %v3280, %v3282
    %v3284 = vadd.f32 %v3280, %v3283
    %vm3285 = vweird.f32 %v3278
    %vm3286 = vweird.f32 %v3280
    %vm3287 = vmor %vm3285, %vm3286
    %v3288 = vsel %vm3287, %v3280, %v3284
    %v3289 = vand.u32 2147483647, %v3278
    %vm3290 = vcmp.eq.f32.partialorder %v3289, 8.507059e+37
    %v3291 = vand.u32 %v3278, 2147483648
    %v3292 = vor.u32 1.1754944e-38, %v3291
    %v3293 = vsel %vm3290, %v3292, %v3288
    %v3294 = vmul.f32 1.0, %v3293
    %v3295 = vrcp.pop %v3279
    %v3296 = vmul.f32 %v3279, %v3295
    %v3297 = vsub.f32 1.0, %v3296
    %v3298 = vmul.f32 %v3295, %v3297
    %v3299 = vadd.f32 %v3295, %v3298
    %vm3300 = vweird.f32 %v3279
    %vm3301 = vweird.f32 %v3295
    %vm3302 = vmor %vm3300, %vm3301
    %v3303 = vsel %vm3302, %v3295, %v3299
    %v3304 = vand.u32 2147483647, %v3279
    %vm3305 = vcmp.eq.f32.partialorder %v3304, 8.507059e+37
    %v3306 = vand.u32 %v3279, 2147483648
    %v3307 = vor.u32 1.1754944e-38, %v3306
    %v3308 = vsel %vm3305, %v3307, %v3303
    %v3309 = vmul.f32 1.0, %v3308
    %v3310 = vtanh.pop %v3270
    %v3311 = vtanh.pop %v3271
    %v3312 = vmul.f32 %v3294, %v3134
    %v3313 = vmul.f32 %v3309, %v3135
    %3316 = vrot.lane.b32.xlu0 %v3310, 32
    %v3317 = vpop.permute.xlu0 %3316
    %3318 = vrot.lane.b32.xlu0 %v3311, 32
    %v3319 = vpop.permute.xlu0 %3318
    %v3322 = vmul.f32 %v3294, %v3317
    %v3323 = vmul.f32 %v3309, %v3319
    %3326 = vrot.lane.b32.xlu0 %v3322, 32
    %v3327 = vpop.permute.xlu0 %3326
    %3328 = vrot.lane.b32.xlu0 %v3323, 32
    %v3329 = vpop.permute.xlu0 %3328
    %v3332 = vadd.f32 %v3312, %v3327
    %v3333 = vadd.f32 %v3313, %v3329
    %v3334 = vtanh.pop %v3332
    %v3335 = vtanh.pop %v3333
    %3338 = vrot.lane.b32.xlu0 %v3334, 32
    %v3339 = vpop.permute.xlu0 %3338
    %3340 = vrot.lane.b32.xlu0 %v3335, 32
    %v3341 = vpop.permute.xlu0 %3340
    %v3344 = vmul.f32 %v3294, %v3339
    %v3345 = vmul.f32 %v3309, %v3341
    %v3346 = vld [vmem:[#allocation3 + $0xc0] sm:$0xff]
    %v3347 = vld [vmem:[#allocation3 + $0xc8] sm:$0xff]
    %v3348 = vpack.c.bf16 %v3246, %v3245
    %3350 = vrot.lane.b32.xlu0 %v3348, 64
    %v3351 = vpop.permute.xlu0 %3350
    %v3353 = vsel %vm327, %v3351, 0
    %3355 = vmatpush.bf16.msra.mxu0 0
    %3356 = vmatpush.bf16.msra.mxu0 0
    %3357 = vmatpush.bf16.msra.mxu0 0
    %3358 = vmatpush.bf16.msra.mxu0 0
    %3359 = vmatpush.bf16.msra.mxu0 0
    %3360 = vmatpush.bf16.msra.mxu0 0
    %3361 = vmatpush.bf16.msra.mxu0 %v2185
    %3362 = vmatpush.bf16.msra.mxu0 %v2184
    %3363 = vmatmul.bf16.gmra.mxu0 %v3353
    %v3364 = vpop.f32.mrf.mxu0
    %v3365 = vadd.f32 0.0, %v3364
    %v3366 = vpop.f32.mrf.mxu0
    %v3367 = vadd.f32 0.0, %v3366
    %3368 = vdwg.mxu0
    %v3369 = vadd.f32 %v3346, %v3365
    %v3370 = vadd.f32 %v3347, %v3367
    %v3371 = vxor.u32 %v3369, 2147483648
    %v3372 = vxor.u32 %v3370, 2147483648
    %v3373 = vmul.f32 %v3371, 1.442695
    %v3374 = vpow.pop %v3373
    %v3375 = vmul.f32 %v3372, 1.442695
    %v3376 = vpow.pop %v3375
    %v3377 = vadd.f32 %v3374, 1.0
    %v3378 = vadd.f32 %v3376, 1.0
    %v3379 = vrcp.pop %v3377
    %v3380 = vmul.f32 %v3377, %v3379
    %v3381 = vsub.f32 1.0, %v3380
    %v3382 = vmul.f32 %v3379, %v3381
    %v3383 = vadd.f32 %v3379, %v3382
    %vm3384 = vweird.f32 %v3377
    %vm3385 = vweird.f32 %v3379
    %vm3386 = vmor %vm3384, %vm3385
    %v3387 = vsel %vm3386, %v3379, %v3383
    %v3388 = vand.u32 2147483647, %v3377
    %vm3389 = vcmp.eq.f32.partialorder %v3388, 8.507059e+37
    %v3390 = vand.u32 %v3377, 2147483648
    %v3391 = vor.u32 1.1754944e-38, %v3390
    %v3392 = vsel %vm3389, %v3391, %v3387
    %v3393 = vmul.f32 1.0, %v3392
    %v3394 = vrcp.pop %v3378
    %v3395 = vmul.f32 %v3378, %v3394
    %v3396 = vsub.f32 1.0, %v3395
    %v3397 = vmul.f32 %v3394, %v3396
    %v3398 = vadd.f32 %v3394, %v3397
    %vm3399 = vweird.f32 %v3378
    %vm3400 = vweird.f32 %v3394
    %vm3401 = vmor %vm3399, %vm3400
    %v3402 = vsel %vm3401, %v3394, %v3398
    %v3403 = vand.u32 2147483647, %v3378
    %vm3404 = vcmp.eq.f32.partialorder %v3403, 8.507059e+37
    %v3405 = vand.u32 %v3378, 2147483648
    %v3406 = vor.u32 1.1754944e-38, %v3405
    %v3407 = vsel %vm3404, %v3406, %v3402
    %v3408 = vmul.f32 1.0, %v3407
    %v3409 = vtanh.pop %v3369
    %v3410 = vtanh.pop %v3370
    %v3411 = vmul.f32 %v3393, %v3233
    %v3412 = vmul.f32 %v3408, %v3234
    %3415 = vrot.lane.b32.xlu0 %v3409, 32
    %v3416 = vpop.permute.xlu0 %3415
    %3417 = vrot.lane.b32.xlu0 %v3410, 32
    %v3418 = vpop.permute.xlu0 %3417
    %v3421 = vmul.f32 %v3393, %v3416
    %v3422 = vmul.f32 %v3408, %v3418
    %3425 = vrot.lane.b32.xlu0 %v3421, 32
    %v3426 = vpop.permute.xlu0 %3425
    %3427 = vrot.lane.b32.xlu0 %v3422, 32
    %v3428 = vpop.permute.xlu0 %3427
    %v3431 = vadd.f32 %v3411, %v3426
    %v3432 = vadd.f32 %v3412, %v3428
    %v3433 = vtanh.pop %v3431
    %v3434 = vtanh.pop %v3432
    %3437 = vrot.lane.b32.xlu0 %v3433, 32
    %v3438 = vpop.permute.xlu0 %3437
    %3439 = vrot.lane.b32.xlu0 %v3434, 32
    %v3440 = vpop.permute.xlu0 %3439
    %v3443 = vmul.f32 %v3393, %v3438
    %v3444 = vmul.f32 %v3408, %v3440
    %v3445 = vld [vmem:[#allocation3 + $0xd0] sm:$0xff]
    %v3446 = vld [vmem:[#allocation3 + $0xd8] sm:$0xff]
    %v3447 = vpack.c.bf16 %v3345, %v3344
    %3449 = vrot.lane.b32.xlu0 %v3447, 64
    %v3450 = vpop.permute.xlu0 %3449
    %v3452 = vsel %vm327, %v3450, 0
    %3454 = vmatpush.bf16.msra.mxu0 0
    %3455 = vmatpush.bf16.msra.mxu0 0
    %3456 = vmatpush.bf16.msra.mxu0 0
    %3457 = vmatpush.bf16.msra.mxu0 0
    %3458 = vmatpush.bf16.msra.mxu0 0
    %3459 = vmatpush.bf16.msra.mxu0 0
    %3460 = vmatpush.bf16.msra.mxu0 %v2185
    %3461 = vmatpush.bf16.msra.mxu0 %v2184
    %3462 = vmatmul.bf16.gmra.mxu0 %v3452
    %v3463 = vpop.f32.mrf.mxu0
    %v3464 = vadd.f32 0.0, %v3463
    %v3465 = vpop.f32.mrf.mxu0
    %v3466 = vadd.f32 0.0, %v3465
    %3467 = vdwg.mxu0
    %v3468 = vadd.f32 %v3445, %v3464
    %v3469 = vadd.f32 %v3446, %v3466
    %v3470 = vxor.u32 %v3468, 2147483648
    %v3471 = vxor.u32 %v3469, 2147483648
    %v3472 = vmul.f32 %v3470, 1.442695
    %v3473 = vpow.pop %v3472
    %v3474 = vmul.f32 %v3471, 1.442695
    %v3475 = vpow.pop %v3474
    %v3476 = vadd.f32 %v3473, 1.0
    %v3477 = vadd.f32 %v3475, 1.0
    %v3478 = vrcp.pop %v3476
    %v3479 = vmul.f32 %v3476, %v3478
    %v3480 = vsub.f32 1.0, %v3479
    %v3481 = vmul.f32 %v3478, %v3480
    %v3482 = vadd.f32 %v3478, %v3481
    %vm3483 = vweird.f32 %v3476
    %vm3484 = vweird.f32 %v3478
    %vm3485 = vmor %vm3483, %vm3484
    %v3486 = vsel %vm3485, %v3478, %v3482
    %v3487 = vand.u32 2147483647, %v3476
    %vm3488 = vcmp.eq.f32.partialorder %v3487, 8.507059e+37
    %v3489 = vand.u32 %v3476, 2147483648
    %v3490 = vor.u32 1.1754944e-38, %v3489
    %v3491 = vsel %vm3488, %v3490, %v3486
    %v3492 = vmul.f32 1.0, %v3491
    %v3493 = vrcp.pop %v3477
    %v3494 = vmul.f32 %v3477, %v3493
    %v3495 = vsub.f32 1.0, %v3494
    %v3496 = vmul.f32 %v3493, %v3495
    %v3497 = vadd.f32 %v3493, %v3496
    %vm3498 = vweird.f32 %v3477
    %vm3499 = vweird.f32 %v3493
    %vm3500 = vmor %vm3498, %vm3499
    %v3501 = vsel %vm3500, %v3493, %v3497
    %v3502 = vand.u32 2147483647, %v3477
    %vm3503 = vcmp.eq.f32.partialorder %v3502, 8.507059e+37
    %v3504 = vand.u32 %v3477, 2147483648
    %v3505 = vor.u32 1.1754944e-38, %v3504
    %v3506 = vsel %vm3503, %v3505, %v3501
    %v3507 = vmul.f32 1.0, %v3506
    %v3508 = vtanh.pop %v3468
    %v3509 = vtanh.pop %v3469
    %v3510 = vmul.f32 %v3492, %v3332
    %v3511 = vmul.f32 %v3507, %v3333
    %3514 = vrot.lane.b32.xlu0 %v3508, 32
    %v3515 = vpop.permute.xlu0 %3514
    %3516 = vrot.lane.b32.xlu0 %v3509, 32
    %v3517 = vpop.permute.xlu0 %3516
    %v3520 = vmul.f32 %v3492, %v3515
    %v3521 = vmul.f32 %v3507, %v3517
    %3524 = vrot.lane.b32.xlu0 %v3520, 32
    %v3525 = vpop.permute.xlu0 %3524
    %3526 = vrot.lane.b32.xlu0 %v3521, 32
    %v3527 = vpop.permute.xlu0 %3526
    %v3530 = vadd.f32 %v3510, %v3525
    %v3531 = vadd.f32 %v3511, %v3527
    %v3532 = vtanh.pop %v3530
    %v3533 = vtanh.pop %v3531
    %3536 = vrot.lane.b32.xlu0 %v3532, 32
    %v3537 = vpop.permute.xlu0 %3536
    %3538 = vrot.lane.b32.xlu0 %v3533, 32
    %v3539 = vpop.permute.xlu0 %3538
    %v3542 = vmul.f32 %v3492, %v3537
    %v3543 = vmul.f32 %v3507, %v3539
    %v3544 = vld [vmem:[#allocation3 + $0xe0] sm:$0xff]
    %v3545 = vld [vmem:[#allocation3 + $0xe8] sm:$0xff]
    %v3546 = vpack.c.bf16 %v3444, %v3443
    %3548 = vrot.lane.b32.xlu0 %v3546, 64
    %v3549 = vpop.permute.xlu0 %3548
    %v3551 = vsel %vm327, %v3549, 0
    %3553 = vmatpush.bf16.msra.mxu0 0
    %3554 = vmatpush.bf16.msra.mxu0 0
    %3555 = vmatpush.bf16.msra.mxu0 0
    %3556 = vmatpush.bf16.msra.mxu0 0
    %3557 = vmatpush.bf16.msra.mxu0 0
    %3558 = vmatpush.bf16.msra.mxu0 0
    %3559 = vmatpush.bf16.msra.mxu0 %v2185
    %3560 = vmatpush.bf16.msra.mxu0 %v2184
    %3561 = vmatmul.bf16.gmra.mxu0 %v3551
    %v3562 = vpop.f32.mrf.mxu0
    %v3563 = vadd.f32 0.0, %v3562
    %v3564 = vpop.f32.mrf.mxu0
    %v3565 = vadd.f32 0.0, %v3564
    %3566 = vdwg.mxu0
    %v3567 = vadd.f32 %v3544, %v3563
    %v3568 = vadd.f32 %v3545, %v3565
    %v3569 = vxor.u32 %v3567, 2147483648
    %v3570 = vxor.u32 %v3568, 2147483648
    %v3571 = vmul.f32 %v3569, 1.442695
    %v3572 = vpow.pop %v3571
    %v3573 = vmul.f32 %v3570, 1.442695
    %v3574 = vpow.pop %v3573
    %v3575 = vadd.f32 %v3572, 1.0
    %v3576 = vadd.f32 %v3574, 1.0
    %v3577 = vrcp.pop %v3575
    %v3578 = vmul.f32 %v3575, %v3577
    %v3579 = vsub.f32 1.0, %v3578
    %v3580 = vmul.f32 %v3577, %v3579
    %v3581 = vadd.f32 %v3577, %v3580
    %vm3582 = vweird.f32 %v3575
    %vm3583 = vweird.f32 %v3577
    %vm3584 = vmor %vm3582, %vm3583
    %v3585 = vsel %vm3584, %v3577, %v3581
    %v3586 = vand.u32 2147483647, %v3575
    %vm3587 = vcmp.eq.f32.partialorder %v3586, 8.507059e+37
    %v3588 = vand.u32 %v3575, 2147483648
    %v3589 = vor.u32 1.1754944e-38, %v3588
    %v3590 = vsel %vm3587, %v3589, %v3585
    %v3591 = vmul.f32 1.0, %v3590
    %v3592 = vrcp.pop %v3576
    %v3593 = vmul.f32 %v3576, %v3592
    %v3594 = vsub.f32 1.0, %v3593
    %v3595 = vmul.f32 %v3592, %v3594
    %v3596 = vadd.f32 %v3592, %v3595
    %vm3597 = vweird.f32 %v3576
    %vm3598 = vweird.f32 %v3592
    %vm3599 = vmor %vm3597, %vm3598
    %v3600 = vsel %vm3599, %v3592, %v3596
    %v3601 = vand.u32 2147483647, %v3576
    %vm3602 = vcmp.eq.f32.partialorder %v3601, 8.507059e+37
    %v3603 = vand.u32 %v3576, 2147483648
    %v3604 = vor.u32 1.1754944e-38, %v3603
    %v3605 = vsel %vm3602, %v3604, %v3600
    %v3606 = vmul.f32 1.0, %v3605
    %v3607 = vtanh.pop %v3567
    %v3608 = vtanh.pop %v3568
    %v3609 = vmul.f32 %v3591, %v3431
    %v3610 = vmul.f32 %v3606, %v3432
    %3613 = vrot.lane.b32.xlu0 %v3607, 32
    %v3614 = vpop.permute.xlu0 %3613
    %3615 = vrot.lane.b32.xlu0 %v3608, 32
    %v3616 = vpop.permute.xlu0 %3615
    %v3619 = vmul.f32 %v3591, %v3614
    %v3620 = vmul.f32 %v3606, %v3616
    %3623 = vrot.lane.b32.xlu0 %v3619, 32
    %v3624 = vpop.permute.xlu0 %3623
    %3625 = vrot.lane.b32.xlu0 %v3620, 32
    %v3626 = vpop.permute.xlu0 %3625
    %v3629 = vadd.f32 %v3609, %v3624
    %v3630 = vadd.f32 %v3610, %v3626
    %v3631 = vtanh.pop %v3629
    %v3632 = vtanh.pop %v3630
    %3635 = vrot.lane.b32.xlu0 %v3631, 32
    %v3636 = vpop.permute.xlu0 %3635
    %3637 = vrot.lane.b32.xlu0 %v3632, 32
    %v3638 = vpop.permute.xlu0 %3637
    %v3641 = vmul.f32 %v3591, %v3636
    %v3642 = vmul.f32 %v3606, %v3638
    %v3643 = vld [vmem:[#allocation3 + $0xf0] sm:$0xff]
    %v3644 = vld [vmem:[#allocation3 + $0xf8] sm:$0xff]
    %v3645 = vpack.c.bf16 %v3543, %v3542
    %3647 = vrot.lane.b32.xlu0 %v3645, 64
    %v3648 = vpop.permute.xlu0 %3647
    %v3650 = vsel %vm327, %v3648, 0
    %3652 = vmatpush.bf16.msra.mxu0 0
    %3653 = vmatpush.bf16.msra.mxu0 0
    %3654 = vmatpush.bf16.msra.mxu0 0
    %3655 = vmatpush.bf16.msra.mxu0 0
    %3656 = vmatpush.bf16.msra.mxu0 0
    %3657 = vmatpush.bf16.msra.mxu0 0
    %3658 = vmatpush.bf16.msra.mxu0 %v2185
    %3659 = vmatpush.bf16.msra.mxu0 %v2184
    %3660 = vmatmul.bf16.gmra.mxu0 %v3650
    %v3661 = vpop.f32.mrf.mxu0
    %v3662 = vadd.f32 0.0, %v3661
    %v3663 = vpop.f32.mrf.mxu0
    %v3664 = vadd.f32 0.0, %v3663
    %3665 = vdwg.mxu0
    %v3666 = vadd.f32 %v3643, %v3662
    %v3667 = vadd.f32 %v3644, %v3664
    %v3668 = vxor.u32 %v3666, 2147483648
    %v3669 = vxor.u32 %v3667, 2147483648
    %v3670 = vmul.f32 %v3668, 1.442695
    %v3671 = vpow.pop %v3670
    %v3672 = vmul.f32 %v3669, 1.442695
    %v3673 = vpow.pop %v3672
    %v3674 = vadd.f32 %v3671, 1.0
    %v3675 = vadd.f32 %v3673, 1.0
    %v3676 = vrcp.pop %v3674
    %v3677 = vmul.f32 %v3674, %v3676
    %v3678 = vsub.f32 1.0, %v3677
    %v3679 = vmul.f32 %v3676, %v3678
    %v3680 = vadd.f32 %v3676, %v3679
    %vm3681 = vweird.f32 %v3674
    %vm3682 = vweird.f32 %v3676
    %vm3683 = vmor %vm3681, %vm3682
    %v3684 = vsel %vm3683, %v3676, %v3680
    %v3685 = vand.u32 2147483647, %v3674
    %vm3686 = vcmp.eq.f32.partialorder %v3685, 8.507059e+37
    %v3687 = vand.u32 %v3674, 2147483648
    %v3688 = vor.u32 1.1754944e-38, %v3687
    %v3689 = vsel %vm3686, %v3688, %v3684
    %v3690 = vmul.f32 1.0, %v3689
    %v3691 = vrcp.pop %v3675
    %v3692 = vmul.f32 %v3675, %v3691
    %v3693 = vsub.f32 1.0, %v3692
    %v3694 = vmul.f32 %v3691, %v3693
    %v3695 = vadd.f32 %v3691, %v3694
    %vm3696 = vweird.f32 %v3675
    %vm3697 = vweird.f32 %v3691
    %vm3698 = vmor %vm3696, %vm3697
    %v3699 = vsel %vm3698, %v3691, %v3695
    %v3700 = vand.u32 2147483647, %v3675
    %vm3701 = vcmp.eq.f32.partialorder %v3700, 8.507059e+37
    %v3702 = vand.u32 %v3675, 2147483648
    %v3703 = vor.u32 1.1754944e-38, %v3702
    %v3704 = vsel %vm3701, %v3703, %v3699
    %v3705 = vmul.f32 1.0, %v3704
    %v3706 = vtanh.pop %v3666
    %v3707 = vtanh.pop %v3667
    %v3708 = vmul.f32 %v3690, %v3530
    %v3709 = vmul.f32 %v3705, %v3531
    %3712 = vrot.lane.b32.xlu0 %v3706, 32
    %v3713 = vpop.permute.xlu0 %3712
    %3714 = vrot.lane.b32.xlu0 %v3707, 32
    %v3715 = vpop.permute.xlu0 %3714
    %v3718 = vmul.f32 %v3690, %v3713
    %v3719 = vmul.f32 %v3705, %v3715
    %3722 = vrot.lane.b32.xlu0 %v3718, 32
    %v3723 = vpop.permute.xlu0 %3722
    %3724 = vrot.lane.b32.xlu0 %v3719, 32
    %v3725 = vpop.permute.xlu0 %3724
    %v3728 = vadd.f32 %v3708, %v3723
    %v3729 = vadd.f32 %v3709, %v3725
    %v3730 = vtanh.pop %v3728
    %v3731 = vtanh.pop %v3729
    %3734 = vrot.lane.b32.xlu0 %v3730, 32
    %v3735 = vpop.permute.xlu0 %3734
    %3736 = vrot.lane.b32.xlu0 %v3731, 32
    %v3737 = vpop.permute.xlu0 %3736
    %v3740 = vmul.f32 %v3690, %v3735
    %v3741 = vmul.f32 %v3705, %v3737
    %s3742 = sld [smem:[#allocation4]]
    %v3743 = vstv %s3742
    %v3744 = vmul.f32 %v2030, %v3743
    %v3745 = vmul.f32 %v2031, %v3743
    %v3746 = vmul.f32 %v2145, %v3743
    %v3747 = vmul.f32 %v2146, %v3743
    %s3748 = sld [smem:[#allocation7]]
    %v3749 = vstv %s3748
    %v3750 = vmul.f32 %v2018, %v3749
    %v3751 = vmul.f32 %v2019, %v3749
    %v3752 = vmul.f32 %v2133, %v3749
    %v3753 = vmul.f32 %v2134, %v3749
    %s3754 = sld [smem:[#allocation4 + $0x1]]
    %v3755 = vstv %s3754
    %v3756 = vmul.f32 %v3641, %v3755
    %v3757 = vmul.f32 %v3642, %v3755
    %v3758 = vmul.f32 %v3740, %v3755
    %v3759 = vmul.f32 %v3741, %v3755
    %v3760 = vadd.f32 %v3744, %v3756
    %v3761 = vadd.f32 %v3745, %v3757
    %v3762 = vadd.f32 %v3746, %v3758
    %v3763 = vadd.f32 %v3747, %v3759
    %s3764 = sld [smem:[#allocation7 + $0x1]]
    %v3765 = vstv %s3764
    %v3766 = vmul.f32 %v3629, %v3765
    %v3767 = vmul.f32 %v3630, %v3765
    %v3768 = vmul.f32 %v3728, %v3765
    %v3769 = vmul.f32 %v3729, %v3765
    %v3770 = vadd.f32 %v3750, %v3766
    %v3771 = vadd.f32 %v3751, %v3767
    %v3772 = vadd.f32 %v3752, %v3768
    %v3773 = vadd.f32 %v3753, %v3769
    %s3774 = sld [smem:[#allocation4 + $0x2]]
    %v3775 = vstv %s3774
    %v3776 = vadd.f32 %v3760, %v3775
    %v3777 = vadd.f32 %v3761, %v3775
    %v3778 = vadd.f32 %v3762, %v3775
    %v3779 = vadd.f32 %v3763, %v3775
    %v3780 = vmax.f32 %v3776, 0.0
    %v3781 = vmax.f32 %v3777, 0.0
    %v3782 = vmax.f32 %v3778, 0.0
    %v3783 = vmax.f32 %v3779, 0.0
    %s3784 = sld [smem:[#allocation7 + $0x2]]
    %v3785 = vstv %s3784
    %v3786 = vadd.f32 %v3770, %v3785
    %v3787 = vadd.f32 %v3771, %v3785
    %v3788 = vadd.f32 %v3772, %v3785
    %v3789 = vadd.f32 %v3773, %v3785
    %v3790 = vmax.f32 %v3786, 0.0
    %v3791 = vmax.f32 %v3787, 0.0
    %v3792 = vmax.f32 %v3788, 0.0
    %v3793 = vmax.f32 %v3789, 0.0
    %3798 = vrot.lane.b32.xlu0 %v3780, 64
    %v3799 = vpop.permute.xlu0 %3798
    %3800 = vrot.lane.b32.xlu0 %v3781, 64
    %v3801 = vpop.permute.xlu0 %3800
    %3802 = vrot.lane.b32.xlu0 %v3782, 64
    %v3803 = vpop.permute.xlu0 %3802
    %3804 = vrot.lane.b32.xlu0 %v3783, 64
    %v3805 = vpop.permute.xlu0 %3804
    %v3810 = vsel %vm327, %v3799, %v3790
    %v3811 = vsel %vm327, %v3801, %v3791
    %v3812 = vsel %vm327, %v3803, %v3792
    %v3813 = vsel %vm327, %v3805, %v3793
    %v3814 = vpack.c.bf16 %v3811, %v3810
    %v3815 = vpack.c.bf16 %v3813, %v3812
    %v3816 = vld [vmem:[%s9] sm:$0xf]
    %v3817 = vld [vmem:[%s9 + $0x4] sm:$0xf]
    %v3818 = vld [vmem:[%s9 + $0x8] sm:$0xf]
    %v3819 = vld [vmem:[%s9 + $0xc] sm:$0xf]
    %v3820 = vld [vmem:[%s9 + $0x10] sm:$0xf]
    %v3821 = vld [vmem:[%s9 + $0x14] sm:$0xf]
    %v3822 = vld [vmem:[%s9 + $0x18] sm:$0xf]
    %v3823 = vld [vmem:[%s9 + $0x1c] sm:$0xf]
    %v3824 = vld [vmem:[%s10] sm:$0x1]
    %v3826 = vperm.slane %v3824, 0
    %v3836 = vunpack.c.l.b16 %v3816
    %v3837 = vunpack.c.l.b16 %v3817
    %v3838 = vunpack.c.l.b16 %v3818
    %v3839 = vunpack.c.l.b16 %v3819
    %v3840 = vunpack.c.l.b16 %v3820
    %v3841 = vunpack.c.l.b16 %v3821
    %v3842 = vunpack.c.l.b16 %v3822
    %v3843 = vunpack.c.l.b16 %v3823
    %v3844 = vpack.c.b16 %v3837, %v3836
    %v3845 = vpack.c.b16 %v3839, %v3838
    %v3846 = vpack.c.b16 %v3841, %v3840
    %v3847 = vpack.c.b16 %v3843, %v3842
    %vm3852 = vcmask 523264
    %v3854 = vsel %vm3852, %v3814, 0
    %v3857 = vsel %vm3852, %v3815, 0
    %3859 = vmatpush.bf16.msra.mxu0 0
    %3860 = vmatpush.bf16.msra.mxu0 0
    %3861 = vmatpush.bf16.msra.mxu0 0
    %3862 = vmatpush.bf16.msra.mxu0 0
    %3863 = vmatpush.bf16.msra.mxu0 %v3847
    %3864 = vmatpush.bf16.msra.mxu0 %v3846
    %3865 = vmatpush.bf16.msra.mxu0 %v3845
    %3866 = vmatpush.bf16.msra.mxu0 %v3844
    %3867 = vmatmul.bf16.gmra.mxu0 %v3854
    %v3868 = vpop.f32.mrf.mxu0
    %v3869 = vadd.f32 %v3826, %v3868
    %v3870 = vpop.f32.mrf.mxu0
    %v3871 = vadd.f32 %v3826, %v3870
    %3872 = vmatmul.bf16.gmra.mxu0 %v3857
    %v3873 = vpop.f32.mrf.mxu0
    %v3874 = vadd.f32 %v3826, %v3873
    %v3875 = vpop.f32.mrf.mxu0
    %v3876 = vadd.f32 %v3826, %v3875
    %3877 = vdwg.mxu0
    %v3878 = vmax.f32 %v3869, 0.0
    %v3879 = vmax.f32 %v3871, 0.0
    %v3880 = vmax.f32 %v3874, 0.0
    %v3881 = vmax.f32 %v3876, 0.0
    %3886 = vrot.lane.b32.xlu0 %v3641, 64
    %v3887 = vpop.permute.xlu0 %3886
    %3888 = vrot.lane.b32.xlu0 %v3642, 64
    %v3889 = vpop.permute.xlu0 %3888
    %3890 = vrot.lane.b32.xlu0 %v3740, 64
    %v3891 = vpop.permute.xlu0 %3890
    %3892 = vrot.lane.b32.xlu0 %v3741, 64
    %v3893 = vpop.permute.xlu0 %3892
    %3902 = vrot.lane.b32.xlu0 %v3878, 32
    %v3903 = vpop.permute.xlu0 %3902
    %3904 = vrot.lane.b32.xlu0 %v3879, 32
    %v3905 = vpop.permute.xlu0 %3904
    %3906 = vrot.lane.b32.xlu0 %v3880, 32
    %v3907 = vpop.permute.xlu0 %3906
    %3908 = vrot.lane.b32.xlu0 %v3881, 32
    %v3909 = vpop.permute.xlu0 %3908
    %v3914 = vsel %vm327, %v3887, %v3903
    %v3915 = vsel %vm327, %v3889, %v3905
    %v3916 = vsel %vm327, %v3891, %v3907
    %v3917 = vsel %vm327, %v3893, %v3909
    %v3918 = vpack.c.bf16 %v3915, %v3914
    %v3919 = vpack.c.bf16 %v3917, %v3916
    %v3920 = vld [vmem:[%s11] sm:$0xf]
    %v3921 = vld [vmem:[%s11 + $0x4] sm:$0xf]
    %v3922 = vld [vmem:[%s11 + $0x8] sm:$0xf]
    %v3923 = vld [vmem:[%s11 + $0xc] sm:$0xf]
    %v3924 = vld [vmem:[%s11 + $0x10] sm:$0xf]
    %v3925 = vld [vmem:[%s11 + $0x14] sm:$0xf]
    %v3926 = vld [vmem:[%s11 + $0x18] sm:$0xf]
    %v3927 = vld [vmem:[%s11 + $0x1c] sm:$0xf]
    %v3928 = vld [vmem:[%s12] sm:$0x1]
    %v3930 = vperm.slane %v3928, 0
    %v3940 = vunpack.c.l.b16 %v3920
    %v3941 = vunpack.c.l.b16 %v3921
    %v3942 = vunpack.c.l.b16 %v3922
    %v3943 = vunpack.c.l.b16 %v3923
    %v3944 = vunpack.c.l.b16 %v3924
    %v3945 = vunpack.c.l.b16 %v3925
    %v3946 = vunpack.c.l.b16 %v3926
    %v3947 = vunpack.c.l.b16 %v3927
    %v3948 = vpack.c.b16 %v3941, %v3940
    %v3949 = vpack.c.b16 %v3943, %v3942
    %v3950 = vpack.c.b16 %v3945, %v3944
    %v3951 = vpack.c.b16 %v3947, %v3946
    %v3957 = vsel %vm3852, %v3918, 0
    %v3960 = vsel %vm3852, %v3919, 0
    %3962 = vmatpush.bf16.msra.mxu0 0
    %3963 = vmatpush.bf16.msra.mxu0 0
    %3964 = vmatpush.bf16.msra.mxu0 0
    %3965 = vmatpush.bf16.msra.mxu0 0
    %3966 = vmatpush.bf16.msra.mxu0 %v3951
    %3967 = vmatpush.bf16.msra.mxu0 %v3950
    %3968 = vmatpush.bf16.msra.mxu0 %v3949
    %3969 = vmatpush.bf16.msra.mxu0 %v3948
    %3970 = vmatmul.bf16.gmra.mxu0 %v3957
    %v3971 = vpop.f32.mrf.mxu0
    %v3972 = vadd.f32 %v3930, %v3971
    %v3973 = vpop.f32.mrf.mxu0
    %v3974 = vadd.f32 %v3930, %v3973
    %3975 = vmatmul.bf16.gmra.mxu0 %v3960
    %v3976 = vpop.f32.mrf.mxu0
    %v3977 = vadd.f32 %v3930, %v3976
    %v3978 = vpop.f32.mrf.mxu0
    %v3979 = vadd.f32 %v3930, %v3978
    %3980 = vdwg.mxu0
    %v3981 = vmax.f32 %v3972, 0.0
    %v3982 = vmax.f32 %v3974, 0.0
    %v3983 = vmax.f32 %v3977, 0.0
    %v3984 = vmax.f32 %v3979, 0.0
    %v3985 = vpack.c.bf16 %v3982, %v3981
    %v3986 = vpack.c.bf16 %v3984, %v3983
    %v3987 = vld [vmem:[%s13] sm:$0xf]
    %v3988 = vld [vmem:[%s13 + $0x4] sm:$0xf]
    %v3989 = vld [vmem:[%s13 + $0x8] sm:$0xf]
    %v3990 = vld [vmem:[%s13 + $0xc] sm:$0xf]
    %v3991 = vld [vmem:[%s13 + $0x10] sm:$0xf]
    %v3992 = vld [vmem:[%s13 + $0x14] sm:$0xf]
    %v3993 = vld [vmem:[%s13 + $0x18] sm:$0xf]
    %v3994 = vld [vmem:[%s13 + $0x1c] sm:$0xf]
    %v3995 = vld [vmem:[%s14] sm:$0x1]
    %v3997 = vperm.slane %v3995, 0
    %v4007 = vunpack.c.l.b16 %v3987
    %v4008 = vunpack.c.l.b16 %v3988
    %v4009 = vunpack.c.l.b16 %v3989
    %v4010 = vunpack.c.l.b16 %v3990
    %v4011 = vunpack.c.l.b16 %v3991
    %v4012 = vunpack.c.l.b16 %v3992
    %v4013 = vunpack.c.l.b16 %v3993
    %v4014 = vunpack.c.l.b16 %v3994
    %v4015 = vpack.c.b16 %v4008, %v4007
    %v4016 = vpack.c.b16 %v4010, %v4009
    %v4017 = vpack.c.b16 %v4012, %v4011
    %v4018 = vpack.c.b16 %v4014, %v4013
    %v4024 = vsel %vm3852, %v3985, 0
    %v4027 = vsel %vm3852, %v3986, 0
    %4029 = vmatpush.bf16.msra.mxu0 0
    %4030 = vmatpush.bf16.msra.mxu0 0
    %4031 = vmatpush.bf16.msra.mxu0 0
    %4032 = vmatpush.bf16.msra.mxu0 0
    %4033 = vmatpush.bf16.msra.mxu0 %v4018
    %4034 = vmatpush.bf16.msra.mxu0 %v4017
    %4035 = vmatpush.bf16.msra.mxu0 %v4016
    %4036 = vmatpush.bf16.msra.mxu0 %v4015
    %4037 = vmatmul.bf16.gmra.mxu0 %v4024
    %v4038 = vpop.f32.mrf.mxu0
    %v4039 = vadd.f32 %v3997, %v4038
    %v4040 = vpop.f32.mrf.mxu0
    %v4041 = vadd.f32 %v3997, %v4040
    %4042 = vmatmul.bf16.gmra.mxu0 %v4027
    %v4043 = vpop.f32.mrf.mxu0
    %v4044 = vadd.f32 %v3997, %v4043
    %v4045 = vpop.f32.mrf.mxu0
    %v4046 = vadd.f32 %v3997, %v4045
    %4047 = vdwg.mxu0
    %v4048 = vmax.f32 %v4039, 0.0
    %v4049 = vmax.f32 %v4041, 0.0
    %v4050 = vmax.f32 %v4044, 0.0
    %v4051 = vmax.f32 %v4046, 0.0
    %4052 = vst.msk [vmem:[#allocation9] sm:$0xff] %vm327, %v4048
    %4053 = vst.msk [vmem:[#allocation9 + $0x8] sm:$0xff] %vm327, %v4049
    %4054 = vst.msk [vmem:[#allocation9 + $0x10] sm:$0xff] %vm327, %v4050
    %4055 = vst.msk [vmem:[#allocation9 + $0x18] sm:$0xff] %vm327, %v4051
    // Predicated region
    $region70: #{tpu_custom_call.1} parent=1 // pred_check
      _
    $region71: #{tpu_custom_call.1} parent=1 // pred_check_branch
      %4057 = sbr.rel (0) target = $region73
    $region72: #{tpu_custom_call.1} parent=1 // pred_region
      %4059 = vsyncadd [#allocation5], 0
      %s4060 = sshll.u32 [#allocation9], 4
      %s4061 = int_to_ptr.vmem [resolvable:$true] %s4060
      %s4062 = sshll.u32 %s15, 4
      %s4063 = int_to_ptr.hbm [resolvable:$true] %s4062
      %4068 = dma.vmem_to_hbm [thread:$0]  %s4061, 512, %s4063, [#allocation5], 128, 128, 8
    $region73: #{tpu_custom_call.1} parent=1 // pred_fallthru
      _
    // Predicated region
    $region74: #{tpu_custom_call.1} parent=1 // pred_check
      _
    $region75: #{tpu_custom_call.1} parent=1 // pred_check_branch
      %4070 = sbr.rel (0) target = $region77
    $region76: #{tpu_custom_call.1} parent=1 // pred_region
      %4072 = dma.done [#allocation5], 512
    $region77: #{tpu_custom_call.1} parent=1 // pred_fallthru
      _
    %4073 = vsyncpa [#allocation5], 1
    %4074 = vsyncpa [#allocation6], 1
    %4075 = vsyncpa [#allocation8], 1

</llo_original>
